<compile_context>
chip_gen: v6e
topology: v6e:2x2x1
jax: 0.10.0
libtpu: 0.0.40
codegen_flags: <defaults>
</compile_context>

<pallas_src>
import functools

import jax
import jax.numpy as jnp
from jax.experimental import pallas as pl
from jax.experimental.pallas import tpu as pltpu


def _round_up(v, m):
    return ((v + m - 1) // m) * m


def _silu(v, approx):
    # SiLU(x) = x * sigmoid(x). exp and the reciprocal both run on the EUP
    # slot, leaving the VPU with just the add/mul.  approx=False keeps the
    # exact vrcp (recommended if denoising-trajectory drift matters).
    return v * pl.reciprocal(1.0 + jnp.exp(-v), approx=approx)


def _mlp_kernel(x_ref, t_ref,
                w1x_ref, w1t_ref, b1_ref,
                w2_ref, b2_ref,
                w3_ref, b3_ref,
                w4_ref, b4_ref,
                w5_ref, b5_ref,
                o_ref, *, approx_sigmoid):
    # Layer 1: concat([x, t], 1) @ W1 + b1 == x @ W1[:D] + t * W1[D] + b1
    h = jnp.dot(x_ref[...].astype(jnp.bfloat16), w1x_ref[...],
                preferred_element_type=jnp.float32)
    h = h + t_ref[...] * w1t_ref[...] + b1_ref[...]
    h = _silu(h, approx_sigmoid)
    h = jnp.dot(h.astype(jnp.bfloat16), w2_ref[...],
                preferred_element_type=jnp.float32) + b2_ref[...]
    h = _silu(h, approx_sigmoid)
    h = jnp.dot(h.astype(jnp.bfloat16), w3_ref[...],
                preferred_element_type=jnp.float32) + b3_ref[...]
    h = _silu(h, approx_sigmoid)
    h = jnp.dot(h.astype(jnp.bfloat16), w4_ref[...],
                preferred_element_type=jnp.float32) + b4_ref[...]
    h = _silu(h, approx_sigmoid)
    h = jnp.dot(h.astype(jnp.bfloat16), w5_ref[...],
                preferred_element_type=jnp.float32) + b5_ref[...]
    o_ref[...] = h.astype(o_ref.dtype)


def prepare_params(params, input_dim):
    """Call ONCE (outside the sampling loop): split W1 into its x / time parts
    and cast all matmul operands to bf16 so per-step forwards never re-cast."""
    (w1, b1), (w2, b2), (w3, b3), (w4, b4), (w5, b5) = params
    return (
        w1[:input_dim].astype(jnp.bfloat16),               # W1[:D]   (D, h)  bf16
        w1[input_dim:input_dim + 1].astype(jnp.float32),    # W1[D]    (1, h)  f32 rank-1 time row
        b1.astype(jnp.float32),
        w2.astype(jnp.bfloat16), b2.astype(jnp.float32),
        w3.astype(jnp.bfloat16), b3.astype(jnp.float32),
        w4.astype(jnp.bfloat16), b4.astype(jnp.float32),
        w5.astype(jnp.bfloat16), b5.astype(jnp.float32),
    )


def _default_tile_and_vmem():
    """Per-chip defaults: bigger tiles on 128 MiB-VMEM parts, conservative on v7x."""
    vmem_bytes = 64 * 1024 * 1024
    try:
        vmem_bytes = pltpu.get_tpu_info().vmem_capacity_bytes
    except Exception:
        pass
    if vmem_bytes >= 128 * 1024 * 1024:          # v5e / v6e
        return 512, 96 * 1024 * 1024
    return 256, 48 * 1024 * 1024                  # v7x (64 MiB per TC)


@functools.partial(
    jax.jit,
    static_argnames=("batch_tile", "vmem_limit_bytes", "approx_sigmoid"))
def _forward_impl(x, t, prepared, *, batch_tile, vmem_limit_bytes, approx_sigmoid):
    w1x, w1t, b1, w2, b2, w3, b3, w4, b4, w5, b5 = prepared
    B, input_dim = x.shape
    h_dim = w1x.shape[1]
    h2 = w4.shape[1]
    out_dim = w5.shape[1]

    t2 = t.reshape(-1, 1).astype(jnp.float32)

    # Batch tile: >=2 grid steps (so both v7x TensorCores get work under
    # dimension_semantics=("parallel",)), 8-aligned, capped by batch_tile.
    if B <= 8:
        tb = B
    else:
        tb = min(batch_tile, max(8, _round_up(pl.cdiv(B, 2), 8)))
    grid = (pl.cdiv(B, tb),)

    full = lambda i: (0, 0)

    def resident(shape):
        # Weight / bias blocks never change across grid steps: single-buffer
        # them to halve their VMEM footprint.
        return pl.BlockSpec(shape, full, pipeline_mode=pl.Buffered(1))

    weight_specs = [
        resident((input_dim, h_dim)),   # W1[:D]
        resident((1, h_dim)),           # W1[D] (time row)
        resident((1, h_dim)),           # b1
        resident((h_dim, h_dim)), resident((1, h_dim)),   # W2, b2
        resident((h_dim, h_dim)), resident((1, h_dim)),   # W3, b3
        resident((h_dim, h2)),    resident((1, h2)),      # W4, b4
        resident((h2, out_dim)),  resident((1, out_dim)), # W5, b5
    ]

    # Advisory cost hint for the XLA scheduler around this custom call.
    flops = 2 * B * (input_dim * h_dim + 2 * h_dim * h_dim
                     + h_dim * h2 + h2 * out_dim)
    transcendentals = 2 * B * (3 * h_dim + h2)          # exp + recip per SiLU elem
    bytes_accessed = (
        x.size * 4 + t2.size * 4 + B * out_dim * 4
        + 2 * (w1x.size + w2.size + w3.size + w4.size + w5.size)
        + 4 * (w1t.size + b1.size + b2.size + b3.size + b4.size + b5.size))

    kernel = functools.partial(_mlp_kernel, approx_sigmoid=approx_sigmoid)
    out = pl.pallas_call(
        kernel,
        out_shape=jax.ShapeDtypeStruct((B, out_dim), jnp.float32),
        grid_spec=pltpu.PrefetchScalarGridSpec(
            num_scalar_prefetch=0,
            grid=grid,
            in_specs=[
                pl.BlockSpec((tb, input_dim), lambda i: (i, 0)),   # x tile (f32)
                pl.BlockSpec((tb, 1), lambda i: (i, 0)),           # t tile (f32)
            ] + weight_specs,
            out_specs=pl.BlockSpec((tb, out_dim), lambda i: (i, 0)),
        ),
        compiler_params=pltpu.CompilerParams(
            dimension_semantics=("parallel",),
            vmem_limit_bytes=vmem_limit_bytes),
        cost_estimate=pl.CostEstimate(
            flops=flops,
            transcendentals=transcendentals,
            bytes_accessed=bytes_accessed),
    )(x, t2, w1x, w1t, b1, w2, b2, w3, b3, w4, b4, w5, b5)
    return out


def diffusion_model_forward(x, t, prepared_params, *, batch_tile=None,
                            vmem_limit_bytes=None, approx_sigmoid=True):
    """x: (B, input_dim) f32, t: (B,) f32, prepared_params from prepare_params().
    Returns (B, input_dim) f32."""
    d_tile, d_vmem = _default_tile_and_vmem()
    if batch_tile is None:
        batch_tile = d_tile
    if vmem_limit_bytes is None:
        vmem_limit_bytes = d_vmem
    return _forward_impl(x, t, prepared_params,
                         batch_tile=batch_tile,
                         vmem_limit_bytes=vmem_limit_bytes,
                         approx_sigmoid=approx_sigmoid)


def init_params(key, input_dim, hidden_dim):
    """Deterministic init matching nn.Linear layer shapes (Kaiming-uniform-like)."""
    dims = [
        (input_dim + 1, hidden_dim),
        (hidden_dim, hidden_dim),
        (hidden_dim, hidden_dim),
        (hidden_dim, hidden_dim // 2),
        (hidden_dim // 2, input_dim),
    ]
    params = []
    for (fan_in, fan_out) in dims:
        key, kw, kb = jax.random.split(key, 3)
        bound = 1.0 / jnp.sqrt(jnp.float32(fan_in))
        w = jax.random.uniform(kw, (fan_in, fan_out), jnp.float32, -bound, bound)
        b = jax.random.uniform(kb, (1, fan_out), jnp.float32, -bound, bound)
        params.append((w, b))
    return params


def _reference_forward_f32(x, t, params):
    """Original module semantics, full f32."""
    h = jnp.concatenate([x, t.reshape(-1, 1)], axis=1)
    for i, (w, b) in enumerate(params):
        h = h @ w + b
        if i < len(params) - 1:
            h = h * jax.nn.sigmoid(h)
    return h


def _reference_forward_mixed(x, t, params):
    """Mirrors the kernel's precision: bf16 matmul operands, f32 accumulation."""
    (w1, b1), (w2, b2), (w3, b3), (w4, b4), (w5, b5) = params
    din = x.shape[1]
    h = jnp.dot(x.astype(jnp.bfloat16), w1[:din].astype(jnp.bfloat16),
                preferred_element_type=jnp.float32)
    h = h + t.reshape(-1, 1) * w1[din:din + 1] + b1
    h = h * jax.nn.sigmoid(h)
    for (w, b) in ((w2, b2), (w3, b3), (w4, b4)):
        h = jnp.dot(h.astype(jnp.bfloat16), w.astype(jnp.bfloat16),
                    preferred_element_type=jnp.float32) + b
        h = h * jax.nn.sigmoid(h)
    h = jnp.dot(h.astype(jnp.bfloat16), w5.astype(jnp.bfloat16),
                preferred_element_type=jnp.float32) + b5
    return h


if __name__ == "__main__":
    input_dim = 128
    hidden_dim = 256   # small-shape stand-in for the module's default 1024
    batch = 512        # >=2 grid steps (exercises tiling / 2-TC split)

    key = jax.random.PRNGKey(0)
    k_p, k_x, k_t = jax.random.split(key, 3)
    params = init_params(k_p, input_dim, hidden_dim)
    x = jax.random.normal(k_x, (batch, input_dim), jnp.float32)
    t = jax.random.uniform(k_t, (batch,), jnp.float32)

    # One-time weight preparation (would sit outside the sampling loop).
    prepared = prepare_params(params, input_dim)
    prepared = jax.block_until_ready(prepared)

    out = diffusion_model_forward(x, t, prepared)
    out = jax.block_until_ready(out)
    assert out.shape == (batch, input_dim)

    # Strict check against a reference with matching (bf16-operand) precision.
    ref_mixed = _reference_forward_mixed(x, t, params)
    assert jnp.allclose(out, ref_mixed, rtol=2e-2, atol=2e-2), \
        float(jnp.max(jnp.abs(out - ref_mixed)))

    # Loose sanity check against the original full-f32 module semantics.
    ref_f32 = _reference_forward_f32(x, t, params)
    assert jnp.allclose(out, ref_f32, rtol=1e-1, atol=1e-1), \
        float(jnp.max(jnp.abs(out - ref_f32)))

    print("KERNEL_OK")
</pallas_src>

<mosaic_0001>
module attributes {stable_mosaic.version = 11 : i64} {
  func.func @_mlp_kernel(%arg0: i32, %arg1: memref<256x128xf32, #tpu.memory_space<vmem>>, %arg2: memref<256x1xf32, #tpu.memory_space<vmem>>, %arg3: memref<128x256xbf16, #tpu.memory_space<vmem>>, %arg4: memref<1x256xf32, #tpu.memory_space<vmem>>, %arg5: memref<1x256xf32, #tpu.memory_space<vmem>>, %arg6: memref<256x256xbf16, #tpu.memory_space<vmem>>, %arg7: memref<1x256xf32, #tpu.memory_space<vmem>>, %arg8: memref<256x256xbf16, #tpu.memory_space<vmem>>, %arg9: memref<1x256xf32, #tpu.memory_space<vmem>>, %arg10: memref<256x128xbf16, #tpu.memory_space<vmem>>, %arg11: memref<1x128xf32, #tpu.memory_space<vmem>>, %arg12: memref<128x128xbf16, #tpu.memory_space<vmem>>, %arg13: memref<1x128xf32, #tpu.memory_space<vmem>>, %arg14: memref<256x128xf32, #tpu.memory_space<vmem>>) attributes {dimension_semantics = [#tpu.dimension_semantics<parallel>], iteration_bounds = array<i64: 2>, scalar_prefetch = 0 : i64, scratch_operands = 0 : i64, tpu.core_type = #tpu.core_type<tc>, window_params = [{transform_indices = @transform_0, window_bounds = array<i64: 256, 128>}, {transform_indices = @transform_1, window_bounds = array<i64: 256, 1>}, {pipeline_mode = #tpu.pipeline_mode<synchronous>, transform_indices = @transform_2, window_bounds = array<i64: 128, 256>}, {pipeline_mode = #tpu.pipeline_mode<synchronous>, transform_indices = @transform_3, window_bounds = array<i64: 1, 256>}, {pipeline_mode = #tpu.pipeline_mode<synchronous>, transform_indices = @transform_4, window_bounds = array<i64: 1, 256>}, {pipeline_mode = #tpu.pipeline_mode<synchronous>, transform_indices = @transform_5, window_bounds = array<i64: 256, 256>}, {pipeline_mode = #tpu.pipeline_mode<synchronous>, transform_indices = @transform_6, window_bounds = array<i64: 1, 256>}, {pipeline_mode = #tpu.pipeline_mode<synchronous>, transform_indices = @transform_7, window_bounds = array<i64: 256, 256>}, {pipeline_mode = #tpu.pipeline_mode<synchronous>, transform_indices = @transform_8, window_bounds = array<i64: 1, 256>}, {pipeline_mode = #tpu.pipeline_mode<synchronous>, transform_indices = @transform_9, window_bounds = array<i64: 256, 128>}, {pipeline_mode = #tpu.pipeline_mode<synchronous>, transform_indices = @transform_10, window_bounds = array<i64: 1, 128>}, {pipeline_mode = #tpu.pipeline_mode<synchronous>, transform_indices = @transform_11, window_bounds = array<i64: 128, 128>}, {pipeline_mode = #tpu.pipeline_mode<synchronous>, transform_indices = @transform_12, window_bounds = array<i64: 1, 128>}, {transform_indices = @transform_13, window_bounds = array<i64: 256, 128>}]} {
    %c0 = arith.constant 0 : index
    %c0_0 = arith.constant 0 : index
    %0 = vector.load %arg1[%c0, %c0_0] : memref<256x128xf32, #tpu.memory_space<vmem>>, vector<256x128xf32>
    %1 = arith.truncf %0 : vector<256x128xf32> to vector<256x128xbf16>
    %c0_1 = arith.constant 0 : index
    %c0_2 = arith.constant 0 : index
    %2 = vector.load %arg3[%c0_1, %c0_2] : memref<128x256xbf16, #tpu.memory_space<vmem>>, vector<128x256xbf16>
    %cst = arith.constant dense<0.000000e+00> : vector<256x256xf32>
    %3 = tpu.matmul %1, %2, %cst {dimension_numbers = #tpu.dot_dimension_numbers<[1], [0], [0], [1], [0, 0, 1, 1], [], []>} : vector<256x128xbf16>, vector<128x256xbf16>, vector<256x256xf32> -> vector<256x256xf32>
    %c0_3 = arith.constant 0 : index
    %c0_4 = arith.constant 0 : index
    %4 = vector.load %arg2[%c0_3, %c0_4] : memref<256x1xf32, #tpu.memory_space<vmem>>, vector<256x1xf32>
    %c0_5 = arith.constant 0 : index
    %c0_6 = arith.constant 0 : index
    %5 = vector.load %arg4[%c0_5, %c0_6] : memref<1x256xf32, #tpu.memory_space<vmem>>, vector<1x256xf32>
    %6 = vector.broadcast %4 : vector<256x1xf32> to vector<256x256xf32>
    %7 = vector.broadcast %5 : vector<1x256xf32> to vector<256x256xf32>
    %8 = arith.mulf %6, %7 : vector<256x256xf32>
    %9 = arith.addf %3, %8 : vector<256x256xf32>
    %c0_7 = arith.constant 0 : index
    %c0_8 = arith.constant 0 : index
    %10 = vector.load %arg5[%c0_7, %c0_8] : memref<1x256xf32, #tpu.memory_space<vmem>>, vector<1x256xf32>
    %11 = vector.broadcast %10 : vector<1x256xf32> to vector<256x256xf32>
    %12 = arith.addf %9, %11 : vector<256x256xf32>
    %cst_9 = arith.constant 0.000000e+00 : f32
    %13 = vector.broadcast %cst_9 : f32 to vector<256x256xf32>
    %14 = arith.subf %13, %12 : vector<256x256xf32>
    %15 = math.exp %14 : vector<256x256xf32>
    %cst_10 = arith.constant 1.000000e+00 : f32
    %16 = vector.broadcast %cst_10 : f32 to vector<256x256xf32>
    %17 = arith.addf %16, %15 : vector<256x256xf32>
    %18 = tpu.reciprocal %17 {approx = true} : vector<256x256xf32> -> vector<256x256xf32>
    %19 = arith.mulf %12, %18 : vector<256x256xf32>
    %20 = arith.truncf %19 : vector<256x256xf32> to vector<256x256xbf16>
    %c0_11 = arith.constant 0 : index
    %c0_12 = arith.constant 0 : index
    %21 = vector.load %arg6[%c0_11, %c0_12] : memref<256x256xbf16, #tpu.memory_space<vmem>>, vector<256x256xbf16>
    %cst_13 = arith.constant dense<0.000000e+00> : vector<256x256xf32>
    %22 = tpu.matmul %20, %21, %cst_13 {dimension_numbers = #tpu.dot_dimension_numbers<[1], [0], [0], [1], [0, 0, 1, 1], [], []>} : vector<256x256xbf16>, vector<256x256xbf16>, vector<256x256xf32> -> vector<256x256xf32>
    %c0_14 = arith.constant 0 : index
    %c0_15 = arith.constant 0 : index
    %23 = vector.load %arg7[%c0_14, %c0_15] : memref<1x256xf32, #tpu.memory_space<vmem>>, vector<1x256xf32>
    %24 = vector.broadcast %23 : vector<1x256xf32> to vector<256x256xf32>
    %25 = arith.addf %22, %24 : vector<256x256xf32>
    %cst_16 = arith.constant 0.000000e+00 : f32
    %26 = vector.broadcast %cst_16 : f32 to vector<256x256xf32>
    %27 = arith.subf %26, %25 : vector<256x256xf32>
    %28 = math.exp %27 : vector<256x256xf32>
    %cst_17 = arith.constant 1.000000e+00 : f32
    %29 = vector.broadcast %cst_17 : f32 to vector<256x256xf32>
    %30 = arith.addf %29, %28 : vector<256x256xf32>
    %31 = tpu.reciprocal %30 {approx = true} : vector<256x256xf32> -> vector<256x256xf32>
    %32 = arith.mulf %25, %31 : vector<256x256xf32>
    %33 = arith.truncf %32 : vector<256x256xf32> to vector<256x256xbf16>
    %c0_18 = arith.constant 0 : index
    %c0_19 = arith.constant 0 : index
    %34 = vector.load %arg8[%c0_18, %c0_19] : memref<256x256xbf16, #tpu.memory_space<vmem>>, vector<256x256xbf16>
    %cst_20 = arith.constant dense<0.000000e+00> : vector<256x256xf32>
    %35 = tpu.matmul %33, %34, %cst_20 {dimension_numbers = #tpu.dot_dimension_numbers<[1], [0], [0], [1], [0, 0, 1, 1], [], []>} : vector<256x256xbf16>, vector<256x256xbf16>, vector<256x256xf32> -> vector<256x256xf32>
    %c0_21 = arith.constant 0 : index
    %c0_22 = arith.constant 0 : index
    %36 = vector.load %arg9[%c0_21, %c0_22] : memref<1x256xf32, #tpu.memory_space<vmem>>, vector<1x256xf32>
    %37 = vector.broadcast %36 : vector<1x256xf32> to vector<256x256xf32>
    %38 = arith.addf %35, %37 : vector<256x256xf32>
    %cst_23 = arith.constant 0.000000e+00 : f32
    %39 = vector.broadcast %cst_23 : f32 to vector<256x256xf32>
    %40 = arith.subf %39, %38 : vector<256x256xf32>
    %41 = math.exp %40 : vector<256x256xf32>
    %cst_24 = arith.constant 1.000000e+00 : f32
    %42 = vector.broadcast %cst_24 : f32 to vector<256x256xf32>
    %43 = arith.addf %42, %41 : vector<256x256xf32>
    %44 = tpu.reciprocal %43 {approx = true} : vector<256x256xf32> -> vector<256x256xf32>
    %45 = arith.mulf %38, %44 : vector<256x256xf32>
    %46 = arith.truncf %45 : vector<256x256xf32> to vector<256x256xbf16>
    %c0_25 = arith.constant 0 : index
    %c0_26 = arith.constant 0 : index
    %47 = vector.load %arg10[%c0_25, %c0_26] : memref<256x128xbf16, #tpu.memory_space<vmem>>, vector<256x128xbf16>
    %cst_27 = arith.constant dense<0.000000e+00> : vector<256x128xf32>
    %48 = tpu.matmul %46, %47, %cst_27 {dimension_numbers = #tpu.dot_dimension_numbers<[1], [0], [0], [1], [0, 0, 1, 1], [], []>} : vector<256x256xbf16>, vector<256x128xbf16>, vector<256x128xf32> -> vector<256x128xf32>
    %c0_28 = arith.constant 0 : index
    %c0_29 = arith.constant 0 : index
    %49 = vector.load %arg11[%c0_28, %c0_29] : memref<1x128xf32, #tpu.memory_space<vmem>>, vector<1x128xf32>
    %50 = vector.broadcast %49 : vector<1x128xf32> to vector<256x128xf32>
    %51 = arith.addf %48, %50 : vector<256x128xf32>
    %cst_30 = arith.constant 0.000000e+00 : f32
    %52 = vector.broadcast %cst_30 : f32 to vector<256x128xf32>
    %53 = arith.subf %52, %51 : vector<256x128xf32>
    %54 = math.exp %53 : vector<256x128xf32>
    %cst_31 = arith.constant 1.000000e+00 : f32
    %55 = vector.broadcast %cst_31 : f32 to vector<256x128xf32>
    %56 = arith.addf %55, %54 : vector<256x128xf32>
    %57 = tpu.reciprocal %56 {approx = true} : vector<256x128xf32> -> vector<256x128xf32>
    %58 = arith.mulf %51, %57 : vector<256x128xf32>
    %59 = arith.truncf %58 : vector<256x128xf32> to vector<256x128xbf16>
    %c0_32 = arith.constant 0 : index
    %c0_33 = arith.constant 0 : index
    %60 = vector.load %arg12[%c0_32, %c0_33] : memref<128x128xbf16, #tpu.memory_space<vmem>>, vector<128x128xbf16>
    %cst_34 = arith.constant dense<0.000000e+00> : vector<256x128xf32>
    %61 = tpu.matmul %59, %60, %cst_34 {dimension_numbers = #tpu.dot_dimension_numbers<[1], [0], [0], [1], [0, 0, 1, 1], [], []>} : vector<256x128xbf16>, vector<128x128xbf16>, vector<256x128xf32> -> vector<256x128xf32>
    %c0_35 = arith.constant 0 : index
    %c0_36 = arith.constant 0 : index
    %62 = vector.load %arg13[%c0_35, %c0_36] : memref<1x128xf32, #tpu.memory_space<vmem>>, vector<1x128xf32>
    %63 = vector.broadcast %62 : vector<1x128xf32> to vector<256x128xf32>
    %64 = arith.addf %61, %63 : vector<256x128xf32>
    %c0_37 = arith.constant 0 : index
    %c0_38 = arith.constant 0 : index
    %65 = vector.load %arg14[%c0_37, %c0_38] : memref<256x128xf32, #tpu.memory_space<vmem>>, vector<256x128xf32>
    tpu.vector_store %arg14[%c0_37, %c0_38], %64 {strides = array<i32>} : memref<256x128xf32, #tpu.memory_space<vmem>>, vector<256x128xf32>,
    return
  }
  func.func @transform_0(%arg0: i32) -> (i32, i32) {
    %c0_i32 = arith.constant 0 : i32
    %c0_i32_0 = arith.constant 0 : i32
    return %arg0, %c0_i32 : i32, i32
  }
  func.func @transform_1(%arg0: i32) -> (i32, i32) {
    %c0_i32 = arith.constant 0 : i32
    %c0_i32_0 = arith.constant 0 : i32
    return %arg0, %c0_i32 : i32, i32
  }
  func.func @transform_2(%arg0: i32) -> (i32, i32) {
    %c0_i32 = arith.constant 0 : i32
    %c0_i32_0 = arith.constant 0 : i32
    %c0_i32_1 = arith.constant 0 : i32
    return %c0_i32, %c0_i32_0 : i32, i32
  }
  func.func @transform_3(%arg0: i32) -> (i32, i32) {
    %c0_i32 = arith.constant 0 : i32
    %c0_i32_0 = arith.constant 0 : i32
    %c0_i32_1 = arith.constant 0 : i32
    return %c0_i32, %c0_i32_0 : i32, i32
  }
  func.func @transform_4(%arg0: i32) -> (i32, i32) {
    %c0_i32 = arith.constant 0 : i32
    %c0_i32_0 = arith.constant 0 : i32
    %c0_i32_1 = arith.constant 0 : i32
    return %c0_i32, %c0_i32_0 : i32, i32
  }
  func.func @transform_5(%arg0: i32) -> (i32, i32) {
    %c0_i32 = arith.constant 0 : i32
    %c0_i32_0 = arith.constant 0 : i32
    %c0_i32_1 = arith.constant 0 : i32
    return %c0_i32, %c0_i32_0 : i32, i32
  }
  func.func @transform_6(%arg0: i32) -> (i32, i32) {
    %c0_i32 = arith.constant 0 : i32
    %c0_i32_0 = arith.constant 0 : i32
    %c0_i32_1 = arith.constant 0 : i32
    return %c0_i32, %c0_i32_0 : i32, i32
  }
  func.func @transform_7(%arg0: i32) -> (i32, i32) {
    %c0_i32 = arith.constant 0 : i32
    %c0_i32_0 = arith.constant 0 : i32
    %c0_i32_1 = arith.constant 0 : i32
    return %c0_i32, %c0_i32_0 : i32, i32
  }
  func.func @transform_8(%arg0: i32) -> (i32, i32) {
    %c0_i32 = arith.constant 0 : i32
    %c0_i32_0 = arith.constant 0 : i32
    %c0_i32_1 = arith.constant 0 : i32
    return %c0_i32, %c0_i32_0 : i32, i32
  }
  func.func @transform_9(%arg0: i32) -> (i32, i32) {
    %c0_i32 = arith.constant 0 : i32
    %c0_i32_0 = arith.constant 0 : i32
    %c0_i32_1 = arith.constant 0 : i32
    return %c0_i32, %c0_i32_0 : i32, i32
  }
  func.func @transform_10(%arg0: i32) -> (i32, i32) {
    %c0_i32 = arith.constant 0 : i32
    %c0_i32_0 = arith.constant 0 : i32
    %c0_i32_1 = arith.constant 0 : i32
    return %c0_i32, %c0_i32_0 : i32, i32
  }
  func.func @transform_11(%arg0: i32) -> (i32, i32) {
    %c0_i32 = arith.constant 0 : i32
    %c0_i32_0 = arith.constant 0 : i32
    %c0_i32_1 = arith.constant 0 : i32
    return %c0_i32, %c0_i32_0 : i32, i32
  }
  func.func @transform_12(%arg0: i32) -> (i32, i32) {
    %c0_i32 = arith.constant 0 : i32
    %c0_i32_0 = arith.constant 0 : i32
    %c0_i32_1 = arith.constant 0 : i32
    return %c0_i32, %c0_i32_0 : i32, i32
  }
  func.func @transform_13(%arg0: i32) -> (i32, i32) {
    %c0_i32 = arith.constant 0 : i32
    %c0_i32_0 = arith.constant 0 : i32
    return %arg0, %c0_i32 : i32, i32
  }
}

</mosaic_0001>

<llo_original>
// kernel: _forward_impl.1
$region0: #{_forward_impl.1}
  #allocation0 [shape = 'u32[]', space=smem, size = 0x4, offset = 0x4, fixed_abs, tag = 'smem constant byte address 0x4 - core index']
  #allocation1 [shape = 'u32[144,128]{1,0:T(1,128)}', space=vmem, size = 0x12000, scoped, tag = 'internal scratch']
  %s0 = inlined_call_operand.vmem [shape: f32[512,128], index: 0, kind: input, shape index: {}]
  %s1 = inlined_call_operand.vmem [shape: f32[512,1], index: 1, kind: input, shape index: {}]
  %s2 = inlined_call_operand.hbm [shape: bf16[128,256], index: 2, kind: input, shape index: {}]
  %s3 = inlined_call_operand.vmem [shape: f32[1,256], index: 3, kind: input, shape index: {}]
  %s4 = inlined_call_operand.vmem [shape: f32[1,256], index: 4, kind: input, shape index: {}]
  %s5 = inlined_call_operand.hbm [shape: bf16[256,256], index: 5, kind: input, shape index: {}]
  %s6 = inlined_call_operand.vmem [shape: f32[1,256], index: 6, kind: input, shape index: {}]
  %s7 = inlined_call_operand.hbm [shape: bf16[256,256], index: 7, kind: input, shape index: {}]
  %s8 = inlined_call_operand.vmem [shape: f32[1,256], index: 8, kind: input, shape index: {}]
  %s9 = inlined_call_operand.hbm [shape: bf16[256,128], index: 9, kind: input, shape index: {}]
  %s10 = inlined_call_operand.vmem [shape: f32[1,128], index: 10, kind: input, shape index: {}]
  %s11 = inlined_call_operand.hbm [shape: bf16[128,128], index: 11, kind: input, shape index: {}]
  %s12 = inlined_call_operand.vmem [shape: f32[1,128], index: 12, kind: input, shape index: {}]
  %s13 = inlined_call_operand.hbm [shape: f32[512,128], index: 13, kind: output, shape index: {}]
  %s14 = sld [smem:[#allocation0]]
  $region105: #{_forward_impl.1} parent=0
    _
  %s16 = ssub.s32 1, %s14
  %s17 = scalar_select 0, %s16, %s14
  $region1: #{_forward_impl.1} parent=0
    #allocation2 [shape = 'u8[65536]{0}', space=vmem, size = 0x10000, scoped, tag = 'input window, operand 2, single buffered']
    #allocation3 [shape = 's32[2]{0}', space=sflag, size = 0x8, scoped, tag = 'scoped memory for _forward_impl.1']
    #allocation4 [shape = 's32[2]{0}', space=sflag, size = 0x8, scoped, tag = 'scoped memory for _forward_impl.1']
    #allocation5 [shape = 'u8[131072]{0}', space=vmem, size = 0x20000, scoped, tag = 'input window, operand 5, single buffered']
    #allocation6 [shape = 's32[1]{0}', space=sflag, size = 0x4, scoped, tag = 'scoped memory for _forward_impl.1']
    #allocation7 [shape = 'u8[131072]{0}', space=vmem, size = 0x20000, scoped, tag = 'input window, operand 7, single buffered']
    #allocation8 [shape = 'u8[65536]{0}', space=vmem, size = 0x10000, scoped, tag = 'input window, operand 9, single buffered']
    #allocation9 [shape = 's32[1]{0}', space=sflag, size = 0x4, scoped, tag = 'scoped memory for _forward_impl.1']
    #allocation10 [shape = 'u8[32768]{0}', space=vmem, size = 0x8000, scoped, tag = 'input window, operand 11, single buffered']
    #allocation11 [shape = 'u8[262144]{0}', space=vmem, size = 0x40000, scoped, tag = 'output window, operand 0']
    %18 = vsyncpa [#allocation3], 0
    %19 = vsyncpa [#allocation6], 0
    %20 = vsyncpa [#allocation9], 0
    %21 = vsyncpa [#allocation4], 0
    %s22 = scalar_lea.sflag [#allocation4], 1
    %23 = vsyncpa %s22, 0
    loop: start=0, step=1, limit=4
    $region2: #{_forward_impl.1} parent=1 // loop_pre_header
      _
    $region3: #{_forward_impl.1} parent=1 // loop_header
      %s25 = sphi 0, %s29
      %p26 = scmp.ge.s32.totalorder %s25, 4
      %s35 = sphi 0, %s37
      %s38 = sphi 0, %s35
      %s39 = sphi 0, %s38
      %s55 = sphi 0, %s39
      %s61 = sphi 0, %s63
      %s64 = sphi 0, %s61
      %s65 = sphi 0, %s64
      %s81 = sphi 0, %s65
      %s85 = sphi 0, %s85
      %s87 = sphi 0, %s85
      %s88 = sphi 0, %s87
      %s102 = sphi 0, %s88
      %s106 = sphi 0, %s106
      %s108 = sphi 0, %s106
      %s109 = sphi 0, %s108
      %s123 = sphi 0, %s109
      %s127 = sphi 0, %s127
      %s129 = sphi 0, %s127
      %s130 = sphi 0, %s129
      %s144 = sphi 0, %s130
      %s148 = sphi 0, %s148
      %s150 = sphi 0, %s148
      %s151 = sphi 0, %s150
      %s165 = sphi 0, %s151
      %s169 = sphi 0, %s169
      %s171 = sphi 0, %s169
      %s172 = sphi 0, %s171
      %s186 = sphi 0, %s172
      %s190 = sphi 0, %s190
      %s192 = sphi 0, %s190
      %s193 = sphi 0, %s192
      %s207 = sphi 0, %s193
      %s211 = sphi 0, %s211
      %s213 = sphi 0, %s211
      %s214 = sphi 0, %s213
      %s228 = sphi 0, %s214
      %s232 = sphi 0, %s232
      %s234 = sphi 0, %s232
      %s235 = sphi 0, %s234
      %s249 = sphi 0, %s235
      %s253 = sphi 0, %s253
      %s255 = sphi 0, %s253
      %s256 = sphi 0, %s255
      %s270 = sphi 0, %s256
      %s274 = sphi 0, %s274
      %s276 = sphi 0, %s274
      %s277 = sphi 0, %s276
      %s291 = sphi 0, %s277
      %s295 = sphi 0, %s295
      %s297 = sphi 0, %s295
      %s298 = sphi 0, %s297
      %s312 = sphi 0, %s298
      %s318 = sphi 0, %s320
      %s321 = sphi 0, %s318
      %s322 = sphi 0, %s321
      %s338 = sphi 0, %s322
    $region4: #{_forward_impl.1} parent=1 // loop_header_branch
      %28 = sbr.rel (%p26) target = $region8
    $region5: #{_forward_impl.1} parent=1 // loop_body
      %s30 = ssub.s32 %s25, 1
      %s31 = ssub.s32 %s25, 2
      %s32 = sadd.s32 %s25, 1
      %s33 = ssub.s32 %s25, %s32
      %p34 = scmp.eq.s32.totalorder %s33, 0
      %s36 = sadd.s32 %s35, 1
      %s37 = scalar_select %p34, %s35, %s36
      %p40 = pneg %p34
      %p41 = scmp.eq.s32.totalorder %s25, 1
      %p42 = por %p40, %p41
      %p43 = scmp.ne.s32.totalorder %s35, %s38
      %p44 = scmp.eq.s32.totalorder %s25, 0
      %p45 = por %p43, %p44
      %p46 = scmp.ne.s32.totalorder %s35, %s38
      %p47 = scmp.eq.s32.totalorder %s30, 1
      %p48 = por %p46, %p47
      %p49 = scmp.ne.s32.totalorder %s38, %s39
      %p50 = scmp.eq.s32.totalorder %s30, 0
      %p51 = por %p49, %p50
      %p52 = scmp.ne.s32.totalorder %s38, %s39
      %p53 = scmp.eq.s32.totalorder %s31, 1
      %p54 = por %p52, %p53
      %p56 = scmp.ne.s32.totalorder %s39, %s55
      %p57 = scmp.eq.s32.totalorder %s31, 0
      %p58 = por %p56, %p57
      %s59 = ssub.s32 %s25, %s32
      %p60 = scmp.eq.s32.totalorder %s59, 0
      %s62 = sadd.s32 %s61, 1
      %s63 = scalar_select %p60, %s61, %s62
      %p66 = pneg %p60
      %p67 = scmp.eq.s32.totalorder %s25, 1
      %p68 = por %p66, %p67
      %p69 = scmp.ne.s32.totalorder %s61, %s64
      %p70 = scmp.eq.s32.totalorder %s25, 0
      %p71 = por %p69, %p70
      %p72 = scmp.ne.s32.totalorder %s61, %s64
      %p73 = scmp.eq.s32.totalorder %s30, 1
      %p74 = por %p72, %p73
      %p75 = scmp.ne.s32.totalorder %s64, %s65
      %p76 = scmp.eq.s32.totalorder %s30, 0
      %p77 = por %p75, %p76
      %p78 = scmp.ne.s32.totalorder %s64, %s65
      %p79 = scmp.eq.s32.totalorder %s31, 1
      %p80 = por %p78, %p79
      %p82 = scmp.ne.s32.totalorder %s65, %s81
      %p83 = scmp.eq.s32.totalorder %s31, 0
      %p84 = por %p82, %p83
      %s86 = sadd.s32 %s85, 1
      %p89 = scmp.eq.s32.totalorder %s25, 1
      %p90 = scmp.ne.s32.totalorder %s85, %s87
      %p91 = scmp.eq.s32.totalorder %s25, 0
      %p92 = por %p90, %p91
      %p93 = scmp.ne.s32.totalorder %s85, %s87
      %p94 = scmp.eq.s32.totalorder %s30, 1
      %p95 = por %p93, %p94
      %p96 = scmp.ne.s32.totalorder %s87, %s88
      %p97 = scmp.eq.s32.totalorder %s30, 0
      %p98 = por %p96, %p97
      %p99 = scmp.ne.s32.totalorder %s87, %s88
      %p100 = scmp.eq.s32.totalorder %s31, 1
      %p101 = por %p99, %p100
      %p103 = scmp.ne.s32.totalorder %s88, %s102
      %p104 = scmp.eq.s32.totalorder %s31, 0
      %p105 = por %p103, %p104
      %s107 = sadd.s32 %s106, 1
      %p110 = scmp.eq.s32.totalorder %s25, 1
      %p111 = scmp.ne.s32.totalorder %s106, %s108
      %p112 = scmp.eq.s32.totalorder %s25, 0
      %p113 = por %p111, %p112
      %p114 = scmp.ne.s32.totalorder %s106, %s108
      %p115 = scmp.eq.s32.totalorder %s30, 1
      %p116 = por %p114, %p115
      %p117 = scmp.ne.s32.totalorder %s108, %s109
      %p118 = scmp.eq.s32.totalorder %s30, 0
      %p119 = por %p117, %p118
      %p120 = scmp.ne.s32.totalorder %s108, %s109
      %p121 = scmp.eq.s32.totalorder %s31, 1
      %p122 = por %p120, %p121
      %p124 = scmp.ne.s32.totalorder %s109, %s123
      %p125 = scmp.eq.s32.totalorder %s31, 0
      %p126 = por %p124, %p125
      %s128 = sadd.s32 %s127, 1
      %p131 = scmp.eq.s32.totalorder %s25, 1
      %p132 = scmp.ne.s32.totalorder %s127, %s129
      %p133 = scmp.eq.s32.totalorder %s25, 0
      %p134 = por %p132, %p133
      %p135 = scmp.ne.s32.totalorder %s127, %s129
      %p136 = scmp.eq.s32.totalorder %s30, 1
      %p137 = por %p135, %p136
      %p138 = scmp.ne.s32.totalorder %s129, %s130
      %p139 = scmp.eq.s32.totalorder %s30, 0
      %p140 = por %p138, %p139
      %p141 = scmp.ne.s32.totalorder %s129, %s130
      %p142 = scmp.eq.s32.totalorder %s31, 1
      %p143 = por %p141, %p142
      %p145 = scmp.ne.s32.totalorder %s130, %s144
      %p146 = scmp.eq.s32.totalorder %s31, 0
      %p147 = por %p145, %p146
      %s149 = sadd.s32 %s148, 1
      %p152 = scmp.eq.s32.totalorder %s25, 1
      %p153 = scmp.ne.s32.totalorder %s148, %s150
      %p154 = scmp.eq.s32.totalorder %s25, 0
      %p155 = por %p153, %p154
      %p156 = scmp.ne.s32.totalorder %s148, %s150
      %p157 = scmp.eq.s32.totalorder %s30, 1
      %p158 = por %p156, %p157
      %p159 = scmp.ne.s32.totalorder %s150, %s151
      %p160 = scmp.eq.s32.totalorder %s30, 0
      %p161 = por %p159, %p160
      %p162 = scmp.ne.s32.totalorder %s150, %s151
      %p163 = scmp.eq.s32.totalorder %s31, 1
      %p164 = por %p162, %p163
      %p166 = scmp.ne.s32.totalorder %s151, %s165
      %p167 = scmp.eq.s32.totalorder %s31, 0
      %p168 = por %p166, %p167
      %s170 = sadd.s32 %s169, 1
      %p173 = scmp.eq.s32.totalorder %s25, 1
      %p174 = scmp.ne.s32.totalorder %s169, %s171
      %p175 = scmp.eq.s32.totalorder %s25, 0
      %p176 = por %p174, %p175
      %p177 = scmp.ne.s32.totalorder %s169, %s171
      %p178 = scmp.eq.s32.totalorder %s30, 1
      %p179 = por %p177, %p178
      %p180 = scmp.ne.s32.totalorder %s171, %s172
      %p181 = scmp.eq.s32.totalorder %s30, 0
      %p182 = por %p180, %p181
      %p183 = scmp.ne.s32.totalorder %s171, %s172
      %p184 = scmp.eq.s32.totalorder %s31, 1
      %p185 = por %p183, %p184
      %p187 = scmp.ne.s32.totalorder %s172, %s186
      %p188 = scmp.eq.s32.totalorder %s31, 0
      %p189 = por %p187, %p188
      %s191 = sadd.s32 %s190, 1
      %p194 = scmp.eq.s32.totalorder %s25, 1
      %p195 = scmp.ne.s32.totalorder %s190, %s192
      %p196 = scmp.eq.s32.totalorder %s25, 0
      %p197 = por %p195, %p196
      %p198 = scmp.ne.s32.totalorder %s190, %s192
      %p199 = scmp.eq.s32.totalorder %s30, 1
      %p200 = por %p198, %p199
      %p201 = scmp.ne.s32.totalorder %s192, %s193
      %p202 = scmp.eq.s32.totalorder %s30, 0
      %p203 = por %p201, %p202
      %p204 = scmp.ne.s32.totalorder %s192, %s193
      %p205 = scmp.eq.s32.totalorder %s31, 1
      %p206 = por %p204, %p205
      %p208 = scmp.ne.s32.totalorder %s193, %s207
      %p209 = scmp.eq.s32.totalorder %s31, 0
      %p210 = por %p208, %p209
      %s212 = sadd.s32 %s211, 1
      %p215 = scmp.eq.s32.totalorder %s25, 1
      %p216 = scmp.ne.s32.totalorder %s211, %s213
      %p217 = scmp.eq.s32.totalorder %s25, 0
      %p218 = por %p216, %p217
      %p219 = scmp.ne.s32.totalorder %s211, %s213
      %p220 = scmp.eq.s32.totalorder %s30, 1
      %p221 = por %p219, %p220
      %p222 = scmp.ne.s32.totalorder %s213, %s214
      %p223 = scmp.eq.s32.totalorder %s30, 0
      %p224 = por %p222, %p223
      %p225 = scmp.ne.s32.totalorder %s213, %s214
      %p226 = scmp.eq.s32.totalorder %s31, 1
      %p227 = por %p225, %p226
      %p229 = scmp.ne.s32.totalorder %s214, %s228
      %p230 = scmp.eq.s32.totalorder %s31, 0
      %p231 = por %p229, %p230
      %s233 = sadd.s32 %s232, 1
      %p236 = scmp.eq.s32.totalorder %s25, 1
      %p237 = scmp.ne.s32.totalorder %s232, %s234
      %p238 = scmp.eq.s32.totalorder %s25, 0
      %p239 = por %p237, %p238
      %p240 = scmp.ne.s32.totalorder %s232, %s234
      %p241 = scmp.eq.s32.totalorder %s30, 1
      %p242 = por %p240, %p241
      %p243 = scmp.ne.s32.totalorder %s234, %s235
      %p244 = scmp.eq.s32.totalorder %s30, 0
      %p245 = por %p243, %p244
      %p246 = scmp.ne.s32.totalorder %s234, %s235
      %p247 = scmp.eq.s32.totalorder %s31, 1
      %p248 = por %p246, %p247
      %p250 = scmp.ne.s32.totalorder %s235, %s249
      %p251 = scmp.eq.s32.totalorder %s31, 0
      %p252 = por %p250, %p251
      %s254 = sadd.s32 %s253, 1
      %p257 = scmp.eq.s32.totalorder %s25, 1
      %p258 = scmp.ne.s32.totalorder %s253, %s255
      %p259 = scmp.eq.s32.totalorder %s25, 0
      %p260 = por %p258, %p259
      %p261 = scmp.ne.s32.totalorder %s253, %s255
      %p262 = scmp.eq.s32.totalorder %s30, 1
      %p263 = por %p261, %p262
      %p264 = scmp.ne.s32.totalorder %s255, %s256
      %p265 = scmp.eq.s32.totalorder %s30, 0
      %p266 = por %p264, %p265
      %p267 = scmp.ne.s32.totalorder %s255, %s256
      %p268 = scmp.eq.s32.totalorder %s31, 1
      %p269 = por %p267, %p268
      %p271 = scmp.ne.s32.totalorder %s256, %s270
      %p272 = scmp.eq.s32.totalorder %s31, 0
      %p273 = por %p271, %p272
      %s275 = sadd.s32 %s274, 1
      %p278 = scmp.eq.s32.totalorder %s25, 1
      %p279 = scmp.ne.s32.totalorder %s274, %s276
      %p280 = scmp.eq.s32.totalorder %s25, 0
      %p281 = por %p279, %p280
      %p282 = scmp.ne.s32.totalorder %s274, %s276
      %p283 = scmp.eq.s32.totalorder %s30, 1
      %p284 = por %p282, %p283
      %p285 = scmp.ne.s32.totalorder %s276, %s277
      %p286 = scmp.eq.s32.totalorder %s30, 0
      %p287 = por %p285, %p286
      %p288 = scmp.ne.s32.totalorder %s276, %s277
      %p289 = scmp.eq.s32.totalorder %s31, 1
      %p290 = por %p288, %p289
      %p292 = scmp.ne.s32.totalorder %s277, %s291
      %p293 = scmp.eq.s32.totalorder %s31, 0
      %p294 = por %p292, %p293
      %s296 = sadd.s32 %s295, 1
      %p299 = scmp.eq.s32.totalorder %s25, 1
      %p300 = scmp.ne.s32.totalorder %s295, %s297
      %p301 = scmp.eq.s32.totalorder %s25, 0
      %p302 = por %p300, %p301
      %p303 = scmp.ne.s32.totalorder %s295, %s297
      %p304 = scmp.eq.s32.totalorder %s30, 1
      %p305 = por %p303, %p304
      %p306 = scmp.ne.s32.totalorder %s297, %s298
      %p307 = scmp.eq.s32.totalorder %s30, 0
      %p308 = por %p306, %p307
      %p309 = scmp.ne.s32.totalorder %s297, %s298
      %p310 = scmp.eq.s32.totalorder %s31, 1
      %p311 = por %p309, %p310
      %p313 = scmp.ne.s32.totalorder %s298, %s312
      %p314 = scmp.eq.s32.totalorder %s31, 0
      %p315 = por %p313, %p314
      %s316 = ssub.s32 %s25, %s32
      %p317 = scmp.eq.s32.totalorder %s316, 0
      %s319 = sadd.s32 %s318, 1
      %s320 = scalar_select %p317, %s318, %s319
      %p323 = pneg %p317
      %p324 = scmp.eq.s32.totalorder %s25, 1
      %p325 = por %p323, %p324
      %p326 = scmp.ne.s32.totalorder %s318, %s321
      %p327 = scmp.eq.s32.totalorder %s25, 0
      %p328 = por %p326, %p327
      %p329 = scmp.ne.s32.totalorder %s318, %s321
      %p330 = scmp.eq.s32.totalorder %s30, 1
      %p331 = por %p329, %p330
      %p332 = scmp.ne.s32.totalorder %s321, %s322
      %p333 = scmp.eq.s32.totalorder %s30, 0
      %p334 = por %p332, %p333
      %p335 = scmp.ne.s32.totalorder %s321, %s322
      %p336 = scmp.eq.s32.totalorder %s31, 1
      %p337 = por %p335, %p336
      %p339 = scmp.ne.s32.totalorder %s322, %s338
      %p340 = scmp.eq.s32.totalorder %s31, 0
      %p341 = por %p339, %p340
      %p342 = scmp.le.s32.totalorder 1, %s25
      %p343 = scmp.lt.s32.totalorder %s25, 3
      %p344 = pnand %p342, %p343
      %p345 = pneg %p344
      // Predicated region
      $region9: #{_forward_impl.1} parent=5 // pred_check
        _
      $region10: #{_forward_impl.1} parent=5 // pred_check_branch
        %347 = sbr.rel (%p344) target = $region12
      $region11: #{_forward_impl.1} parent=5 // pred_region
        %s348 = ssub.s32 %s25, 1
        // Predicated region
        $region13: #{_forward_impl.1} parent=11 // pred_check
          %p349 = pneg %p98
        $region14: #{_forward_impl.1} parent=11 // pred_check_branch
          %351 = sbr.rel (%p349) target = $region16
        $region15: #{_forward_impl.1} parent=11 // pred_region
          %s353 = ssub.s32 2048, 2048
          %354 = vsyncadd [#allocation3], %s353
          %s355 = sshll.u32 [#allocation2], 4
          %s356 = int_to_ptr.vmem [resolvable:$true] %s355
          %361 = dma.hbm_to_vmem [thread:$0]  %s2, 2048, %s356, [#allocation3], 128, 128, 8
        $region16: #{_forward_impl.1} parent=11 // pred_fallthru
          _
        // Predicated region
        $region17: #{_forward_impl.1} parent=11 // pred_check
          %p362 = pneg %p119
        $region18: #{_forward_impl.1} parent=11 // pred_check_branch
          %364 = sbr.rel (%p362) target = $region20
        $region19: #{_forward_impl.1} parent=11 // pred_region
          _
        $region20: #{_forward_impl.1} parent=11 // pred_fallthru
          _
        // Predicated region
        $region21: #{_forward_impl.1} parent=11 // pred_check
          %p365 = pneg %p140
        $region22: #{_forward_impl.1} parent=11 // pred_check_branch
          %367 = sbr.rel (%p365) target = $region24
        $region23: #{_forward_impl.1} parent=11 // pred_region
          _
        $region24: #{_forward_impl.1} parent=11 // pred_fallthru
          _
        // Predicated region
        $region25: #{_forward_impl.1} parent=11 // pred_check
          %p368 = pneg %p161
        $region26: #{_forward_impl.1} parent=11 // pred_check_branch
          %370 = sbr.rel (%p368) target = $region28
        $region27: #{_forward_impl.1} parent=11 // pred_region
          %s372 = ssub.s32 4096, 4096
          %373 = vsyncadd [#allocation6], %s372
          %s374 = sshll.u32 [#allocation5], 4
          %s375 = int_to_ptr.vmem [resolvable:$true] %s374
          %380 = dma.hbm_to_vmem [thread:$0]  %s5, 4096, %s375, [#allocation6], 128, 128, 8
        $region28: #{_forward_impl.1} parent=11 // pred_fallthru
          _
        // Predicated region
        $region29: #{_forward_impl.1} parent=11 // pred_check
          %p381 = pneg %p182
        $region30: #{_forward_impl.1} parent=11 // pred_check_branch
          %383 = sbr.rel (%p381) target = $region32
        $region31: #{_forward_impl.1} parent=11 // pred_region
          _
        $region32: #{_forward_impl.1} parent=11 // pred_fallthru
          _
        // Predicated region
        $region33: #{_forward_impl.1} parent=11 // pred_check
          %p384 = pneg %p203
        $region34: #{_forward_impl.1} parent=11 // pred_check_branch
          %386 = sbr.rel (%p384) target = $region36
        $region35: #{_forward_impl.1} parent=11 // pred_region
          %s388 = ssub.s32 4096, 4096
          %389 = vsyncadd [#allocation6], %s388
          %s390 = sshll.u32 [#allocation7], 4
          %s391 = int_to_ptr.vmem [resolvable:$true] %s390
          %396 = dma.hbm_to_vmem [thread:$0]  %s7, 4096, %s391, [#allocation6], 128, 128, 8
        $region36: #{_forward_impl.1} parent=11 // pred_fallthru
          _
        // Predicated region
        $region37: #{_forward_impl.1} parent=11 // pred_check
          %p397 = pneg %p224
        $region38: #{_forward_impl.1} parent=11 // pred_check_branch
          %399 = sbr.rel (%p397) target = $region40
        $region39: #{_forward_impl.1} parent=11 // pred_region
          _
        $region40: #{_forward_impl.1} parent=11 // pred_fallthru
          _
        // Predicated region
        $region41: #{_forward_impl.1} parent=11 // pred_check
          %p400 = pneg %p245
        $region42: #{_forward_impl.1} parent=11 // pred_check_branch
          %402 = sbr.rel (%p400) target = $region44
        $region43: #{_forward_impl.1} parent=11 // pred_region
          %s404 = ssub.s32 2048, 2048
          %405 = vsyncadd [#allocation9], %s404
          %s406 = sshll.u32 [#allocation8], 4
          %s407 = int_to_ptr.vmem [resolvable:$true] %s406
          %412 = dma.hbm_to_vmem [thread:$0]  %s9, 2048, %s407, [#allocation9], 64, 64, 4
        $region44: #{_forward_impl.1} parent=11 // pred_fallthru
          _
        // Predicated region
        $region45: #{_forward_impl.1} parent=11 // pred_check
          %p413 = pneg %p266
        $region46: #{_forward_impl.1} parent=11 // pred_check_branch
          %415 = sbr.rel (%p413) target = $region48
        $region47: #{_forward_impl.1} parent=11 // pred_region
          _
        $region48: #{_forward_impl.1} parent=11 // pred_fallthru
          _
        // Predicated region
        $region49: #{_forward_impl.1} parent=11 // pred_check
          %p416 = pneg %p287
        $region50: #{_forward_impl.1} parent=11 // pred_check_branch
          %418 = sbr.rel (%p416) target = $region52
        $region51: #{_forward_impl.1} parent=11 // pred_region
          %s420 = ssub.s32 1024, 1024
          %421 = vsyncadd [#allocation9], %s420
          %s422 = sshll.u32 [#allocation10], 4
          %s423 = int_to_ptr.vmem [resolvable:$true] %s422
          %428 = dma.hbm_to_vmem [thread:$0]  %s11, 1024, %s423, [#allocation9], 64, 64, 4
        $region52: #{_forward_impl.1} parent=11 // pred_fallthru
          _
        // Predicated region
        $region53: #{_forward_impl.1} parent=11 // pred_check
          %p429 = pneg %p308
        $region54: #{_forward_impl.1} parent=11 // pred_check_branch
          %431 = sbr.rel (%p429) target = $region56
        $region55: #{_forward_impl.1} parent=11 // pred_region
          _
        $region56: #{_forward_impl.1} parent=11 // pred_fallthru
          _
      $region12: #{_forward_impl.1} parent=5 // pred_fallthru
        _
      %p432 = scmp.lt.s32.totalorder %s25, 2
      // Predicated region
      $region57: #{_forward_impl.1} parent=5 // pred_check
        %p433 = pneg %p432
      $region58: #{_forward_impl.1} parent=5 // pred_check_branch
        %435 = sbr.rel (%p433) target = $region60
      $region59: #{_forward_impl.1} parent=5 // pred_region
        // Predicated region
        $region61: #{_forward_impl.1} parent=59 // pred_check
          %p436 = pneg %p45
        $region62: #{_forward_impl.1} parent=59 // pred_check_branch
          %438 = sbr.rel (%p436) target = $region64
        $region63: #{_forward_impl.1} parent=59 // pred_region
          %s439 = smul.u32 32, %s25
          %p440 = scmp.lt.s32.totalorder %s439, 63
          %s441 = scalar_select %p440, %s439, 63
          %s442 = smul.addr %s441, 8
          %s443 = scalar_lea.vmem %s0, %s442
          %s444 = smul.u32 32, %s25
        $region64: #{_forward_impl.1} parent=59 // pred_fallthru
          _
        // Predicated region
        $region65: #{_forward_impl.1} parent=59 // pred_check
          %p445 = pneg %p71
        $region66: #{_forward_impl.1} parent=59 // pred_check_branch
          %447 = sbr.rel (%p445) target = $region68
        $region67: #{_forward_impl.1} parent=59 // pred_region
          %s448 = smul.u32 32, %s25
          %p449 = scmp.lt.s32.totalorder %s448, 63
          %s450 = scalar_select %p449, %s448, 63
          %s451 = smul.addr %s450, 8
          %s452 = scalar_lea.vmem %s1, %s451
          %s453 = smul.u32 32, %s25
        $region68: #{_forward_impl.1} parent=59 // pred_fallthru
          _
      $region60: #{_forward_impl.1} parent=5 // pred_fallthru
        _
      %p454 = scmp.le.s32.totalorder 1, %s25
      %p455 = scmp.lt.s32.totalorder %s25, 3
      %p456 = pnand %p454, %p455
      %p457 = pneg %p456
      // Predicated region
      $region69: #{_forward_impl.1} parent=5 // pred_check
        _
      $region70: #{_forward_impl.1} parent=5 // pred_check_branch
        %459 = sbr.rel (%p456) target = $region72
      $region71: #{_forward_impl.1} parent=5 // pred_region
        %s460 = ssub.s32 %s25, 1
        // Predicated region
        $region73: #{_forward_impl.1} parent=71 // pred_check
          %p461 = pneg %p98
        $region74: #{_forward_impl.1} parent=71 // pred_check_branch
          %463 = sbr.rel (%p461) target = $region76
        $region75: #{_forward_impl.1} parent=71 // pred_region
          %464 = dma.done [#allocation3], 2048
        $region76: #{_forward_impl.1} parent=71 // pred_fallthru
          _
        // Predicated region
        $region77: #{_forward_impl.1} parent=71 // pred_check
          %p465 = pneg %p161
        $region78: #{_forward_impl.1} parent=71 // pred_check_branch
          %467 = sbr.rel (%p465) target = $region80
        $region79: #{_forward_impl.1} parent=71 // pred_region
          %468 = dma.done [#allocation6], 4096
        $region80: #{_forward_impl.1} parent=71 // pred_fallthru
          _
        // Predicated region
        $region81: #{_forward_impl.1} parent=71 // pred_check
          %p469 = pneg %p203
        $region82: #{_forward_impl.1} parent=71 // pred_check_branch
          %471 = sbr.rel (%p469) target = $region84
        $region83: #{_forward_impl.1} parent=71 // pred_region
          %472 = dma.done [#allocation6], 4096
        $region84: #{_forward_impl.1} parent=71 // pred_fallthru
          _
        // Predicated region
        $region85: #{_forward_impl.1} parent=71 // pred_check
          %p473 = pneg %p245
        $region86: #{_forward_impl.1} parent=71 // pred_check_branch
          %475 = sbr.rel (%p473) target = $region88
        $region87: #{_forward_impl.1} parent=71 // pred_region
          %476 = dma.done [#allocation9], 2048
        $region88: #{_forward_impl.1} parent=71 // pred_fallthru
          _
        // Predicated region
        $region89: #{_forward_impl.1} parent=71 // pred_check
          %p477 = pneg %p287
        $region90: #{_forward_impl.1} parent=71 // pred_check_branch
          %479 = sbr.rel (%p477) target = $region92
        $region91: #{_forward_impl.1} parent=71 // pred_region
          %480 = dma.done [#allocation9], 1024
        $region92: #{_forward_impl.1} parent=71 // pred_fallthru
          _
        %s481 = smul.u32 32, %s30
        %p482 = scmp.lt.s32.totalorder %s481, 63
        %s483 = scalar_select %p482, %s481, 63
        %s484 = smul.addr %s483, 8
        %s485 = scalar_lea.vmem %s0, %s484
        %p486 = pneg %p51
        %p487 = pneg %p48
        %s488 = smul.u32 32, %s30
        %p489 = scmp.lt.s32.totalorder %s488, 63
        %s490 = scalar_select %p489, %s488, 63
        %s491 = smul.addr %s490, 8
        %s492 = scalar_lea.vmem %s1, %s491
        %p493 = pneg %p77
        %p494 = pneg %p74
        %p495 = pneg %p98
        %p496 = pneg %p95
        %p497 = pneg %p119
        %p498 = pneg %p116
        %p499 = pneg %p140
        %p500 = pneg %p137
        %p501 = pneg %p161
        %p502 = pneg %p158
        %p503 = pneg %p182
        %p504 = pneg %p179
        %p505 = pneg %p203
        %p506 = pneg %p200
        %p507 = pneg %p224
        %p508 = pneg %p221
        %p509 = pneg %p245
        %p510 = pneg %p242
        %p511 = pneg %p266
        %p512 = pneg %p263
        %p513 = pneg %p287
        %p514 = pneg %p284
        %p515 = pneg %p308
        %p516 = pneg %p305
        %p517 = pneg %p334
        %p518 = pneg %p331
        %s519 = sand.u32 %s321, 1
        %s520 = scalar_lea.sflag [#allocation4], %s519
        %s521 = sand.u32 %s321, 1
        %s522 = smul.addr %s521, 256
        %s523 = scalar_lea.vmem [#allocation11], %s522
        %s524 = smul.u32 32, %s30
        %p525 = scmp.lt.s32.totalorder %s524, 63
        %s526 = scalar_select %p525, %s524, 63
        %s527 = smul.addr %s526, 8
        %s528 = scalar_lea.vmem %s0, %s527
        %s529 = smul.u32 32, %s30
        %s530 = smul.u32 32, %s30
        %p531 = scmp.lt.s32.totalorder %s530, 63
        %s532 = scalar_select %p531, %s530, 63
        %s533 = smul.addr %s532, 8
        %s534 = scalar_lea.vmem %s1, %s533
        %s535 = smul.u32 32, %s30
        %s536 = smul.u32 32, %s30
        %v538 = vld [vmem:[%s528] sm:$0xff]
        %v539 = vld [vmem:[%s528 + $0x8] sm:$0xff]
        %v540 = vld [vmem:[%s528 + $0x10] sm:$0xff]
        %v541 = vld [vmem:[%s528 + $0x18] sm:$0xff]
        %v542 = vld [vmem:[%s528 + $0x20] sm:$0xff]
        %v543 = vld [vmem:[%s528 + $0x28] sm:$0xff]
        %v544 = vld [vmem:[%s528 + $0x30] sm:$0xff]
        %v545 = vld [vmem:[%s528 + $0x38] sm:$0xff]
        %v546 = vld [vmem:[%s528 + $0x40] sm:$0xff]
        %v547 = vld [vmem:[%s528 + $0x48] sm:$0xff]
        %v548 = vld [vmem:[%s528 + $0x50] sm:$0xff]
        %v549 = vld [vmem:[%s528 + $0x58] sm:$0xff]
        %v550 = vld [vmem:[%s528 + $0x60] sm:$0xff]
        %v551 = vld [vmem:[%s528 + $0x68] sm:$0xff]
        %v552 = vld [vmem:[%s528 + $0x70] sm:$0xff]
        %v553 = vld [vmem:[%s528 + $0x78] sm:$0xff]
        %v554 = vld [vmem:[%s528 + $0x80] sm:$0xff]
        %v555 = vld [vmem:[%s528 + $0x88] sm:$0xff]
        %v556 = vld [vmem:[%s528 + $0x90] sm:$0xff]
        %v557 = vld [vmem:[%s528 + $0x98] sm:$0xff]
        %v558 = vld [vmem:[%s528 + $0xa0] sm:$0xff]
        %v559 = vld [vmem:[%s528 + $0xa8] sm:$0xff]
        %v560 = vld [vmem:[%s528 + $0xb0] sm:$0xff]
        %v561 = vld [vmem:[%s528 + $0xb8] sm:$0xff]
        %v562 = vld [vmem:[%s528 + $0xc0] sm:$0xff]
        %v563 = vld [vmem:[%s528 + $0xc8] sm:$0xff]
        %v564 = vld [vmem:[%s528 + $0xd0] sm:$0xff]
        %v565 = vld [vmem:[%s528 + $0xd8] sm:$0xff]
        %v566 = vld [vmem:[%s528 + $0xe0] sm:$0xff]
        %v567 = vld [vmem:[%s528 + $0xe8] sm:$0xff]
        %v568 = vld [vmem:[%s528 + $0xf0] sm:$0xff]
        %v569 = vld [vmem:[%s528 + $0xf8] sm:$0xff]
        %v570 = vpack.c.bf16 %v539, %v538
        %v571 = vpack.c.bf16 %v541, %v540
        %v572 = vpack.c.bf16 %v543, %v542
        %v573 = vpack.c.bf16 %v545, %v544
        %v574 = vpack.c.bf16 %v547, %v546
        %v575 = vpack.c.bf16 %v549, %v548
        %v576 = vpack.c.bf16 %v551, %v550
        %v577 = vpack.c.bf16 %v553, %v552
        %v578 = vpack.c.bf16 %v555, %v554
        %v579 = vpack.c.bf16 %v557, %v556
        %v580 = vpack.c.bf16 %v559, %v558
        %v581 = vpack.c.bf16 %v561, %v560
        %v582 = vpack.c.bf16 %v563, %v562
        %v583 = vpack.c.bf16 %v565, %v564
        %v584 = vpack.c.bf16 %v567, %v566
        %v585 = vpack.c.bf16 %v569, %v568
        %v586 = vld [vmem:[#allocation2] sm:$0xff]
        %v587 = vld [vmem:[#allocation2 + $0x8] sm:$0xff]
        %v588 = vld [vmem:[#allocation2 + $0x10] sm:$0xff]
        %v589 = vld [vmem:[#allocation2 + $0x18] sm:$0xff]
        %v590 = vld [vmem:[#allocation2 + $0x20] sm:$0xff]
        %v591 = vld [vmem:[#allocation2 + $0x28] sm:$0xff]
        %v592 = vld [vmem:[#allocation2 + $0x30] sm:$0xff]
        %v593 = vld [vmem:[#allocation2 + $0x38] sm:$0xff]
        %v594 = vld [vmem:[#allocation2 + $0x40] sm:$0xff]
        %v595 = vld [vmem:[#allocation2 + $0x48] sm:$0xff]
        %v596 = vld [vmem:[#allocation2 + $0x50] sm:$0xff]
        %v597 = vld [vmem:[#allocation2 + $0x58] sm:$0xff]
        %v598 = vld [vmem:[#allocation2 + $0x60] sm:$0xff]
        %v599 = vld [vmem:[#allocation2 + $0x68] sm:$0xff]
        %v600 = vld [vmem:[#allocation2 + $0x70] sm:$0xff]
        %v601 = vld [vmem:[#allocation2 + $0x78] sm:$0xff]
        %v602 = vld [vmem:[%s534] sm:$0xff]
        %v603 = vld [vmem:[%s534 + $0x8] sm:$0xff]
        %v604 = vld [vmem:[%s534 + $0x10] sm:$0xff]
        %v605 = vld [vmem:[%s534 + $0x18] sm:$0xff]
        %v606 = vld [vmem:[%s534 + $0x20] sm:$0xff]
        %v607 = vld [vmem:[%s534 + $0x28] sm:$0xff]
        %v608 = vld [vmem:[%s534 + $0x30] sm:$0xff]
        %v609 = vld [vmem:[%s534 + $0x38] sm:$0xff]
        %v610 = vld [vmem:[%s534 + $0x40] sm:$0xff]
        %v611 = vld [vmem:[%s534 + $0x48] sm:$0xff]
        %v612 = vld [vmem:[%s534 + $0x50] sm:$0xff]
        %v613 = vld [vmem:[%s534 + $0x58] sm:$0xff]
        %v614 = vld [vmem:[%s534 + $0x60] sm:$0xff]
        %v615 = vld [vmem:[%s534 + $0x68] sm:$0xff]
        %v616 = vld [vmem:[%s534 + $0x70] sm:$0xff]
        %v617 = vld [vmem:[%s534 + $0x78] sm:$0xff]
        %v618 = vld [vmem:[%s534 + $0x80] sm:$0xff]
        %v619 = vld [vmem:[%s534 + $0x88] sm:$0xff]
        %v620 = vld [vmem:[%s534 + $0x90] sm:$0xff]
        %v621 = vld [vmem:[%s534 + $0x98] sm:$0xff]
        %v622 = vld [vmem:[%s534 + $0xa0] sm:$0xff]
        %v623 = vld [vmem:[%s534 + $0xa8] sm:$0xff]
        %v624 = vld [vmem:[%s534 + $0xb0] sm:$0xff]
        %v625 = vld [vmem:[%s534 + $0xb8] sm:$0xff]
        %v626 = vld [vmem:[%s534 + $0xc0] sm:$0xff]
        %v627 = vld [vmem:[%s534 + $0xc8] sm:$0xff]
        %v628 = vld [vmem:[%s534 + $0xd0] sm:$0xff]
        %v629 = vld [vmem:[%s534 + $0xd8] sm:$0xff]
        %v630 = vld [vmem:[%s534 + $0xe0] sm:$0xff]
        %v631 = vld [vmem:[%s534 + $0xe8] sm:$0xff]
        %v632 = vld [vmem:[%s534 + $0xf0] sm:$0xff]
        %v633 = vld [vmem:[%s534 + $0xf8] sm:$0xff]
        %v634 = vld [vmem:[%s3] sm:$0x3]
        %636 = vset.pattern.permute.xlu0 0
        %637 = vperm.xlu0 %636, %v602
        %v638 = vpop.permute.xlu0 %637
        %641 = vset.pattern.permute.xlu0 0
        %642 = vperm.xlu0 %641, %v603
        %v643 = vpop.permute.xlu0 %642
        %646 = vset.pattern.permute.xlu0 0
        %647 = vperm.xlu0 %646, %v604
        %v648 = vpop.permute.xlu0 %647
        %651 = vset.pattern.permute.xlu0 0
        %652 = vperm.xlu0 %651, %v605
        %v653 = vpop.permute.xlu0 %652
        %656 = vset.pattern.permute.xlu0 0
        %657 = vperm.xlu0 %656, %v606
        %v658 = vpop.permute.xlu0 %657
        %661 = vset.pattern.permute.xlu0 0
        %662 = vperm.xlu0 %661, %v607
        %v663 = vpop.permute.xlu0 %662
        %666 = vset.pattern.permute.xlu0 0
        %667 = vperm.xlu0 %666, %v608
        %v668 = vpop.permute.xlu0 %667
        %671 = vset.pattern.permute.xlu0 0
        %672 = vperm.xlu0 %671, %v609
        %v673 = vpop.permute.xlu0 %672
        %676 = vset.pattern.permute.xlu0 0
        %677 = vperm.xlu0 %676, %v610
        %v678 = vpop.permute.xlu0 %677
        %681 = vset.pattern.permute.xlu0 0
        %682 = vperm.xlu0 %681, %v611
        %v683 = vpop.permute.xlu0 %682
        %686 = vset.pattern.permute.xlu0 0
        %687 = vperm.xlu0 %686, %v612
        %v688 = vpop.permute.xlu0 %687
        %691 = vset.pattern.permute.xlu0 0
        %692 = vperm.xlu0 %691, %v613
        %v693 = vpop.permute.xlu0 %692
        %696 = vset.pattern.permute.xlu0 0
        %697 = vperm.xlu0 %696, %v614
        %v698 = vpop.permute.xlu0 %697
        %701 = vset.pattern.permute.xlu0 0
        %702 = vperm.xlu0 %701, %v615
        %v703 = vpop.permute.xlu0 %702
        %706 = vset.pattern.permute.xlu0 0
        %707 = vperm.xlu0 %706, %v616
        %v708 = vpop.permute.xlu0 %707
        %711 = vset.pattern.permute.xlu0 0
        %712 = vperm.xlu0 %711, %v617
        %v713 = vpop.permute.xlu0 %712
        %716 = vset.pattern.permute.xlu0 0
        %717 = vperm.xlu0 %716, %v618
        %v718 = vpop.permute.xlu0 %717
        %721 = vset.pattern.permute.xlu0 0
        %722 = vperm.xlu0 %721, %v619
        %v723 = vpop.permute.xlu0 %722
        %726 = vset.pattern.permute.xlu0 0
        %727 = vperm.xlu0 %726, %v620
        %v728 = vpop.permute.xlu0 %727
        %731 = vset.pattern.permute.xlu0 0
        %732 = vperm.xlu0 %731, %v621
        %v733 = vpop.permute.xlu0 %732
        %736 = vset.pattern.permute.xlu0 0
        %737 = vperm.xlu0 %736, %v622
        %v738 = vpop.permute.xlu0 %737
        %741 = vset.pattern.permute.xlu0 0
        %742 = vperm.xlu0 %741, %v623
        %v743 = vpop.permute.xlu0 %742
        %746 = vset.pattern.permute.xlu0 0
        %747 = vperm.xlu0 %746, %v624
        %v748 = vpop.permute.xlu0 %747
        %751 = vset.pattern.permute.xlu0 0
        %752 = vperm.xlu0 %751, %v625
        %v753 = vpop.permute.xlu0 %752
        %756 = vset.pattern.permute.xlu0 0
        %757 = vperm.xlu0 %756, %v626
        %v758 = vpop.permute.xlu0 %757
        %761 = vset.pattern.permute.xlu0 0
        %762 = vperm.xlu0 %761, %v627
        %v763 = vpop.permute.xlu0 %762
        %766 = vset.pattern.permute.xlu0 0
        %767 = vperm.xlu0 %766, %v628
        %v768 = vpop.permute.xlu0 %767
        %771 = vset.pattern.permute.xlu0 0
        %772 = vperm.xlu0 %771, %v629
        %v773 = vpop.permute.xlu0 %772
        %776 = vset.pattern.permute.xlu0 0
        %777 = vperm.xlu0 %776, %v630
        %v778 = vpop.permute.xlu0 %777
        %781 = vset.pattern.permute.xlu0 0
        %782 = vperm.xlu0 %781, %v631
        %v783 = vpop.permute.xlu0 %782
        %786 = vset.pattern.permute.xlu0 0
        %787 = vperm.xlu0 %786, %v632
        %v788 = vpop.permute.xlu0 %787
        %791 = vset.pattern.permute.xlu0 0
        %792 = vperm.xlu0 %791, %v633
        %v793 = vpop.permute.xlu0 %792
        %v796 = vlaneseq
        %v797 = vshrl.u32 %v796, 7
        %v798 = vsub.s32 0, %v797
        %v799 = vrot.slane %v634, %v798
        %v800 = vlaneseq
        %v801 = vshrl.u32 %v800, 7
        %v802 = vsub.s32 1, %v801
        %v803 = vrot.slane %v634, %v802
        %v806 = vmul.f32 %v638, %v799
        %v807 = vmul.f32 %v638, %v803
        %v808 = vmul.f32 %v643, %v799
        %v809 = vmul.f32 %v643, %v803
        %v810 = vmul.f32 %v648, %v799
        %v811 = vmul.f32 %v648, %v803
        %v812 = vmul.f32 %v653, %v799
        %v813 = vmul.f32 %v653, %v803
        %v814 = vmul.f32 %v658, %v799
        %v815 = vmul.f32 %v658, %v803
        %v816 = vmul.f32 %v663, %v799
        %v817 = vmul.f32 %v663, %v803
        %v818 = vmul.f32 %v668, %v799
        %v819 = vmul.f32 %v668, %v803
        %v820 = vmul.f32 %v673, %v799
        %v821 = vmul.f32 %v673, %v803
        %v822 = vmul.f32 %v678, %v799
        %v823 = vmul.f32 %v678, %v803
        %v824 = vmul.f32 %v683, %v799
        %v825 = vmul.f32 %v683, %v803
        %v826 = vmul.f32 %v688, %v799
        %v827 = vmul.f32 %v688, %v803
        %v828 = vmul.f32 %v693, %v799
        %v829 = vmul.f32 %v693, %v803
        %v830 = vmul.f32 %v698, %v799
        %v831 = vmul.f32 %v698, %v803
        %v832 = vmul.f32 %v703, %v799
        %v833 = vmul.f32 %v703, %v803
        %v834 = vmul.f32 %v708, %v799
        %v835 = vmul.f32 %v708, %v803
        %v836 = vmul.f32 %v713, %v799
        %v837 = vmul.f32 %v713, %v803
        %v838 = vmul.f32 %v718, %v799
        %v839 = vmul.f32 %v718, %v803
        %v840 = vmul.f32 %v723, %v799
        %v841 = vmul.f32 %v723, %v803
        %v842 = vmul.f32 %v728, %v799
        %v843 = vmul.f32 %v728, %v803
        %v844 = vmul.f32 %v733, %v799
        %v845 = vmul.f32 %v733, %v803
        %v846 = vmul.f32 %v738, %v799
        %v847 = vmul.f32 %v738, %v803
        %v848 = vmul.f32 %v743, %v799
        %v849 = vmul.f32 %v743, %v803
        %v850 = vmul.f32 %v748, %v799
        %v851 = vmul.f32 %v748, %v803
        %v852 = vmul.f32 %v753, %v799
        %v853 = vmul.f32 %v753, %v803
        %v854 = vmul.f32 %v758, %v799
        %v855 = vmul.f32 %v758, %v803
        %v856 = vmul.f32 %v763, %v799
        %v857 = vmul.f32 %v763, %v803
        %v858 = vmul.f32 %v768, %v799
        %v859 = vmul.f32 %v768, %v803
        %v860 = vmul.f32 %v773, %v799
        %v861 = vmul.f32 %v773, %v803
        %v862 = vmul.f32 %v778, %v799
        %v863 = vmul.f32 %v778, %v803
        %v864 = vmul.f32 %v783, %v799
        %v865 = vmul.f32 %v783, %v803
        %v866 = vmul.f32 %v788, %v799
        %v867 = vmul.f32 %v788, %v803
        %v868 = vmul.f32 %v793, %v799
        %v869 = vmul.f32 %v793, %v803
        %v886 = vunpack.c.l.b16 %v586
        %v887 = vunpack.c.h.b16 %v586
        %v888 = vunpack.c.l.b16 %v587
        %v889 = vunpack.c.h.b16 %v587
        %v890 = vunpack.c.l.b16 %v588
        %v891 = vunpack.c.h.b16 %v588
        %v892 = vunpack.c.l.b16 %v589
        %v893 = vunpack.c.h.b16 %v589
        %v894 = vunpack.c.l.b16 %v590
        %v895 = vunpack.c.h.b16 %v590
        %v896 = vunpack.c.l.b16 %v591
        %v897 = vunpack.c.h.b16 %v591
        %v898 = vunpack.c.l.b16 %v592
        %v899 = vunpack.c.h.b16 %v592
        %v900 = vunpack.c.l.b16 %v593
        %v901 = vunpack.c.h.b16 %v593
        %v902 = vunpack.c.l.b16 %v594
        %v903 = vunpack.c.h.b16 %v594
        %v904 = vunpack.c.l.b16 %v595
        %v905 = vunpack.c.h.b16 %v595
        %v906 = vunpack.c.l.b16 %v596
        %v907 = vunpack.c.h.b16 %v596
        %v908 = vunpack.c.l.b16 %v597
        %v909 = vunpack.c.h.b16 %v597
        %v910 = vunpack.c.l.b16 %v598
        %v911 = vunpack.c.h.b16 %v598
        %v912 = vunpack.c.l.b16 %v599
        %v913 = vunpack.c.h.b16 %v599
        %v914 = vunpack.c.l.b16 %v600
        %v915 = vunpack.c.h.b16 %v600
        %v916 = vunpack.c.l.b16 %v601
        %v917 = vunpack.c.h.b16 %v601
        %v918 = vpack.c.b16 %v888, %v886
        %v919 = vpack.c.b16 %v889, %v887
        %v920 = vpack.c.b16 %v892, %v890
        %v921 = vpack.c.b16 %v893, %v891
        %v922 = vpack.c.b16 %v896, %v894
        %v923 = vpack.c.b16 %v897, %v895
        %v924 = vpack.c.b16 %v900, %v898
        %v925 = vpack.c.b16 %v901, %v899
        %v926 = vpack.c.b16 %v904, %v902
        %v927 = vpack.c.b16 %v905, %v903
        %v928 = vpack.c.b16 %v908, %v906
        %v929 = vpack.c.b16 %v909, %v907
        %v930 = vpack.c.b16 %v912, %v910
        %v931 = vpack.c.b16 %v913, %v911
        %v932 = vpack.c.b16 %v916, %v914
        %v933 = vpack.c.b16 %v917, %v915
        %950 = vmatprep.subr.bf16.mxu0 %v933
        %951 = vmatpush1.bf16.msra.mxu0 %v932
        %952 = vmatprep.subr.bf16.mxu0 %v931
        %953 = vmatpush1.bf16.msra.mxu0 %v930
        %954 = vmatprep.subr.bf16.mxu0 %v929
        %955 = vmatpush1.bf16.msra.mxu0 %v928
        %956 = vmatprep.subr.bf16.mxu0 %v927
        %957 = vmatpush1.bf16.msra.mxu0 %v926
        %958 = vmatprep.subr.bf16.mxu0 %v925
        %959 = vmatpush1.bf16.msra.mxu0 %v924
        %960 = vmatprep.subr.bf16.mxu0 %v923
        %961 = vmatpush1.bf16.msra.mxu0 %v922
        %962 = vmatprep.subr.bf16.mxu0 %v921
        %963 = vmatpush1.bf16.msra.mxu0 %v920
        %964 = vmatprep.subr.bf16.mxu0 %v919
        %965 = vmatpush1.bf16.msra.mxu0 %v918
        %966 = vmatprep.subr.bf16.mxu0 0
        %967 = vmatpush2.bf16.msra.mxu0 0
        %968 = vmatprep.subr.bf16.mxu0 0
        %969 = vmatpush2.bf16.msra.mxu0 0
        %970 = vmatprep.subr.bf16.mxu0 0
        %971 = vmatpush2.bf16.msra.mxu0 0
        %972 = vmatprep.subr.bf16.mxu0 0
        %973 = vmatpush2.bf16.msra.mxu0 0
        %974 = vmatprep.subr.bf16.mxu0 0
        %975 = vmatpush2.bf16.msra.mxu0 0
        %976 = vmatprep.subr.bf16.mxu0 0
        %977 = vmatpush2.bf16.msra.mxu0 0
        %978 = vmatprep.subr.bf16.mxu0 0
        %979 = vmatpush2.bf16.msra.mxu0 0
        %980 = vmatprep.subr.bf16.mxu0 0
        %981 = vmatpush2.bf16.msra.mxu0 0
        %982 = vmatprep.mubr.bf16.mxu0 0
        %983 = vmatmul.mubr.bf16.gmra.mxu0 %v570
        %v984 = vpop.f32.mrf.mxu0
        %v985 = vadd.f32 %v806, %v984
        %v986 = vpop.f32.mrf.mxu0
        %v987 = vadd.f32 %v807, %v986
        %v988 = vpop.f32.mrf.mxu0
        %v989 = vadd.f32 %v808, %v988
        %v990 = vpop.f32.mrf.mxu0
        %v991 = vadd.f32 %v809, %v990
        %992 = vmatprep.mubr.bf16.mxu0 0
        %993 = vmatmul.mubr.bf16.gmra.mxu0 %v571
        %v994 = vpop.f32.mrf.mxu0
        %v995 = vadd.f32 %v810, %v994
        %v996 = vpop.f32.mrf.mxu0
        %v997 = vadd.f32 %v811, %v996
        %v998 = vpop.f32.mrf.mxu0
        %v999 = vadd.f32 %v812, %v998
        %v1000 = vpop.f32.mrf.mxu0
        %v1001 = vadd.f32 %v813, %v1000
        %1002 = vmatprep.mubr.bf16.mxu0 0
        %1003 = vmatmul.mubr.bf16.gmra.mxu0 %v572
        %v1004 = vpop.f32.mrf.mxu0
        %v1005 = vadd.f32 %v814, %v1004
        %v1006 = vpop.f32.mrf.mxu0
        %v1007 = vadd.f32 %v815, %v1006
        %v1008 = vpop.f32.mrf.mxu0
        %v1009 = vadd.f32 %v816, %v1008
        %v1010 = vpop.f32.mrf.mxu0
        %v1011 = vadd.f32 %v817, %v1010
        %1012 = vmatprep.mubr.bf16.mxu0 0
        %1013 = vmatmul.mubr.bf16.gmra.mxu0 %v573
        %v1014 = vpop.f32.mrf.mxu0
        %v1015 = vadd.f32 %v818, %v1014
        %v1016 = vpop.f32.mrf.mxu0
        %v1017 = vadd.f32 %v819, %v1016
        %v1018 = vpop.f32.mrf.mxu0
        %v1019 = vadd.f32 %v820, %v1018
        %v1020 = vpop.f32.mrf.mxu0
        %v1021 = vadd.f32 %v821, %v1020
        %1022 = vmatprep.mubr.bf16.mxu0 0
        %1023 = vmatmul.mubr.bf16.gmra.mxu0 %v574
        %v1024 = vpop.f32.mrf.mxu0
        %v1025 = vadd.f32 %v822, %v1024
        %v1026 = vpop.f32.mrf.mxu0
        %v1027 = vadd.f32 %v823, %v1026
        %v1028 = vpop.f32.mrf.mxu0
        %v1029 = vadd.f32 %v824, %v1028
        %v1030 = vpop.f32.mrf.mxu0
        %v1031 = vadd.f32 %v825, %v1030
        %1032 = vmatprep.mubr.bf16.mxu0 0
        %1033 = vmatmul.mubr.bf16.gmra.mxu0 %v575
        %v1034 = vpop.f32.mrf.mxu0
        %v1035 = vadd.f32 %v826, %v1034
        %v1036 = vpop.f32.mrf.mxu0
        %v1037 = vadd.f32 %v827, %v1036
        %v1038 = vpop.f32.mrf.mxu0
        %v1039 = vadd.f32 %v828, %v1038
        %v1040 = vpop.f32.mrf.mxu0
        %v1041 = vadd.f32 %v829, %v1040
        %1042 = vmatprep.mubr.bf16.mxu0 0
        %1043 = vmatmul.mubr.bf16.gmra.mxu0 %v576
        %v1044 = vpop.f32.mrf.mxu0
        %v1045 = vadd.f32 %v830, %v1044
        %v1046 = vpop.f32.mrf.mxu0
        %v1047 = vadd.f32 %v831, %v1046
        %v1048 = vpop.f32.mrf.mxu0
        %v1049 = vadd.f32 %v832, %v1048
        %v1050 = vpop.f32.mrf.mxu0
        %v1051 = vadd.f32 %v833, %v1050
        %1052 = vmatprep.mubr.bf16.mxu0 0
        %1053 = vmatmul.mubr.bf16.gmra.mxu0 %v577
        %v1054 = vpop.f32.mrf.mxu0
        %v1055 = vadd.f32 %v834, %v1054
        %v1056 = vpop.f32.mrf.mxu0
        %v1057 = vadd.f32 %v835, %v1056
        %v1058 = vpop.f32.mrf.mxu0
        %v1059 = vadd.f32 %v836, %v1058
        %v1060 = vpop.f32.mrf.mxu0
        %v1061 = vadd.f32 %v837, %v1060
        %1062 = vmatprep.mubr.bf16.mxu0 0
        %1063 = vmatmul.mubr.bf16.gmra.mxu0 %v578
        %v1064 = vpop.f32.mrf.mxu0
        %v1065 = vadd.f32 %v838, %v1064
        %v1066 = vpop.f32.mrf.mxu0
        %v1067 = vadd.f32 %v839, %v1066
        %v1068 = vpop.f32.mrf.mxu0
        %v1069 = vadd.f32 %v840, %v1068
        %v1070 = vpop.f32.mrf.mxu0
        %v1071 = vadd.f32 %v841, %v1070
        %1072 = vmatprep.mubr.bf16.mxu0 0
        %1073 = vmatmul.mubr.bf16.gmra.mxu0 %v579
        %v1074 = vpop.f32.mrf.mxu0
        %v1075 = vadd.f32 %v842, %v1074
        %v1076 = vpop.f32.mrf.mxu0
        %v1077 = vadd.f32 %v843, %v1076
        %v1078 = vpop.f32.mrf.mxu0
        %v1079 = vadd.f32 %v844, %v1078
        %v1080 = vpop.f32.mrf.mxu0
        %v1081 = vadd.f32 %v845, %v1080
        %1082 = vmatprep.mubr.bf16.mxu0 0
        %1083 = vmatmul.mubr.bf16.gmra.mxu0 %v580
        %v1084 = vpop.f32.mrf.mxu0
        %v1085 = vadd.f32 %v846, %v1084
        %v1086 = vpop.f32.mrf.mxu0
        %v1087 = vadd.f32 %v847, %v1086
        %v1088 = vpop.f32.mrf.mxu0
        %v1089 = vadd.f32 %v848, %v1088
        %v1090 = vpop.f32.mrf.mxu0
        %v1091 = vadd.f32 %v849, %v1090
        %1092 = vmatprep.mubr.bf16.mxu0 0
        %1093 = vmatmul.mubr.bf16.gmra.mxu0 %v581
        %v1094 = vpop.f32.mrf.mxu0
        %v1095 = vadd.f32 %v850, %v1094
        %v1096 = vpop.f32.mrf.mxu0
        %v1097 = vadd.f32 %v851, %v1096
        %v1098 = vpop.f32.mrf.mxu0
        %v1099 = vadd.f32 %v852, %v1098
        %v1100 = vpop.f32.mrf.mxu0
        %v1101 = vadd.f32 %v853, %v1100
        %1102 = vmatprep.mubr.bf16.mxu0 0
        %1103 = vmatmul.mubr.bf16.gmra.mxu0 %v582
        %v1104 = vpop.f32.mrf.mxu0
        %v1105 = vadd.f32 %v854, %v1104
        %v1106 = vpop.f32.mrf.mxu0
        %v1107 = vadd.f32 %v855, %v1106
        %v1108 = vpop.f32.mrf.mxu0
        %v1109 = vadd.f32 %v856, %v1108
        %v1110 = vpop.f32.mrf.mxu0
        %v1111 = vadd.f32 %v857, %v1110
        %1112 = vmatprep.mubr.bf16.mxu0 0
        %1113 = vmatmul.mubr.bf16.gmra.mxu0 %v583
        %v1114 = vpop.f32.mrf.mxu0
        %v1115 = vadd.f32 %v858, %v1114
        %v1116 = vpop.f32.mrf.mxu0
        %v1117 = vadd.f32 %v859, %v1116
        %v1118 = vpop.f32.mrf.mxu0
        %v1119 = vadd.f32 %v860, %v1118
        %v1120 = vpop.f32.mrf.mxu0
        %v1121 = vadd.f32 %v861, %v1120
        %1122 = vmatprep.mubr.bf16.mxu0 0
        %1123 = vmatmul.mubr.bf16.gmra.mxu0 %v584
        %v1124 = vpop.f32.mrf.mxu0
        %v1125 = vadd.f32 %v862, %v1124
        %v1126 = vpop.f32.mrf.mxu0
        %v1127 = vadd.f32 %v863, %v1126
        %v1128 = vpop.f32.mrf.mxu0
        %v1129 = vadd.f32 %v864, %v1128
        %v1130 = vpop.f32.mrf.mxu0
        %v1131 = vadd.f32 %v865, %v1130
        %1132 = vmatprep.mubr.bf16.mxu0 0
        %1133 = vmatmul.mubr.bf16.gmra.mxu0 %v585
        %v1134 = vpop.f32.mrf.mxu0
        %v1135 = vadd.f32 %v866, %v1134
        %v1136 = vpop.f32.mrf.mxu0
        %v1137 = vadd.f32 %v867, %v1136
        %v1138 = vpop.f32.mrf.mxu0
        %v1139 = vadd.f32 %v868, %v1138
        %v1140 = vpop.f32.mrf.mxu0
        %v1141 = vadd.f32 %v869, %v1140
        %1142 = vdwg.mxu0
        %v1143 = vld [vmem:[%s4] sm:$0x3]
        %v1145 = vlaneseq
        %v1146 = vshrl.u32 %v1145, 7
        %v1147 = vsub.s32 0, %v1146
        %v1148 = vrot.slane %v1143, %v1147
        %v1149 = vlaneseq
        %v1150 = vshrl.u32 %v1149, 7
        %v1151 = vsub.s32 1, %v1150
        %v1152 = vrot.slane %v1143, %v1151
        %v1155 = vadd.f32 %v985, %v1148
        %v1156 = vadd.f32 %v987, %v1152
        %v1157 = vadd.f32 %v989, %v1148
        %v1158 = vadd.f32 %v991, %v1152
        %v1159 = vadd.f32 %v995, %v1148
        %v1160 = vadd.f32 %v997, %v1152
        %v1161 = vadd.f32 %v999, %v1148
        %v1162 = vadd.f32 %v1001, %v1152
        %v1163 = vadd.f32 %v1005, %v1148
        %v1164 = vadd.f32 %v1007, %v1152
        %v1165 = vadd.f32 %v1009, %v1148
        %v1166 = vadd.f32 %v1011, %v1152
        %v1167 = vadd.f32 %v1015, %v1148
        %v1168 = vadd.f32 %v1017, %v1152
        %v1169 = vadd.f32 %v1019, %v1148
        %v1170 = vadd.f32 %v1021, %v1152
        %v1171 = vadd.f32 %v1025, %v1148
        %v1172 = vadd.f32 %v1027, %v1152
        %v1173 = vadd.f32 %v1029, %v1148
        %v1174 = vadd.f32 %v1031, %v1152
        %v1175 = vadd.f32 %v1035, %v1148
        %v1176 = vadd.f32 %v1037, %v1152
        %v1177 = vadd.f32 %v1039, %v1148
        %v1178 = vadd.f32 %v1041, %v1152
        %v1179 = vadd.f32 %v1045, %v1148
        %v1180 = vadd.f32 %v1047, %v1152
        %v1181 = vadd.f32 %v1049, %v1148
        %v1182 = vadd.f32 %v1051, %v1152
        %v1183 = vadd.f32 %v1055, %v1148
        %v1184 = vadd.f32 %v1057, %v1152
        %v1185 = vadd.f32 %v1059, %v1148
        %v1186 = vadd.f32 %v1061, %v1152
        %v1187 = vadd.f32 %v1065, %v1148
        %v1188 = vadd.f32 %v1067, %v1152
        %v1189 = vadd.f32 %v1069, %v1148
        %v1190 = vadd.f32 %v1071, %v1152
        %v1191 = vadd.f32 %v1075, %v1148
        %v1192 = vadd.f32 %v1077, %v1152
        %v1193 = vadd.f32 %v1079, %v1148
        %v1194 = vadd.f32 %v1081, %v1152
        %v1195 = vadd.f32 %v1085, %v1148
        %v1196 = vadd.f32 %v1087, %v1152
        %v1197 = vadd.f32 %v1089, %v1148
        %v1198 = vadd.f32 %v1091, %v1152
        %v1199 = vadd.f32 %v1095, %v1148
        %v1200 = vadd.f32 %v1097, %v1152
        %v1201 = vadd.f32 %v1099, %v1148
        %v1202 = vadd.f32 %v1101, %v1152
        %v1203 = vadd.f32 %v1105, %v1148
        %v1204 = vadd.f32 %v1107, %v1152
        %v1205 = vadd.f32 %v1109, %v1148
        %v1206 = vadd.f32 %v1111, %v1152
        %v1207 = vadd.f32 %v1115, %v1148
        %v1208 = vadd.f32 %v1117, %v1152
        %v1209 = vadd.f32 %v1119, %v1148
        %v1210 = vadd.f32 %v1121, %v1152
        %v1211 = vadd.f32 %v1125, %v1148
        %v1212 = vadd.f32 %v1127, %v1152
        %v1213 = vadd.f32 %v1129, %v1148
        %v1214 = vadd.f32 %v1131, %v1152
        %v1215 = vadd.f32 %v1135, %v1148
        %v1216 = vadd.f32 %v1137, %v1152
        %v1217 = vadd.f32 %v1139, %v1148
        %v1218 = vadd.f32 %v1141, %v1152
        %v1219 = vsub.f32 0.0, %v1155
        %v1220 = vsub.f32 0.0, %v1156
        %v1221 = vsub.f32 0.0, %v1157
        %v1222 = vsub.f32 0.0, %v1158
        %v1223 = vsub.f32 0.0, %v1159
        %v1224 = vsub.f32 0.0, %v1160
        %v1225 = vsub.f32 0.0, %v1161
        %v1226 = vsub.f32 0.0, %v1162
        %v1227 = vsub.f32 0.0, %v1163
        %v1228 = vsub.f32 0.0, %v1164
        %v1229 = vsub.f32 0.0, %v1165
        %v1230 = vsub.f32 0.0, %v1166
        %v1231 = vsub.f32 0.0, %v1167
        %v1232 = vsub.f32 0.0, %v1168
        %v1233 = vsub.f32 0.0, %v1169
        %v1234 = vsub.f32 0.0, %v1170
        %v1235 = vsub.f32 0.0, %v1171
        %v1236 = vsub.f32 0.0, %v1172
        %v1237 = vsub.f32 0.0, %v1173
        %v1238 = vsub.f32 0.0, %v1174
        %v1239 = vsub.f32 0.0, %v1175
        %v1240 = vsub.f32 0.0, %v1176
        %v1241 = vsub.f32 0.0, %v1177
        %v1242 = vsub.f32 0.0, %v1178
        %v1243 = vsub.f32 0.0, %v1179
        %v1244 = vsub.f32 0.0, %v1180
        %v1245 = vsub.f32 0.0, %v1181
        %v1246 = vsub.f32 0.0, %v1182
        %v1247 = vsub.f32 0.0, %v1183
        %v1248 = vsub.f32 0.0, %v1184
        %v1249 = vsub.f32 0.0, %v1185
        %v1250 = vsub.f32 0.0, %v1186
        %v1251 = vsub.f32 0.0, %v1187
        %v1252 = vsub.f32 0.0, %v1188
        %v1253 = vsub.f32 0.0, %v1189
        %v1254 = vsub.f32 0.0, %v1190
        %v1255 = vsub.f32 0.0, %v1191
        %v1256 = vsub.f32 0.0, %v1192
        %v1257 = vsub.f32 0.0, %v1193
        %v1258 = vsub.f32 0.0, %v1194
        %v1259 = vsub.f32 0.0, %v1195
        %v1260 = vsub.f32 0.0, %v1196
        %v1261 = vsub.f32 0.0, %v1197
        %v1262 = vsub.f32 0.0, %v1198
        %v1263 = vsub.f32 0.0, %v1199
        %v1264 = vsub.f32 0.0, %v1200
        %v1265 = vsub.f32 0.0, %v1201
        %v1266 = vsub.f32 0.0, %v1202
        %v1267 = vsub.f32 0.0, %v1203
        %v1268 = vsub.f32 0.0, %v1204
        %v1269 = vsub.f32 0.0, %v1205
        %v1270 = vsub.f32 0.0, %v1206
        %v1271 = vsub.f32 0.0, %v1207
        %v1272 = vsub.f32 0.0, %v1208
        %v1273 = vsub.f32 0.0, %v1209
        %v1274 = vsub.f32 0.0, %v1210
        %v1275 = vsub.f32 0.0, %v1211
        %v1276 = vsub.f32 0.0, %v1212
        %v1277 = vsub.f32 0.0, %v1213
        %v1278 = vsub.f32 0.0, %v1214
        %v1279 = vsub.f32 0.0, %v1215
        %v1280 = vsub.f32 0.0, %v1216
        %v1281 = vsub.f32 0.0, %v1217
        %v1282 = vsub.f32 0.0, %v1218
        %v1283 = vmul.f32 %v1219, 1.442695
        %v1284 = vpow.pop %v1283
        %v1285 = vmul.f32 %v1220, 1.442695
        %v1286 = vpow.pop %v1285
        %v1287 = vmul.f32 %v1221, 1.442695
        %v1288 = vpow.pop %v1287
        %v1289 = vmul.f32 %v1222, 1.442695
        %v1290 = vpow.pop %v1289
        %v1291 = vmul.f32 %v1223, 1.442695
        %v1292 = vpow.pop %v1291
        %v1293 = vmul.f32 %v1224, 1.442695
        %v1294 = vpow.pop %v1293
        %v1295 = vmul.f32 %v1225, 1.442695
        %v1296 = vpow.pop %v1295
        %v1297 = vmul.f32 %v1226, 1.442695
        %v1298 = vpow.pop %v1297
        %v1299 = vmul.f32 %v1227, 1.442695
        %v1300 = vpow.pop %v1299
        %v1301 = vmul.f32 %v1228, 1.442695
        %v1302 = vpow.pop %v1301
        %v1303 = vmul.f32 %v1229, 1.442695
        %v1304 = vpow.pop %v1303
        %v1305 = vmul.f32 %v1230, 1.442695
        %v1306 = vpow.pop %v1305
        %v1307 = vmul.f32 %v1231, 1.442695
        %v1308 = vpow.pop %v1307
        %v1309 = vmul.f32 %v1232, 1.442695
        %v1310 = vpow.pop %v1309
        %v1311 = vmul.f32 %v1233, 1.442695
        %v1312 = vpow.pop %v1311
        %v1313 = vmul.f32 %v1234, 1.442695
        %v1314 = vpow.pop %v1313
        %v1315 = vmul.f32 %v1235, 1.442695
        %v1316 = vpow.pop %v1315
        %v1317 = vmul.f32 %v1236, 1.442695
        %v1318 = vpow.pop %v1317
        %v1319 = vmul.f32 %v1237, 1.442695
        %v1320 = vpow.pop %v1319
        %v1321 = vmul.f32 %v1238, 1.442695
        %v1322 = vpow.pop %v1321
        %v1323 = vmul.f32 %v1239, 1.442695
        %v1324 = vpow.pop %v1323
        %v1325 = vmul.f32 %v1240, 1.442695
        %v1326 = vpow.pop %v1325
        %v1327 = vmul.f32 %v1241, 1.442695
        %v1328 = vpow.pop %v1327
        %v1329 = vmul.f32 %v1242, 1.442695
        %v1330 = vpow.pop %v1329
        %v1331 = vmul.f32 %v1243, 1.442695
        %v1332 = vpow.pop %v1331
        %v1333 = vmul.f32 %v1244, 1.442695
        %v1334 = vpow.pop %v1333
        %v1335 = vmul.f32 %v1245, 1.442695
        %v1336 = vpow.pop %v1335
        %v1337 = vmul.f32 %v1246, 1.442695
        %v1338 = vpow.pop %v1337
        %v1339 = vmul.f32 %v1247, 1.442695
        %v1340 = vpow.pop %v1339
        %v1341 = vmul.f32 %v1248, 1.442695
        %v1342 = vpow.pop %v1341
        %v1343 = vmul.f32 %v1249, 1.442695
        %v1344 = vpow.pop %v1343
        %v1345 = vmul.f32 %v1250, 1.442695
        %v1346 = vpow.pop %v1345
        %v1347 = vmul.f32 %v1251, 1.442695
        %v1348 = vpow.pop %v1347
        %v1349 = vmul.f32 %v1252, 1.442695
        %v1350 = vpow.pop %v1349
        %v1351 = vmul.f32 %v1253, 1.442695
        %v1352 = vpow.pop %v1351
        %v1353 = vmul.f32 %v1254, 1.442695
        %v1354 = vpow.pop %v1353
        %v1355 = vmul.f32 %v1255, 1.442695
        %v1356 = vpow.pop %v1355
        %v1357 = vmul.f32 %v1256, 1.442695
        %v1358 = vpow.pop %v1357
        %v1359 = vmul.f32 %v1257, 1.442695
        %v1360 = vpow.pop %v1359
        %v1361 = vmul.f32 %v1258, 1.442695
        %v1362 = vpow.pop %v1361
        %v1363 = vmul.f32 %v1259, 1.442695
        %v1364 = vpow.pop %v1363
        %v1365 = vmul.f32 %v1260, 1.442695
        %v1366 = vpow.pop %v1365
        %v1367 = vmul.f32 %v1261, 1.442695
        %v1368 = vpow.pop %v1367
        %v1369 = vmul.f32 %v1262, 1.442695
        %v1370 = vpow.pop %v1369
        %v1371 = vmul.f32 %v1263, 1.442695
        %v1372 = vpow.pop %v1371
        %v1373 = vmul.f32 %v1264, 1.442695
        %v1374 = vpow.pop %v1373
        %v1375 = vmul.f32 %v1265, 1.442695
        %v1376 = vpow.pop %v1375
        %v1377 = vmul.f32 %v1266, 1.442695
        %v1378 = vpow.pop %v1377
        %v1379 = vmul.f32 %v1267, 1.442695
        %v1380 = vpow.pop %v1379
        %v1381 = vmul.f32 %v1268, 1.442695
        %v1382 = vpow.pop %v1381
        %v1383 = vmul.f32 %v1269, 1.442695
        %v1384 = vpow.pop %v1383
        %v1385 = vmul.f32 %v1270, 1.442695
        %v1386 = vpow.pop %v1385
        %v1387 = vmul.f32 %v1271, 1.442695
        %v1388 = vpow.pop %v1387
        %v1389 = vmul.f32 %v1272, 1.442695
        %v1390 = vpow.pop %v1389
        %v1391 = vmul.f32 %v1273, 1.442695
        %v1392 = vpow.pop %v1391
        %v1393 = vmul.f32 %v1274, 1.442695
        %v1394 = vpow.pop %v1393
        %v1395 = vmul.f32 %v1275, 1.442695
        %v1396 = vpow.pop %v1395
        %v1397 = vmul.f32 %v1276, 1.442695
        %v1398 = vpow.pop %v1397
        %v1399 = vmul.f32 %v1277, 1.442695
        %v1400 = vpow.pop %v1399
        %v1401 = vmul.f32 %v1278, 1.442695
        %v1402 = vpow.pop %v1401
        %v1403 = vmul.f32 %v1279, 1.442695
        %v1404 = vpow.pop %v1403
        %v1405 = vmul.f32 %v1280, 1.442695
        %v1406 = vpow.pop %v1405
        %v1407 = vmul.f32 %v1281, 1.442695
        %v1408 = vpow.pop %v1407
        %v1409 = vmul.f32 %v1282, 1.442695
        %v1410 = vpow.pop %v1409
        %v1411 = vadd.f32 %v1284, 1.0
        %v1412 = vadd.f32 %v1286, 1.0
        %v1413 = vadd.f32 %v1288, 1.0
        %v1414 = vadd.f32 %v1290, 1.0
        %v1415 = vadd.f32 %v1292, 1.0
        %v1416 = vadd.f32 %v1294, 1.0
        %v1417 = vadd.f32 %v1296, 1.0
        %v1418 = vadd.f32 %v1298, 1.0
        %v1419 = vadd.f32 %v1300, 1.0
        %v1420 = vadd.f32 %v1302, 1.0
        %v1421 = vadd.f32 %v1304, 1.0
        %v1422 = vadd.f32 %v1306, 1.0
        %v1423 = vadd.f32 %v1308, 1.0
        %v1424 = vadd.f32 %v1310, 1.0
        %v1425 = vadd.f32 %v1312, 1.0
        %v1426 = vadd.f32 %v1314, 1.0
        %v1427 = vadd.f32 %v1316, 1.0
        %v1428 = vadd.f32 %v1318, 1.0
        %v1429 = vadd.f32 %v1320, 1.0
        %v1430 = vadd.f32 %v1322, 1.0
        %v1431 = vadd.f32 %v1324, 1.0
        %v1432 = vadd.f32 %v1326, 1.0
        %v1433 = vadd.f32 %v1328, 1.0
        %v1434 = vadd.f32 %v1330, 1.0
        %v1435 = vadd.f32 %v1332, 1.0
        %v1436 = vadd.f32 %v1334, 1.0
        %v1437 = vadd.f32 %v1336, 1.0
        %v1438 = vadd.f32 %v1338, 1.0
        %v1439 = vadd.f32 %v1340, 1.0
        %v1440 = vadd.f32 %v1342, 1.0
        %v1441 = vadd.f32 %v1344, 1.0
        %v1442 = vadd.f32 %v1346, 1.0
        %v1443 = vadd.f32 %v1348, 1.0
        %v1444 = vadd.f32 %v1350, 1.0
        %v1445 = vadd.f32 %v1352, 1.0
        %v1446 = vadd.f32 %v1354, 1.0
        %v1447 = vadd.f32 %v1356, 1.0
        %v1448 = vadd.f32 %v1358, 1.0
        %v1449 = vadd.f32 %v1360, 1.0
        %v1450 = vadd.f32 %v1362, 1.0
        %v1451 = vadd.f32 %v1364, 1.0
        %v1452 = vadd.f32 %v1366, 1.0
        %v1453 = vadd.f32 %v1368, 1.0
        %v1454 = vadd.f32 %v1370, 1.0
        %v1455 = vadd.f32 %v1372, 1.0
        %v1456 = vadd.f32 %v1374, 1.0
        %v1457 = vadd.f32 %v1376, 1.0
        %v1458 = vadd.f32 %v1378, 1.0
        %v1459 = vadd.f32 %v1380, 1.0
        %v1460 = vadd.f32 %v1382, 1.0
        %v1461 = vadd.f32 %v1384, 1.0
        %v1462 = vadd.f32 %v1386, 1.0
        %v1463 = vadd.f32 %v1388, 1.0
        %v1464 = vadd.f32 %v1390, 1.0
        %v1465 = vadd.f32 %v1392, 1.0
        %v1466 = vadd.f32 %v1394, 1.0
        %v1467 = vadd.f32 %v1396, 1.0
        %v1468 = vadd.f32 %v1398, 1.0
        %v1469 = vadd.f32 %v1400, 1.0
        %v1470 = vadd.f32 %v1402, 1.0
        %v1471 = vadd.f32 %v1404, 1.0
        %v1472 = vadd.f32 %v1406, 1.0
        %v1473 = vadd.f32 %v1408, 1.0
        %v1474 = vadd.f32 %v1410, 1.0
        %v1475 = vrcp.pop %v1411
        %v1476 = vrcp.pop %v1412
        %v1477 = vrcp.pop %v1413
        %v1478 = vrcp.pop %v1414
        %v1479 = vrcp.pop %v1415
        %v1480 = vrcp.pop %v1416
        %v1481 = vrcp.pop %v1417
        %v1482 = vrcp.pop %v1418
        %v1483 = vrcp.pop %v1419
        %v1484 = vrcp.pop %v1420
        %v1485 = vrcp.pop %v1421
        %v1486 = vrcp.pop %v1422
        %v1487 = vrcp.pop %v1423
        %v1488 = vrcp.pop %v1424
        %v1489 = vrcp.pop %v1425
        %v1490 = vrcp.pop %v1426
        %v1491 = vrcp.pop %v1427
        %v1492 = vrcp.pop %v1428
        %v1493 = vrcp.pop %v1429
        %v1494 = vrcp.pop %v1430
        %v1495 = vrcp.pop %v1431
        %v1496 = vrcp.pop %v1432
        %v1497 = vrcp.pop %v1433
        %v1498 = vrcp.pop %v1434
        %v1499 = vrcp.pop %v1435
        %v1500 = vrcp.pop %v1436
        %v1501 = vrcp.pop %v1437
        %v1502 = vrcp.pop %v1438
        %v1503 = vrcp.pop %v1439
        %v1504 = vrcp.pop %v1440
        %v1505 = vrcp.pop %v1441
        %v1506 = vrcp.pop %v1442
        %v1507 = vrcp.pop %v1443
        %v1508 = vrcp.pop %v1444
        %v1509 = vrcp.pop %v1445
        %v1510 = vrcp.pop %v1446
        %v1511 = vrcp.pop %v1447
        %v1512 = vrcp.pop %v1448
        %v1513 = vrcp.pop %v1449
        %v1514 = vrcp.pop %v1450
        %v1515 = vrcp.pop %v1451
        %v1516 = vrcp.pop %v1452
        %v1517 = vrcp.pop %v1453
        %v1518 = vrcp.pop %v1454
        %v1519 = vrcp.pop %v1455
        %v1520 = vrcp.pop %v1456
        %v1521 = vrcp.pop %v1457
        %v1522 = vrcp.pop %v1458
        %v1523 = vrcp.pop %v1459
        %v1524 = vrcp.pop %v1460
        %v1525 = vrcp.pop %v1461
        %v1526 = vrcp.pop %v1462
        %v1527 = vrcp.pop %v1463
        %v1528 = vrcp.pop %v1464
        %v1529 = vrcp.pop %v1465
        %v1530 = vrcp.pop %v1466
        %v1531 = vrcp.pop %v1467
        %v1532 = vrcp.pop %v1468
        %v1533 = vrcp.pop %v1469
        %v1534 = vrcp.pop %v1470
        %v1535 = vrcp.pop %v1471
        %v1536 = vrcp.pop %v1472
        %v1537 = vrcp.pop %v1473
        %v1538 = vrcp.pop %v1474
        %v1539 = vmul.f32 %v1155, %v1475
        %v1540 = vmul.f32 %v1156, %v1476
        %v1541 = vmul.f32 %v1157, %v1477
        %v1542 = vmul.f32 %v1158, %v1478
        %v1543 = vmul.f32 %v1159, %v1479
        %v1544 = vmul.f32 %v1160, %v1480
        %v1545 = vmul.f32 %v1161, %v1481
        %v1546 = vmul.f32 %v1162, %v1482
        %v1547 = vmul.f32 %v1163, %v1483
        %v1548 = vmul.f32 %v1164, %v1484
        %v1549 = vmul.f32 %v1165, %v1485
        %v1550 = vmul.f32 %v1166, %v1486
        %v1551 = vmul.f32 %v1167, %v1487
        %v1552 = vmul.f32 %v1168, %v1488
        %v1553 = vmul.f32 %v1169, %v1489
        %v1554 = vmul.f32 %v1170, %v1490
        %v1555 = vmul.f32 %v1171, %v1491
        %v1556 = vmul.f32 %v1172, %v1492
        %v1557 = vmul.f32 %v1173, %v1493
        %v1558 = vmul.f32 %v1174, %v1494
        %v1559 = vmul.f32 %v1175, %v1495
        %v1560 = vmul.f32 %v1176, %v1496
        %v1561 = vmul.f32 %v1177, %v1497
        %v1562 = vmul.f32 %v1178, %v1498
        %v1563 = vmul.f32 %v1179, %v1499
        %v1564 = vmul.f32 %v1180, %v1500
        %v1565 = vmul.f32 %v1181, %v1501
        %v1566 = vmul.f32 %v1182, %v1502
        %v1567 = vmul.f32 %v1183, %v1503
        %v1568 = vmul.f32 %v1184, %v1504
        %v1569 = vmul.f32 %v1185, %v1505
        %v1570 = vmul.f32 %v1186, %v1506
        %v1571 = vmul.f32 %v1187, %v1507
        %v1572 = vmul.f32 %v1188, %v1508
        %v1573 = vmul.f32 %v1189, %v1509
        %v1574 = vmul.f32 %v1190, %v1510
        %v1575 = vmul.f32 %v1191, %v1511
        %v1576 = vmul.f32 %v1192, %v1512
        %v1577 = vmul.f32 %v1193, %v1513
        %v1578 = vmul.f32 %v1194, %v1514
        %v1579 = vmul.f32 %v1195, %v1515
        %v1580 = vmul.f32 %v1196, %v1516
        %v1581 = vmul.f32 %v1197, %v1517
        %v1582 = vmul.f32 %v1198, %v1518
        %v1583 = vmul.f32 %v1199, %v1519
        %v1584 = vmul.f32 %v1200, %v1520
        %v1585 = vmul.f32 %v1201, %v1521
        %v1586 = vmul.f32 %v1202, %v1522
        %v1587 = vmul.f32 %v1203, %v1523
        %v1588 = vmul.f32 %v1204, %v1524
        %v1589 = vmul.f32 %v1205, %v1525
        %v1590 = vmul.f32 %v1206, %v1526
        %v1591 = vmul.f32 %v1207, %v1527
        %v1592 = vmul.f32 %v1208, %v1528
        %v1593 = vmul.f32 %v1209, %v1529
        %v1594 = vmul.f32 %v1210, %v1530
        %v1595 = vmul.f32 %v1211, %v1531
        %v1596 = vmul.f32 %v1212, %v1532
        %v1597 = vmul.f32 %v1213, %v1533
        %v1598 = vmul.f32 %v1214, %v1534
        %v1599 = vmul.f32 %v1215, %v1535
        %v1600 = vmul.f32 %v1216, %v1536
        %v1601 = vmul.f32 %v1217, %v1537
        %v1602 = vmul.f32 %v1218, %v1538
        %v1603 = vpack.c.bf16 %v1541, %v1539
        %v1604 = vpack.c.bf16 %v1542, %v1540
        %v1605 = vpack.c.bf16 %v1545, %v1543
        %v1606 = vpack.c.bf16 %v1546, %v1544
        %v1607 = vpack.c.bf16 %v1549, %v1547
        %v1608 = vpack.c.bf16 %v1550, %v1548
        %v1609 = vpack.c.bf16 %v1553, %v1551
        %v1610 = vpack.c.bf16 %v1554, %v1552
        %v1611 = vpack.c.bf16 %v1557, %v1555
        %v1612 = vpack.c.bf16 %v1558, %v1556
        %v1613 = vpack.c.bf16 %v1561, %v1559
        %v1614 = vpack.c.bf16 %v1562, %v1560
        %v1615 = vpack.c.bf16 %v1565, %v1563
        %v1616 = vpack.c.bf16 %v1566, %v1564
        %v1617 = vpack.c.bf16 %v1569, %v1567
        %v1618 = vpack.c.bf16 %v1570, %v1568
        %v1619 = vpack.c.bf16 %v1573, %v1571
        %v1620 = vpack.c.bf16 %v1574, %v1572
        %v1621 = vpack.c.bf16 %v1577, %v1575
        %v1622 = vpack.c.bf16 %v1578, %v1576
        %v1623 = vpack.c.bf16 %v1581, %v1579
        %v1624 = vpack.c.bf16 %v1582, %v1580
        %v1625 = vpack.c.bf16 %v1585, %v1583
        %v1626 = vpack.c.bf16 %v1586, %v1584
        %v1627 = vpack.c.bf16 %v1589, %v1587
        %v1628 = vpack.c.bf16 %v1590, %v1588
        %v1629 = vpack.c.bf16 %v1593, %v1591
        %v1630 = vpack.c.bf16 %v1594, %v1592
        %v1631 = vpack.c.bf16 %v1597, %v1595
        %v1632 = vpack.c.bf16 %v1598, %v1596
        %v1633 = vpack.c.bf16 %v1601, %v1599
        %v1634 = vpack.c.bf16 %v1602, %v1600
        %v1635 = vld [vmem:[#allocation5] sm:$0xff]
        %v1636 = vld [vmem:[#allocation5 + $0x8] sm:$0xff]
        %v1637 = vld [vmem:[#allocation5 + $0x10] sm:$0xff]
        %v1638 = vld [vmem:[#allocation5 + $0x18] sm:$0xff]
        %v1639 = vld [vmem:[#allocation5 + $0x20] sm:$0xff]
        %v1640 = vld [vmem:[#allocation5 + $0x28] sm:$0xff]
        %v1641 = vld [vmem:[#allocation5 + $0x30] sm:$0xff]
        %v1642 = vld [vmem:[#allocation5 + $0x38] sm:$0xff]
        %v1643 = vld [vmem:[#allocation5 + $0x40] sm:$0xff]
        %v1644 = vld [vmem:[#allocation5 + $0x48] sm:$0xff]
        %v1645 = vld [vmem:[#allocation5 + $0x50] sm:$0xff]
        %v1646 = vld [vmem:[#allocation5 + $0x58] sm:$0xff]
        %v1647 = vld [vmem:[#allocation5 + $0x60] sm:$0xff]
        %v1648 = vld [vmem:[#allocation5 + $0x68] sm:$0xff]
        %v1649 = vld [vmem:[#allocation5 + $0x70] sm:$0xff]
        %v1650 = vld [vmem:[#allocation5 + $0x78] sm:$0xff]
        %v1651 = vld [vmem:[#allocation5 + $0x80] sm:$0xff]
        %v1652 = vld [vmem:[#allocation5 + $0x88] sm:$0xff]
        %v1653 = vld [vmem:[#allocation5 + $0x90] sm:$0xff]
        %v1654 = vld [vmem:[#allocation5 + $0x98] sm:$0xff]
        %v1655 = vld [vmem:[#allocation5 + $0xa0] sm:$0xff]
        %v1656 = vld [vmem:[#allocation5 + $0xa8] sm:$0xff]
        %v1657 = vld [vmem:[#allocation5 + $0xb0] sm:$0xff]
        %v1658 = vld [vmem:[#allocation5 + $0xb8] sm:$0xff]
        %v1659 = vld [vmem:[#allocation5 + $0xc0] sm:$0xff]
        %v1660 = vld [vmem:[#allocation5 + $0xc8] sm:$0xff]
        %v1661 = vld [vmem:[#allocation5 + $0xd0] sm:$0xff]
        %v1662 = vld [vmem:[#allocation5 + $0xd8] sm:$0xff]
        %v1663 = vld [vmem:[#allocation5 + $0xe0] sm:$0xff]
        %v1664 = vld [vmem:[#allocation5 + $0xe8] sm:$0xff]
        %v1665 = vld [vmem:[#allocation5 + $0xf0] sm:$0xff]
        %v1666 = vld [vmem:[#allocation5 + $0xf8] sm:$0xff]
        %v1667 = vld [vmem:[%s6] sm:$0x3]
        %v1669 = vlaneseq
        %v1670 = vshrl.u32 %v1669, 7
        %v1671 = vsub.s32 0, %v1670
        %v1672 = vrot.slane %v1667, %v1671
        %v1673 = vlaneseq
        %v1674 = vshrl.u32 %v1673, 7
        %v1675 = vsub.s32 1, %v1674
        %v1676 = vrot.slane %v1667, %v1675
        %v1711 = vunpack.c.l.b16 %v1635
        %v1712 = vunpack.c.h.b16 %v1635
        %v1713 = vunpack.c.l.b16 %v1636
        %v1714 = vunpack.c.h.b16 %v1636
        %v1715 = vunpack.c.l.b16 %v1637
        %v1716 = vunpack.c.h.b16 %v1637
        %v1717 = vunpack.c.l.b16 %v1638
        %v1718 = vunpack.c.h.b16 %v1638
        %v1719 = vunpack.c.l.b16 %v1639
        %v1720 = vunpack.c.h.b16 %v1639
        %v1721 = vunpack.c.l.b16 %v1640
        %v1722 = vunpack.c.h.b16 %v1640
        %v1723 = vunpack.c.l.b16 %v1641
        %v1724 = vunpack.c.h.b16 %v1641
        %v1725 = vunpack.c.l.b16 %v1642
        %v1726 = vunpack.c.h.b16 %v1642
        %v1727 = vunpack.c.l.b16 %v1643
        %v1728 = vunpack.c.h.b16 %v1643
        %v1729 = vunpack.c.l.b16 %v1644
        %v1730 = vunpack.c.h.b16 %v1644
        %v1731 = vunpack.c.l.b16 %v1645
        %v1732 = vunpack.c.h.b16 %v1645
        %v1733 = vunpack.c.l.b16 %v1646
        %v1734 = vunpack.c.h.b16 %v1646
        %v1735 = vunpack.c.l.b16 %v1647
        %v1736 = vunpack.c.h.b16 %v1647
        %v1737 = vunpack.c.l.b16 %v1648
        %v1738 = vunpack.c.h.b16 %v1648
        %v1739 = vunpack.c.l.b16 %v1649
        %v1740 = vunpack.c.h.b16 %v1649
        %v1741 = vunpack.c.l.b16 %v1650
        %v1742 = vunpack.c.h.b16 %v1650
        %v1743 = vunpack.c.l.b16 %v1651
        %v1744 = vunpack.c.h.b16 %v1651
        %v1745 = vunpack.c.l.b16 %v1652
        %v1746 = vunpack.c.h.b16 %v1652
        %v1747 = vunpack.c.l.b16 %v1653
        %v1748 = vunpack.c.h.b16 %v1653
        %v1749 = vunpack.c.l.b16 %v1654
        %v1750 = vunpack.c.h.b16 %v1654
        %v1751 = vunpack.c.l.b16 %v1655
        %v1752 = vunpack.c.h.b16 %v1655
        %v1753 = vunpack.c.l.b16 %v1656
        %v1754 = vunpack.c.h.b16 %v1656
        %v1755 = vunpack.c.l.b16 %v1657
        %v1756 = vunpack.c.h.b16 %v1657
        %v1757 = vunpack.c.l.b16 %v1658
        %v1758 = vunpack.c.h.b16 %v1658
        %v1759 = vunpack.c.l.b16 %v1659
        %v1760 = vunpack.c.h.b16 %v1659
        %v1761 = vunpack.c.l.b16 %v1660
        %v1762 = vunpack.c.h.b16 %v1660
        %v1763 = vunpack.c.l.b16 %v1661
        %v1764 = vunpack.c.h.b16 %v1661
        %v1765 = vunpack.c.l.b16 %v1662
        %v1766 = vunpack.c.h.b16 %v1662
        %v1767 = vunpack.c.l.b16 %v1663
        %v1768 = vunpack.c.h.b16 %v1663
        %v1769 = vunpack.c.l.b16 %v1664
        %v1770 = vunpack.c.h.b16 %v1664
        %v1771 = vunpack.c.l.b16 %v1665
        %v1772 = vunpack.c.h.b16 %v1665
        %v1773 = vunpack.c.l.b16 %v1666
        %v1774 = vunpack.c.h.b16 %v1666
        %v1775 = vpack.c.b16 %v1713, %v1711
        %v1776 = vpack.c.b16 %v1714, %v1712
        %v1777 = vpack.c.b16 %v1717, %v1715
        %v1778 = vpack.c.b16 %v1718, %v1716
        %v1779 = vpack.c.b16 %v1721, %v1719
        %v1780 = vpack.c.b16 %v1722, %v1720
        %v1781 = vpack.c.b16 %v1725, %v1723
        %v1782 = vpack.c.b16 %v1726, %v1724
        %v1783 = vpack.c.b16 %v1729, %v1727
        %v1784 = vpack.c.b16 %v1730, %v1728
        %v1785 = vpack.c.b16 %v1733, %v1731
        %v1786 = vpack.c.b16 %v1734, %v1732
        %v1787 = vpack.c.b16 %v1737, %v1735
        %v1788 = vpack.c.b16 %v1738, %v1736
        %v1789 = vpack.c.b16 %v1741, %v1739
        %v1790 = vpack.c.b16 %v1742, %v1740
        %v1791 = vpack.c.b16 %v1745, %v1743
        %v1792 = vpack.c.b16 %v1746, %v1744
        %v1793 = vpack.c.b16 %v1749, %v1747
        %v1794 = vpack.c.b16 %v1750, %v1748
        %v1795 = vpack.c.b16 %v1753, %v1751
        %v1796 = vpack.c.b16 %v1754, %v1752
        %v1797 = vpack.c.b16 %v1757, %v1755
        %v1798 = vpack.c.b16 %v1758, %v1756
        %v1799 = vpack.c.b16 %v1761, %v1759
        %v1800 = vpack.c.b16 %v1762, %v1760
        %v1801 = vpack.c.b16 %v1765, %v1763
        %v1802 = vpack.c.b16 %v1766, %v1764
        %v1803 = vpack.c.b16 %v1769, %v1767
        %v1804 = vpack.c.b16 %v1770, %v1768
        %v1805 = vpack.c.b16 %v1773, %v1771
        %v1806 = vpack.c.b16 %v1774, %v1772
        %1839 = vmatprep.subr.bf16.mxu0 %v1790
        %1840 = vmatpush1.bf16.msra.mxu0 %v1789
        %1841 = vmatprep.subr.bf16.mxu0 %v1788
        %1842 = vmatpush1.bf16.msra.mxu0 %v1787
        %1843 = vmatprep.subr.bf16.mxu0 %v1786
        %1844 = vmatpush1.bf16.msra.mxu0 %v1785
        %1845 = vmatprep.subr.bf16.mxu0 %v1784
        %1846 = vmatpush1.bf16.msra.mxu0 %v1783
        %1847 = vmatprep.subr.bf16.mxu0 %v1782
        %1848 = vmatpush1.bf16.msra.mxu0 %v1781
        %1849 = vmatprep.subr.bf16.mxu0 %v1780
        %1850 = vmatpush1.bf16.msra.mxu0 %v1779
        %1851 = vmatprep.subr.bf16.mxu0 %v1778
        %1852 = vmatpush1.bf16.msra.mxu0 %v1777
        %1853 = vmatprep.subr.bf16.mxu0 %v1776
        %1854 = vmatpush1.bf16.msra.mxu0 %v1775
        %1855 = vmatprep.subr.bf16.mxu0 %v1806
        %1856 = vmatpush2.bf16.msra.mxu0 %v1805
        %1857 = vmatprep.subr.bf16.mxu0 %v1804
        %1858 = vmatpush2.bf16.msra.mxu0 %v1803
        %1859 = vmatprep.subr.bf16.mxu0 %v1802
        %1860 = vmatpush2.bf16.msra.mxu0 %v1801
        %1861 = vmatprep.subr.bf16.mxu0 %v1800
        %1862 = vmatpush2.bf16.msra.mxu0 %v1799
        %1863 = vmatprep.subr.bf16.mxu0 %v1798
        %1864 = vmatpush2.bf16.msra.mxu0 %v1797
        %1865 = vmatprep.subr.bf16.mxu0 %v1796
        %1866 = vmatpush2.bf16.msra.mxu0 %v1795
        %1867 = vmatprep.subr.bf16.mxu0 %v1794
        %1868 = vmatpush2.bf16.msra.mxu0 %v1793
        %1869 = vmatprep.subr.bf16.mxu0 %v1792
        %1870 = vmatpush2.bf16.msra.mxu0 %v1791
        %1871 = vmatprep.mubr.bf16.mxu0 %v1604
        %1872 = vmatmul.mubr.bf16.gmra.mxu0 %v1603
        %v1873 = vpop.f32.mrf.mxu0
        %v1874 = vadd.f32 %v1672, %v1873
        %v1875 = vpop.f32.mrf.mxu0
        %v1876 = vadd.f32 %v1676, %v1875
        %v1877 = vpop.f32.mrf.mxu0
        %v1878 = vadd.f32 %v1672, %v1877
        %v1879 = vpop.f32.mrf.mxu0
        %v1880 = vadd.f32 %v1676, %v1879
        %1881 = vmatprep.mubr.bf16.mxu0 %v1606
        %1882 = vmatmul.mubr.bf16.gmra.mxu0 %v1605
        %v1883 = vpop.f32.mrf.mxu0
        %v1884 = vadd.f32 %v1672, %v1883
        %v1885 = vpop.f32.mrf.mxu0
        %v1886 = vadd.f32 %v1676, %v1885
        %v1887 = vpop.f32.mrf.mxu0
        %v1888 = vadd.f32 %v1672, %v1887
        %v1889 = vpop.f32.mrf.mxu0
        %v1890 = vadd.f32 %v1676, %v1889
        %1891 = vmatprep.mubr.bf16.mxu0 %v1608
        %1892 = vmatmul.mubr.bf16.gmra.mxu0 %v1607
        %v1893 = vpop.f32.mrf.mxu0
        %v1894 = vadd.f32 %v1672, %v1893
        %v1895 = vpop.f32.mrf.mxu0
        %v1896 = vadd.f32 %v1676, %v1895
        %v1897 = vpop.f32.mrf.mxu0
        %v1898 = vadd.f32 %v1672, %v1897
        %v1899 = vpop.f32.mrf.mxu0
        %v1900 = vadd.f32 %v1676, %v1899
        %1901 = vmatprep.mubr.bf16.mxu0 %v1610
        %1902 = vmatmul.mubr.bf16.gmra.mxu0 %v1609
        %v1903 = vpop.f32.mrf.mxu0
        %v1904 = vadd.f32 %v1672, %v1903
        %v1905 = vpop.f32.mrf.mxu0
        %v1906 = vadd.f32 %v1676, %v1905
        %v1907 = vpop.f32.mrf.mxu0
        %v1908 = vadd.f32 %v1672, %v1907
        %v1909 = vpop.f32.mrf.mxu0
        %v1910 = vadd.f32 %v1676, %v1909
        %1911 = vmatprep.mubr.bf16.mxu0 %v1612
        %1912 = vmatmul.mubr.bf16.gmra.mxu0 %v1611
        %v1913 = vpop.f32.mrf.mxu0
        %v1914 = vadd.f32 %v1672, %v1913
        %v1915 = vpop.f32.mrf.mxu0
        %v1916 = vadd.f32 %v1676, %v1915
        %v1917 = vpop.f32.mrf.mxu0
        %v1918 = vadd.f32 %v1672, %v1917
        %v1919 = vpop.f32.mrf.mxu0
        %v1920 = vadd.f32 %v1676, %v1919
        %1921 = vmatprep.mubr.bf16.mxu0 %v1614
        %1922 = vmatmul.mubr.bf16.gmra.mxu0 %v1613
        %v1923 = vpop.f32.mrf.mxu0
        %v1924 = vadd.f32 %v1672, %v1923
        %v1925 = vpop.f32.mrf.mxu0
        %v1926 = vadd.f32 %v1676, %v1925
        %v1927 = vpop.f32.mrf.mxu0
        %v1928 = vadd.f32 %v1672, %v1927
        %v1929 = vpop.f32.mrf.mxu0
        %v1930 = vadd.f32 %v1676, %v1929
        %1931 = vmatprep.mubr.bf16.mxu0 %v1616
        %1932 = vmatmul.mubr.bf16.gmra.mxu0 %v1615
        %v1933 = vpop.f32.mrf.mxu0
        %v1934 = vadd.f32 %v1672, %v1933
        %v1935 = vpop.f32.mrf.mxu0
        %v1936 = vadd.f32 %v1676, %v1935
        %v1937 = vpop.f32.mrf.mxu0
        %v1938 = vadd.f32 %v1672, %v1937
        %v1939 = vpop.f32.mrf.mxu0
        %v1940 = vadd.f32 %v1676, %v1939
        %1941 = vmatprep.mubr.bf16.mxu0 %v1618
        %1942 = vmatmul.mubr.bf16.gmra.mxu0 %v1617
        %v1943 = vpop.f32.mrf.mxu0
        %v1944 = vadd.f32 %v1672, %v1943
        %v1945 = vpop.f32.mrf.mxu0
        %v1946 = vadd.f32 %v1676, %v1945
        %v1947 = vpop.f32.mrf.mxu0
        %v1948 = vadd.f32 %v1672, %v1947
        %v1949 = vpop.f32.mrf.mxu0
        %v1950 = vadd.f32 %v1676, %v1949
        %1951 = vmatprep.mubr.bf16.mxu0 %v1620
        %1952 = vmatmul.mubr.bf16.gmra.mxu0 %v1619
        %v1953 = vpop.f32.mrf.mxu0
        %v1954 = vadd.f32 %v1672, %v1953
        %v1955 = vpop.f32.mrf.mxu0
        %v1956 = vadd.f32 %v1676, %v1955
        %v1957 = vpop.f32.mrf.mxu0
        %v1958 = vadd.f32 %v1672, %v1957
        %v1959 = vpop.f32.mrf.mxu0
        %v1960 = vadd.f32 %v1676, %v1959
        %1961 = vmatprep.mubr.bf16.mxu0 %v1622
        %1962 = vmatmul.mubr.bf16.gmra.mxu0 %v1621
        %v1963 = vpop.f32.mrf.mxu0
        %v1964 = vadd.f32 %v1672, %v1963
        %v1965 = vpop.f32.mrf.mxu0
        %v1966 = vadd.f32 %v1676, %v1965
        %v1967 = vpop.f32.mrf.mxu0
        %v1968 = vadd.f32 %v1672, %v1967
        %v1969 = vpop.f32.mrf.mxu0
        %v1970 = vadd.f32 %v1676, %v1969
        %1971 = vmatprep.mubr.bf16.mxu0 %v1624
        %1972 = vmatmul.mubr.bf16.gmra.mxu0 %v1623
        %v1973 = vpop.f32.mrf.mxu0
        %v1974 = vadd.f32 %v1672, %v1973
        %v1975 = vpop.f32.mrf.mxu0
        %v1976 = vadd.f32 %v1676, %v1975
        %v1977 = vpop.f32.mrf.mxu0
        %v1978 = vadd.f32 %v1672, %v1977
        %v1979 = vpop.f32.mrf.mxu0
        %v1980 = vadd.f32 %v1676, %v1979
        %1981 = vmatprep.mubr.bf16.mxu0 %v1626
        %1982 = vmatmul.mubr.bf16.gmra.mxu0 %v1625
        %v1983 = vpop.f32.mrf.mxu0
        %v1984 = vadd.f32 %v1672, %v1983
        %v1985 = vpop.f32.mrf.mxu0
        %v1986 = vadd.f32 %v1676, %v1985
        %v1987 = vpop.f32.mrf.mxu0
        %v1988 = vadd.f32 %v1672, %v1987
        %v1989 = vpop.f32.mrf.mxu0
        %v1990 = vadd.f32 %v1676, %v1989
        %1991 = vmatprep.mubr.bf16.mxu0 %v1628
        %1992 = vmatmul.mubr.bf16.gmra.mxu0 %v1627
        %v1993 = vpop.f32.mrf.mxu0
        %v1994 = vadd.f32 %v1672, %v1993
        %v1995 = vpop.f32.mrf.mxu0
        %v1996 = vadd.f32 %v1676, %v1995
        %v1997 = vpop.f32.mrf.mxu0
        %v1998 = vadd.f32 %v1672, %v1997
        %v1999 = vpop.f32.mrf.mxu0
        %v2000 = vadd.f32 %v1676, %v1999
        %2001 = vmatprep.mubr.bf16.mxu0 %v1630
        %2002 = vmatmul.mubr.bf16.gmra.mxu0 %v1629
        %v2003 = vpop.f32.mrf.mxu0
        %v2004 = vadd.f32 %v1672, %v2003
        %v2005 = vpop.f32.mrf.mxu0
        %v2006 = vadd.f32 %v1676, %v2005
        %v2007 = vpop.f32.mrf.mxu0
        %v2008 = vadd.f32 %v1672, %v2007
        %v2009 = vpop.f32.mrf.mxu0
        %v2010 = vadd.f32 %v1676, %v2009
        %2011 = vmatprep.mubr.bf16.mxu0 %v1632
        %2012 = vmatmul.mubr.bf16.gmra.mxu0 %v1631
        %v2013 = vpop.f32.mrf.mxu0
        %v2014 = vadd.f32 %v1672, %v2013
        %v2015 = vpop.f32.mrf.mxu0
        %v2016 = vadd.f32 %v1676, %v2015
        %v2017 = vpop.f32.mrf.mxu0
        %v2018 = vadd.f32 %v1672, %v2017
        %v2019 = vpop.f32.mrf.mxu0
        %v2020 = vadd.f32 %v1676, %v2019
        %2021 = vmatprep.mubr.bf16.mxu0 %v1634
        %2022 = vmatmul.mubr.bf16.gmra.mxu0 %v1633
        %v2023 = vpop.f32.mrf.mxu0
        %v2024 = vadd.f32 %v1672, %v2023
        %v2025 = vpop.f32.mrf.mxu0
        %v2026 = vadd.f32 %v1676, %v2025
        %v2027 = vpop.f32.mrf.mxu0
        %v2028 = vadd.f32 %v1672, %v2027
        %v2029 = vpop.f32.mrf.mxu0
        %v2030 = vadd.f32 %v1676, %v2029
        %2031 = vdwg.mxu0
        %v2032 = vsub.f32 0.0, %v1874
        %v2033 = vsub.f32 0.0, %v1876
        %v2034 = vsub.f32 0.0, %v1878
        %v2035 = vsub.f32 0.0, %v1880
        %v2036 = vsub.f32 0.0, %v1884
        %v2037 = vsub.f32 0.0, %v1886
        %v2038 = vsub.f32 0.0, %v1888
        %v2039 = vsub.f32 0.0, %v1890
        %v2040 = vsub.f32 0.0, %v1894
        %v2041 = vsub.f32 0.0, %v1896
        %v2042 = vsub.f32 0.0, %v1898
        %v2043 = vsub.f32 0.0, %v1900
        %v2044 = vsub.f32 0.0, %v1904
        %v2045 = vsub.f32 0.0, %v1906
        %v2046 = vsub.f32 0.0, %v1908
        %v2047 = vsub.f32 0.0, %v1910
        %v2048 = vsub.f32 0.0, %v1914
        %v2049 = vsub.f32 0.0, %v1916
        %v2050 = vsub.f32 0.0, %v1918
        %v2051 = vsub.f32 0.0, %v1920
        %v2052 = vsub.f32 0.0, %v1924
        %v2053 = vsub.f32 0.0, %v1926
        %v2054 = vsub.f32 0.0, %v1928
        %v2055 = vsub.f32 0.0, %v1930
        %v2056 = vsub.f32 0.0, %v1934
        %v2057 = vsub.f32 0.0, %v1936
        %v2058 = vsub.f32 0.0, %v1938
        %v2059 = vsub.f32 0.0, %v1940
        %v2060 = vsub.f32 0.0, %v1944
        %v2061 = vsub.f32 0.0, %v1946
        %v2062 = vsub.f32 0.0, %v1948
        %v2063 = vsub.f32 0.0, %v1950
        %v2064 = vsub.f32 0.0, %v1954
        %v2065 = vsub.f32 0.0, %v1956
        %v2066 = vsub.f32 0.0, %v1958
        %v2067 = vsub.f32 0.0, %v1960
        %v2068 = vsub.f32 0.0, %v1964
        %v2069 = vsub.f32 0.0, %v1966
        %v2070 = vsub.f32 0.0, %v1968
        %v2071 = vsub.f32 0.0, %v1970
        %v2072 = vsub.f32 0.0, %v1974
        %v2073 = vsub.f32 0.0, %v1976
        %v2074 = vsub.f32 0.0, %v1978
        %v2075 = vsub.f32 0.0, %v1980
        %v2076 = vsub.f32 0.0, %v1984
        %v2077 = vsub.f32 0.0, %v1986
        %v2078 = vsub.f32 0.0, %v1988
        %v2079 = vsub.f32 0.0, %v1990
        %v2080 = vsub.f32 0.0, %v1994
        %v2081 = vsub.f32 0.0, %v1996
        %v2082 = vsub.f32 0.0, %v1998
        %v2083 = vsub.f32 0.0, %v2000
        %v2084 = vsub.f32 0.0, %v2004
        %v2085 = vsub.f32 0.0, %v2006
        %v2086 = vsub.f32 0.0, %v2008
        %v2087 = vsub.f32 0.0, %v2010
        %v2088 = vsub.f32 0.0, %v2014
        %v2089 = vsub.f32 0.0, %v2016
        %v2090 = vsub.f32 0.0, %v2018
        %v2091 = vsub.f32 0.0, %v2020
        %v2092 = vsub.f32 0.0, %v2024
        %v2093 = vsub.f32 0.0, %v2026
        %v2094 = vsub.f32 0.0, %v2028
        %v2095 = vsub.f32 0.0, %v2030
        %v2096 = vmul.f32 %v2032, 1.442695
        %v2097 = vpow.pop %v2096
        %v2098 = vmul.f32 %v2033, 1.442695
        %v2099 = vpow.pop %v2098
        %v2100 = vmul.f32 %v2034, 1.442695
        %v2101 = vpow.pop %v2100
        %v2102 = vmul.f32 %v2035, 1.442695
        %v2103 = vpow.pop %v2102
        %v2104 = vmul.f32 %v2036, 1.442695
        %v2105 = vpow.pop %v2104
        %v2106 = vmul.f32 %v2037, 1.442695
        %v2107 = vpow.pop %v2106
        %v2108 = vmul.f32 %v2038, 1.442695
        %v2109 = vpow.pop %v2108
        %v2110 = vmul.f32 %v2039, 1.442695
        %v2111 = vpow.pop %v2110
        %v2112 = vmul.f32 %v2040, 1.442695
        %v2113 = vpow.pop %v2112
        %v2114 = vmul.f32 %v2041, 1.442695
        %v2115 = vpow.pop %v2114
        %v2116 = vmul.f32 %v2042, 1.442695
        %v2117 = vpow.pop %v2116
        %v2118 = vmul.f32 %v2043, 1.442695
        %v2119 = vpow.pop %v2118
        %v2120 = vmul.f32 %v2044, 1.442695
        %v2121 = vpow.pop %v2120
        %v2122 = vmul.f32 %v2045, 1.442695
        %v2123 = vpow.pop %v2122
        %v2124 = vmul.f32 %v2046, 1.442695
        %v2125 = vpow.pop %v2124
        %v2126 = vmul.f32 %v2047, 1.442695
        %v2127 = vpow.pop %v2126
        %v2128 = vmul.f32 %v2048, 1.442695
        %v2129 = vpow.pop %v2128
        %v2130 = vmul.f32 %v2049, 1.442695
        %v2131 = vpow.pop %v2130
        %v2132 = vmul.f32 %v2050, 1.442695
        %v2133 = vpow.pop %v2132
        %v2134 = vmul.f32 %v2051, 1.442695
        %v2135 = vpow.pop %v2134
        %v2136 = vmul.f32 %v2052, 1.442695
        %v2137 = vpow.pop %v2136
        %v2138 = vmul.f32 %v2053, 1.442695
        %v2139 = vpow.pop %v2138
        %v2140 = vmul.f32 %v2054, 1.442695
        %v2141 = vpow.pop %v2140
        %v2142 = vmul.f32 %v2055, 1.442695
        %v2143 = vpow.pop %v2142
        %v2144 = vmul.f32 %v2056, 1.442695
        %v2145 = vpow.pop %v2144
        %v2146 = vmul.f32 %v2057, 1.442695
        %v2147 = vpow.pop %v2146
        %v2148 = vmul.f32 %v2058, 1.442695
        %v2149 = vpow.pop %v2148
        %v2150 = vmul.f32 %v2059, 1.442695
        %v2151 = vpow.pop %v2150
        %v2152 = vmul.f32 %v2060, 1.442695
        %v2153 = vpow.pop %v2152
        %v2154 = vmul.f32 %v2061, 1.442695
        %v2155 = vpow.pop %v2154
        %v2156 = vmul.f32 %v2062, 1.442695
        %v2157 = vpow.pop %v2156
        %v2158 = vmul.f32 %v2063, 1.442695
        %v2159 = vpow.pop %v2158
        %v2160 = vmul.f32 %v2064, 1.442695
        %v2161 = vpow.pop %v2160
        %v2162 = vmul.f32 %v2065, 1.442695
        %v2163 = vpow.pop %v2162
        %v2164 = vmul.f32 %v2066, 1.442695
        %v2165 = vpow.pop %v2164
        %v2166 = vmul.f32 %v2067, 1.442695
        %v2167 = vpow.pop %v2166
        %v2168 = vmul.f32 %v2068, 1.442695
        %v2169 = vpow.pop %v2168
        %v2170 = vmul.f32 %v2069, 1.442695
        %v2171 = vpow.pop %v2170
        %v2172 = vmul.f32 %v2070, 1.442695
        %v2173 = vpow.pop %v2172
        %v2174 = vmul.f32 %v2071, 1.442695
        %v2175 = vpow.pop %v2174
        %v2176 = vmul.f32 %v2072, 1.442695
        %v2177 = vpow.pop %v2176
        %v2178 = vmul.f32 %v2073, 1.442695
        %v2179 = vpow.pop %v2178
        %v2180 = vmul.f32 %v2074, 1.442695
        %v2181 = vpow.pop %v2180
        %v2182 = vmul.f32 %v2075, 1.442695
        %v2183 = vpow.pop %v2182
        %v2184 = vmul.f32 %v2076, 1.442695
        %v2185 = vpow.pop %v2184
        %v2186 = vmul.f32 %v2077, 1.442695
        %v2187 = vpow.pop %v2186
        %v2188 = vmul.f32 %v2078, 1.442695
        %v2189 = vpow.pop %v2188
        %v2190 = vmul.f32 %v2079, 1.442695
        %v2191 = vpow.pop %v2190
        %v2192 = vmul.f32 %v2080, 1.442695
        %v2193 = vpow.pop %v2192
        %v2194 = vmul.f32 %v2081, 1.442695
        %v2195 = vpow.pop %v2194
        %v2196 = vmul.f32 %v2082, 1.442695
        %v2197 = vpow.pop %v2196
        %v2198 = vmul.f32 %v2083, 1.442695
        %v2199 = vpow.pop %v2198
        %v2200 = vmul.f32 %v2084, 1.442695
        %v2201 = vpow.pop %v2200
        %v2202 = vmul.f32 %v2085, 1.442695
        %v2203 = vpow.pop %v2202
        %v2204 = vmul.f32 %v2086, 1.442695
        %v2205 = vpow.pop %v2204
        %v2206 = vmul.f32 %v2087, 1.442695
        %v2207 = vpow.pop %v2206
        %v2208 = vmul.f32 %v2088, 1.442695
        %v2209 = vpow.pop %v2208
        %v2210 = vmul.f32 %v2089, 1.442695
        %v2211 = vpow.pop %v2210
        %v2212 = vmul.f32 %v2090, 1.442695
        %v2213 = vpow.pop %v2212
        %v2214 = vmul.f32 %v2091, 1.442695
        %v2215 = vpow.pop %v2214
        %v2216 = vmul.f32 %v2092, 1.442695
        %v2217 = vpow.pop %v2216
        %v2218 = vmul.f32 %v2093, 1.442695
        %v2219 = vpow.pop %v2218
        %v2220 = vmul.f32 %v2094, 1.442695
        %v2221 = vpow.pop %v2220
        %v2222 = vmul.f32 %v2095, 1.442695
        %v2223 = vpow.pop %v2222
        %v2224 = vadd.f32 %v2097, 1.0
        %v2225 = vadd.f32 %v2099, 1.0
        %v2226 = vadd.f32 %v2101, 1.0
        %v2227 = vadd.f32 %v2103, 1.0
        %v2228 = vadd.f32 %v2105, 1.0
        %v2229 = vadd.f32 %v2107, 1.0
        %v2230 = vadd.f32 %v2109, 1.0
        %v2231 = vadd.f32 %v2111, 1.0
        %v2232 = vadd.f32 %v2113, 1.0
        %v2233 = vadd.f32 %v2115, 1.0
        %v2234 = vadd.f32 %v2117, 1.0
        %v2235 = vadd.f32 %v2119, 1.0
        %v2236 = vadd.f32 %v2121, 1.0
        %v2237 = vadd.f32 %v2123, 1.0
        %v2238 = vadd.f32 %v2125, 1.0
        %v2239 = vadd.f32 %v2127, 1.0
        %v2240 = vadd.f32 %v2129, 1.0
        %v2241 = vadd.f32 %v2131, 1.0
        %v2242 = vadd.f32 %v2133, 1.0
        %v2243 = vadd.f32 %v2135, 1.0
        %v2244 = vadd.f32 %v2137, 1.0
        %v2245 = vadd.f32 %v2139, 1.0
        %v2246 = vadd.f32 %v2141, 1.0
        %v2247 = vadd.f32 %v2143, 1.0
        %v2248 = vadd.f32 %v2145, 1.0
        %v2249 = vadd.f32 %v2147, 1.0
        %v2250 = vadd.f32 %v2149, 1.0
        %v2251 = vadd.f32 %v2151, 1.0
        %v2252 = vadd.f32 %v2153, 1.0
        %v2253 = vadd.f32 %v2155, 1.0
        %v2254 = vadd.f32 %v2157, 1.0
        %v2255 = vadd.f32 %v2159, 1.0
        %v2256 = vadd.f32 %v2161, 1.0
        %v2257 = vadd.f32 %v2163, 1.0
        %v2258 = vadd.f32 %v2165, 1.0
        %v2259 = vadd.f32 %v2167, 1.0
        %v2260 = vadd.f32 %v2169, 1.0
        %v2261 = vadd.f32 %v2171, 1.0
        %v2262 = vadd.f32 %v2173, 1.0
        %v2263 = vadd.f32 %v2175, 1.0
        %v2264 = vadd.f32 %v2177, 1.0
        %v2265 = vadd.f32 %v2179, 1.0
        %v2266 = vadd.f32 %v2181, 1.0
        %v2267 = vadd.f32 %v2183, 1.0
        %v2268 = vadd.f32 %v2185, 1.0
        %v2269 = vadd.f32 %v2187, 1.0
        %v2270 = vadd.f32 %v2189, 1.0
        %v2271 = vadd.f32 %v2191, 1.0
        %v2272 = vadd.f32 %v2193, 1.0
        %v2273 = vadd.f32 %v2195, 1.0
        %v2274 = vadd.f32 %v2197, 1.0
        %v2275 = vadd.f32 %v2199, 1.0
        %v2276 = vadd.f32 %v2201, 1.0
        %v2277 = vadd.f32 %v2203, 1.0
        %v2278 = vadd.f32 %v2205, 1.0
        %v2279 = vadd.f32 %v2207, 1.0
        %v2280 = vadd.f32 %v2209, 1.0
        %v2281 = vadd.f32 %v2211, 1.0
        %v2282 = vadd.f32 %v2213, 1.0
        %v2283 = vadd.f32 %v2215, 1.0
        %v2284 = vadd.f32 %v2217, 1.0
        %v2285 = vadd.f32 %v2219, 1.0
        %v2286 = vadd.f32 %v2221, 1.0
        %v2287 = vadd.f32 %v2223, 1.0
        %v2288 = vrcp.pop %v2224
        %v2289 = vrcp.pop %v2225
        %v2290 = vrcp.pop %v2226
        %v2291 = vrcp.pop %v2227
        %v2292 = vrcp.pop %v2228
        %v2293 = vrcp.pop %v2229
        %v2294 = vrcp.pop %v2230
        %v2295 = vrcp.pop %v2231
        %v2296 = vrcp.pop %v2232
        %v2297 = vrcp.pop %v2233
        %v2298 = vrcp.pop %v2234
        %v2299 = vrcp.pop %v2235
        %v2300 = vrcp.pop %v2236
        %v2301 = vrcp.pop %v2237
        %v2302 = vrcp.pop %v2238
        %v2303 = vrcp.pop %v2239
        %v2304 = vrcp.pop %v2240
        %v2305 = vrcp.pop %v2241
        %v2306 = vrcp.pop %v2242
        %v2307 = vrcp.pop %v2243
        %v2308 = vrcp.pop %v2244
        %v2309 = vrcp.pop %v2245
        %v2310 = vrcp.pop %v2246
        %v2311 = vrcp.pop %v2247
        %v2312 = vrcp.pop %v2248
        %v2313 = vrcp.pop %v2249
        %v2314 = vrcp.pop %v2250
        %v2315 = vrcp.pop %v2251
        %v2316 = vrcp.pop %v2252
        %v2317 = vrcp.pop %v2253
        %v2318 = vrcp.pop %v2254
        %v2319 = vrcp.pop %v2255
        %v2320 = vrcp.pop %v2256
        %v2321 = vrcp.pop %v2257
        %v2322 = vrcp.pop %v2258
        %v2323 = vrcp.pop %v2259
        %v2324 = vrcp.pop %v2260
        %v2325 = vrcp.pop %v2261
        %v2326 = vrcp.pop %v2262
        %v2327 = vrcp.pop %v2263
        %v2328 = vrcp.pop %v2264
        %v2329 = vrcp.pop %v2265
        %v2330 = vrcp.pop %v2266
        %v2331 = vrcp.pop %v2267
        %v2332 = vrcp.pop %v2268
        %v2333 = vrcp.pop %v2269
        %v2334 = vrcp.pop %v2270
        %v2335 = vrcp.pop %v2271
        %v2336 = vrcp.pop %v2272
        %v2337 = vrcp.pop %v2273
        %v2338 = vrcp.pop %v2274
        %v2339 = vrcp.pop %v2275
        %v2340 = vrcp.pop %v2276
        %v2341 = vrcp.pop %v2277
        %v2342 = vrcp.pop %v2278
        %v2343 = vrcp.pop %v2279
        %v2344 = vrcp.pop %v2280
        %v2345 = vrcp.pop %v2281
        %v2346 = vrcp.pop %v2282
        %v2347 = vrcp.pop %v2283
        %v2348 = vrcp.pop %v2284
        %v2349 = vrcp.pop %v2285
        %v2350 = vrcp.pop %v2286
        %v2351 = vrcp.pop %v2287
        %v2352 = vmul.f32 %v1874, %v2288
        %v2353 = vmul.f32 %v1876, %v2289
        %v2354 = vmul.f32 %v1878, %v2290
        %v2355 = vmul.f32 %v1880, %v2291
        %v2356 = vmul.f32 %v1884, %v2292
        %v2357 = vmul.f32 %v1886, %v2293
        %v2358 = vmul.f32 %v1888, %v2294
        %v2359 = vmul.f32 %v1890, %v2295
        %v2360 = vmul.f32 %v1894, %v2296
        %v2361 = vmul.f32 %v1896, %v2297
        %v2362 = vmul.f32 %v1898, %v2298
        %v2363 = vmul.f32 %v1900, %v2299
        %v2364 = vmul.f32 %v1904, %v2300
        %v2365 = vmul.f32 %v1906, %v2301
        %v2366 = vmul.f32 %v1908, %v2302
        %v2367 = vmul.f32 %v1910, %v2303
        %v2368 = vmul.f32 %v1914, %v2304
        %v2369 = vmul.f32 %v1916, %v2305
        %v2370 = vmul.f32 %v1918, %v2306
        %v2371 = vmul.f32 %v1920, %v2307
        %v2372 = vmul.f32 %v1924, %v2308
        %v2373 = vmul.f32 %v1926, %v2309
        %v2374 = vmul.f32 %v1928, %v2310
        %v2375 = vmul.f32 %v1930, %v2311
        %v2376 = vmul.f32 %v1934, %v2312
        %v2377 = vmul.f32 %v1936, %v2313
        %v2378 = vmul.f32 %v1938, %v2314
        %v2379 = vmul.f32 %v1940, %v2315
        %v2380 = vmul.f32 %v1944, %v2316
        %v2381 = vmul.f32 %v1946, %v2317
        %v2382 = vmul.f32 %v1948, %v2318
        %v2383 = vmul.f32 %v1950, %v2319
        %v2384 = vmul.f32 %v1954, %v2320
        %v2385 = vmul.f32 %v1956, %v2321
        %v2386 = vmul.f32 %v1958, %v2322
        %v2387 = vmul.f32 %v1960, %v2323
        %v2388 = vmul.f32 %v1964, %v2324
        %v2389 = vmul.f32 %v1966, %v2325
        %v2390 = vmul.f32 %v1968, %v2326
        %v2391 = vmul.f32 %v1970, %v2327
        %v2392 = vmul.f32 %v1974, %v2328
        %v2393 = vmul.f32 %v1976, %v2329
        %v2394 = vmul.f32 %v1978, %v2330
        %v2395 = vmul.f32 %v1980, %v2331
        %v2396 = vmul.f32 %v1984, %v2332
        %v2397 = vmul.f32 %v1986, %v2333
        %v2398 = vmul.f32 %v1988, %v2334
        %v2399 = vmul.f32 %v1990, %v2335
        %v2400 = vmul.f32 %v1994, %v2336
        %v2401 = vmul.f32 %v1996, %v2337
        %v2402 = vmul.f32 %v1998, %v2338
        %v2403 = vmul.f32 %v2000, %v2339
        %v2404 = vmul.f32 %v2004, %v2340
        %v2405 = vmul.f32 %v2006, %v2341
        %v2406 = vmul.f32 %v2008, %v2342
        %v2407 = vmul.f32 %v2010, %v2343
        %v2408 = vmul.f32 %v2014, %v2344
        %v2409 = vmul.f32 %v2016, %v2345
        %v2410 = vmul.f32 %v2018, %v2346
        %v2411 = vmul.f32 %v2020, %v2347
        %v2412 = vmul.f32 %v2024, %v2348
        %v2413 = vmul.f32 %v2026, %v2349
        %v2414 = vmul.f32 %v2028, %v2350
        %v2415 = vmul.f32 %v2030, %v2351
        %v2416 = vpack.c.bf16 %v2354, %v2352
        %v2417 = vpack.c.bf16 %v2355, %v2353
        %v2418 = vpack.c.bf16 %v2358, %v2356
        %v2419 = vpack.c.bf16 %v2359, %v2357
        %v2420 = vpack.c.bf16 %v2362, %v2360
        %v2421 = vpack.c.bf16 %v2363, %v2361
        %v2422 = vpack.c.bf16 %v2366, %v2364
        %v2423 = vpack.c.bf16 %v2367, %v2365
        %v2424 = vpack.c.bf16 %v2370, %v2368
        %v2425 = vpack.c.bf16 %v2371, %v2369
        %v2426 = vpack.c.bf16 %v2374, %v2372
        %v2427 = vpack.c.bf16 %v2375, %v2373
        %v2428 = vpack.c.bf16 %v2378, %v2376
        %v2429 = vpack.c.bf16 %v2379, %v2377
        %v2430 = vpack.c.bf16 %v2382, %v2380
        %v2431 = vpack.c.bf16 %v2383, %v2381
        %v2432 = vpack.c.bf16 %v2386, %v2384
        %v2433 = vpack.c.bf16 %v2387, %v2385
        %v2434 = vpack.c.bf16 %v2390, %v2388
        %v2435 = vpack.c.bf16 %v2391, %v2389
        %v2436 = vpack.c.bf16 %v2394, %v2392
        %v2437 = vpack.c.bf16 %v2395, %v2393
        %v2438 = vpack.c.bf16 %v2398, %v2396
        %v2439 = vpack.c.bf16 %v2399, %v2397
        %v2440 = vpack.c.bf16 %v2402, %v2400
        %v2441 = vpack.c.bf16 %v2403, %v2401
        %v2442 = vpack.c.bf16 %v2406, %v2404
        %v2443 = vpack.c.bf16 %v2407, %v2405
        %v2444 = vpack.c.bf16 %v2410, %v2408
        %v2445 = vpack.c.bf16 %v2411, %v2409
        %v2446 = vpack.c.bf16 %v2414, %v2412
        %v2447 = vpack.c.bf16 %v2415, %v2413
        %v2448 = vld [vmem:[#allocation7] sm:$0xff]
        %v2449 = vld [vmem:[#allocation7 + $0x8] sm:$0xff]
        %v2450 = vld [vmem:[#allocation7 + $0x10] sm:$0xff]
        %v2451 = vld [vmem:[#allocation7 + $0x18] sm:$0xff]
        %v2452 = vld [vmem:[#allocation7 + $0x20] sm:$0xff]
        %v2453 = vld [vmem:[#allocation7 + $0x28] sm:$0xff]
        %v2454 = vld [vmem:[#allocation7 + $0x30] sm:$0xff]
        %v2455 = vld [vmem:[#allocation7 + $0x38] sm:$0xff]
        %v2456 = vld [vmem:[#allocation7 + $0x40] sm:$0xff]
        %v2457 = vld [vmem:[#allocation7 + $0x48] sm:$0xff]
        %v2458 = vld [vmem:[#allocation7 + $0x50] sm:$0xff]
        %v2459 = vld [vmem:[#allocation7 + $0x58] sm:$0xff]
        %v2460 = vld [vmem:[#allocation7 + $0x60] sm:$0xff]
        %v2461 = vld [vmem:[#allocation7 + $0x68] sm:$0xff]
        %v2462 = vld [vmem:[#allocation7 + $0x70] sm:$0xff]
        %v2463 = vld [vmem:[#allocation7 + $0x78] sm:$0xff]
        %v2464 = vld [vmem:[#allocation7 + $0x80] sm:$0xff]
        %v2465 = vld [vmem:[#allocation7 + $0x88] sm:$0xff]
        %v2466 = vld [vmem:[#allocation7 + $0x90] sm:$0xff]
        %v2467 = vld [vmem:[#allocation7 + $0x98] sm:$0xff]
        %v2468 = vld [vmem:[#allocation7 + $0xa0] sm:$0xff]
        %v2469 = vld [vmem:[#allocation7 + $0xa8] sm:$0xff]
        %v2470 = vld [vmem:[#allocation7 + $0xb0] sm:$0xff]
        %v2471 = vld [vmem:[#allocation7 + $0xb8] sm:$0xff]
        %v2472 = vld [vmem:[#allocation7 + $0xc0] sm:$0xff]
        %v2473 = vld [vmem:[#allocation7 + $0xc8] sm:$0xff]
        %v2474 = vld [vmem:[#allocation7 + $0xd0] sm:$0xff]
        %v2475 = vld [vmem:[#allocation7 + $0xd8] sm:$0xff]
        %v2476 = vld [vmem:[#allocation7 + $0xe0] sm:$0xff]
        %v2477 = vld [vmem:[#allocation7 + $0xe8] sm:$0xff]
        %v2478 = vld [vmem:[#allocation7 + $0xf0] sm:$0xff]
        %v2479 = vld [vmem:[#allocation7 + $0xf8] sm:$0xff]
        %v2480 = vld [vmem:[%s8] sm:$0x3]
        %v2482 = vlaneseq
        %v2483 = vshrl.u32 %v2482, 7
        %v2484 = vsub.s32 0, %v2483
        %v2485 = vrot.slane %v2480, %v2484
        %v2486 = vlaneseq
        %v2487 = vshrl.u32 %v2486, 7
        %v2488 = vsub.s32 1, %v2487
        %v2489 = vrot.slane %v2480, %v2488
        %v2524 = vunpack.c.l.b16 %v2448
        %v2525 = vunpack.c.h.b16 %v2448
        %v2526 = vunpack.c.l.b16 %v2449
        %v2527 = vunpack.c.h.b16 %v2449
        %v2528 = vunpack.c.l.b16 %v2450
        %v2529 = vunpack.c.h.b16 %v2450
        %v2530 = vunpack.c.l.b16 %v2451
        %v2531 = vunpack.c.h.b16 %v2451
        %v2532 = vunpack.c.l.b16 %v2452
        %v2533 = vunpack.c.h.b16 %v2452
        %v2534 = vunpack.c.l.b16 %v2453
        %v2535 = vunpack.c.h.b16 %v2453
        %v2536 = vunpack.c.l.b16 %v2454
        %v2537 = vunpack.c.h.b16 %v2454
        %v2538 = vunpack.c.l.b16 %v2455
        %v2539 = vunpack.c.h.b16 %v2455
        %v2540 = vunpack.c.l.b16 %v2456
        %v2541 = vunpack.c.h.b16 %v2456
        %v2542 = vunpack.c.l.b16 %v2457
        %v2543 = vunpack.c.h.b16 %v2457
        %v2544 = vunpack.c.l.b16 %v2458
        %v2545 = vunpack.c.h.b16 %v2458
        %v2546 = vunpack.c.l.b16 %v2459
        %v2547 = vunpack.c.h.b16 %v2459
        %v2548 = vunpack.c.l.b16 %v2460
        %v2549 = vunpack.c.h.b16 %v2460
        %v2550 = vunpack.c.l.b16 %v2461
        %v2551 = vunpack.c.h.b16 %v2461
        %v2552 = vunpack.c.l.b16 %v2462
        %v2553 = vunpack.c.h.b16 %v2462
        %v2554 = vunpack.c.l.b16 %v2463
        %v2555 = vunpack.c.h.b16 %v2463
        %v2556 = vunpack.c.l.b16 %v2464
        %v2557 = vunpack.c.h.b16 %v2464
        %v2558 = vunpack.c.l.b16 %v2465
        %v2559 = vunpack.c.h.b16 %v2465
        %v2560 = vunpack.c.l.b16 %v2466
        %v2561 = vunpack.c.h.b16 %v2466
        %v2562 = vunpack.c.l.b16 %v2467
        %v2563 = vunpack.c.h.b16 %v2467
        %v2564 = vunpack.c.l.b16 %v2468
        %v2565 = vunpack.c.h.b16 %v2468
        %v2566 = vunpack.c.l.b16 %v2469
        %v2567 = vunpack.c.h.b16 %v2469
        %v2568 = vunpack.c.l.b16 %v2470
        %v2569 = vunpack.c.h.b16 %v2470
        %v2570 = vunpack.c.l.b16 %v2471
        %v2571 = vunpack.c.h.b16 %v2471
        %v2572 = vunpack.c.l.b16 %v2472
        %v2573 = vunpack.c.h.b16 %v2472
        %v2574 = vunpack.c.l.b16 %v2473
        %v2575 = vunpack.c.h.b16 %v2473
        %v2576 = vunpack.c.l.b16 %v2474
        %v2577 = vunpack.c.h.b16 %v2474
        %v2578 = vunpack.c.l.b16 %v2475
        %v2579 = vunpack.c.h.b16 %v2475
        %v2580 = vunpack.c.l.b16 %v2476
        %v2581 = vunpack.c.h.b16 %v2476
        %v2582 = vunpack.c.l.b16 %v2477
        %v2583 = vunpack.c.h.b16 %v2477
        %v2584 = vunpack.c.l.b16 %v2478
        %v2585 = vunpack.c.h.b16 %v2478
        %v2586 = vunpack.c.l.b16 %v2479
        %v2587 = vunpack.c.h.b16 %v2479
        %v2588 = vpack.c.b16 %v2526, %v2524
        %v2589 = vpack.c.b16 %v2527, %v2525
        %v2590 = vpack.c.b16 %v2530, %v2528
        %v2591 = vpack.c.b16 %v2531, %v2529
        %v2592 = vpack.c.b16 %v2534, %v2532
        %v2593 = vpack.c.b16 %v2535, %v2533
        %v2594 = vpack.c.b16 %v2538, %v2536
        %v2595 = vpack.c.b16 %v2539, %v2537
        %v2596 = vpack.c.b16 %v2542, %v2540
        %v2597 = vpack.c.b16 %v2543, %v2541
        %v2598 = vpack.c.b16 %v2546, %v2544
        %v2599 = vpack.c.b16 %v2547, %v2545
        %v2600 = vpack.c.b16 %v2550, %v2548
        %v2601 = vpack.c.b16 %v2551, %v2549
        %v2602 = vpack.c.b16 %v2554, %v2552
        %v2603 = vpack.c.b16 %v2555, %v2553
        %v2604 = vpack.c.b16 %v2558, %v2556
        %v2605 = vpack.c.b16 %v2559, %v2557
        %v2606 = vpack.c.b16 %v2562, %v2560
        %v2607 = vpack.c.b16 %v2563, %v2561
        %v2608 = vpack.c.b16 %v2566, %v2564
        %v2609 = vpack.c.b16 %v2567, %v2565
        %v2610 = vpack.c.b16 %v2570, %v2568
        %v2611 = vpack.c.b16 %v2571, %v2569
        %v2612 = vpack.c.b16 %v2574, %v2572
        %v2613 = vpack.c.b16 %v2575, %v2573
        %v2614 = vpack.c.b16 %v2578, %v2576
        %v2615 = vpack.c.b16 %v2579, %v2577
        %v2616 = vpack.c.b16 %v2582, %v2580
        %v2617 = vpack.c.b16 %v2583, %v2581
        %v2618 = vpack.c.b16 %v2586, %v2584
        %v2619 = vpack.c.b16 %v2587, %v2585
        %2652 = vmatprep.subr.bf16.mxu0 %v2603
        %2653 = vmatpush1.bf16.msra.mxu0 %v2602
        %2654 = vmatprep.subr.bf16.mxu0 %v2601
        %2655 = vmatpush1.bf16.msra.mxu0 %v2600
        %2656 = vmatprep.subr.bf16.mxu0 %v2599
        %2657 = vmatpush1.bf16.msra.mxu0 %v2598
        %2658 = vmatprep.subr.bf16.mxu0 %v2597
        %2659 = vmatpush1.bf16.msra.mxu0 %v2596
        %2660 = vmatprep.subr.bf16.mxu0 %v2595
        %2661 = vmatpush1.bf16.msra.mxu0 %v2594
        %2662 = vmatprep.subr.bf16.mxu0 %v2593
        %2663 = vmatpush1.bf16.msra.mxu0 %v2592
        %2664 = vmatprep.subr.bf16.mxu0 %v2591
        %2665 = vmatpush1.bf16.msra.mxu0 %v2590
        %2666 = vmatprep.subr.bf16.mxu0 %v2589
        %2667 = vmatpush1.bf16.msra.mxu0 %v2588
        %2668 = vmatprep.subr.bf16.mxu0 %v2619
        %2669 = vmatpush2.bf16.msra.mxu0 %v2618
        %2670 = vmatprep.subr.bf16.mxu0 %v2617
        %2671 = vmatpush2.bf16.msra.mxu0 %v2616
        %2672 = vmatprep.subr.bf16.mxu0 %v2615
        %2673 = vmatpush2.bf16.msra.mxu0 %v2614
        %2674 = vmatprep.subr.bf16.mxu0 %v2613
        %2675 = vmatpush2.bf16.msra.mxu0 %v2612
        %2676 = vmatprep.subr.bf16.mxu0 %v2611
        %2677 = vmatpush2.bf16.msra.mxu0 %v2610
        %2678 = vmatprep.subr.bf16.mxu0 %v2609
        %2679 = vmatpush2.bf16.msra.mxu0 %v2608
        %2680 = vmatprep.subr.bf16.mxu0 %v2607
        %2681 = vmatpush2.bf16.msra.mxu0 %v2606
        %2682 = vmatprep.subr.bf16.mxu0 %v2605
        %2683 = vmatpush2.bf16.msra.mxu0 %v2604
        %2684 = vmatprep.mubr.bf16.mxu0 %v2417
        %2685 = vmatmul.mubr.bf16.gmra.mxu0 %v2416
        %v2686 = vpop.f32.mrf.mxu0
        %v2687 = vadd.f32 %v2485, %v2686
        %v2688 = vpop.f32.mrf.mxu0
        %v2689 = vadd.f32 %v2489, %v2688
        %v2690 = vpop.f32.mrf.mxu0
        %v2691 = vadd.f32 %v2485, %v2690
        %v2692 = vpop.f32.mrf.mxu0
        %v2693 = vadd.f32 %v2489, %v2692
        %2694 = vmatprep.mubr.bf16.mxu0 %v2419
        %2695 = vmatmul.mubr.bf16.gmra.mxu0 %v2418
        %v2696 = vpop.f32.mrf.mxu0
        %v2697 = vadd.f32 %v2485, %v2696
        %v2698 = vpop.f32.mrf.mxu0
        %v2699 = vadd.f32 %v2489, %v2698
        %v2700 = vpop.f32.mrf.mxu0
        %v2701 = vadd.f32 %v2485, %v2700
        %v2702 = vpop.f32.mrf.mxu0
        %v2703 = vadd.f32 %v2489, %v2702
        %2704 = vmatprep.mubr.bf16.mxu0 %v2421
        %2705 = vmatmul.mubr.bf16.gmra.mxu0 %v2420
        %v2706 = vpop.f32.mrf.mxu0
        %v2707 = vadd.f32 %v2485, %v2706
        %v2708 = vpop.f32.mrf.mxu0
        %v2709 = vadd.f32 %v2489, %v2708
        %v2710 = vpop.f32.mrf.mxu0
        %v2711 = vadd.f32 %v2485, %v2710
        %v2712 = vpop.f32.mrf.mxu0
        %v2713 = vadd.f32 %v2489, %v2712
        %2714 = vmatprep.mubr.bf16.mxu0 %v2423
        %2715 = vmatmul.mubr.bf16.gmra.mxu0 %v2422
        %v2716 = vpop.f32.mrf.mxu0
        %v2717 = vadd.f32 %v2485, %v2716
        %v2718 = vpop.f32.mrf.mxu0
        %v2719 = vadd.f32 %v2489, %v2718
        %v2720 = vpop.f32.mrf.mxu0
        %v2721 = vadd.f32 %v2485, %v2720
        %v2722 = vpop.f32.mrf.mxu0
        %v2723 = vadd.f32 %v2489, %v2722
        %2724 = vmatprep.mubr.bf16.mxu0 %v2425
        %2725 = vmatmul.mubr.bf16.gmra.mxu0 %v2424
        %v2726 = vpop.f32.mrf.mxu0
        %v2727 = vadd.f32 %v2485, %v2726
        %v2728 = vpop.f32.mrf.mxu0
        %v2729 = vadd.f32 %v2489, %v2728
        %v2730 = vpop.f32.mrf.mxu0
        %v2731 = vadd.f32 %v2485, %v2730
        %v2732 = vpop.f32.mrf.mxu0
        %v2733 = vadd.f32 %v2489, %v2732
        %2734 = vmatprep.mubr.bf16.mxu0 %v2427
        %2735 = vmatmul.mubr.bf16.gmra.mxu0 %v2426
        %v2736 = vpop.f32.mrf.mxu0
        %v2737 = vadd.f32 %v2485, %v2736
        %v2738 = vpop.f32.mrf.mxu0
        %v2739 = vadd.f32 %v2489, %v2738
        %v2740 = vpop.f32.mrf.mxu0
        %v2741 = vadd.f32 %v2485, %v2740
        %v2742 = vpop.f32.mrf.mxu0
        %v2743 = vadd.f32 %v2489, %v2742
        %2744 = vmatprep.mubr.bf16.mxu0 %v2429
        %2745 = vmatmul.mubr.bf16.gmra.mxu0 %v2428
        %v2746 = vpop.f32.mrf.mxu0
        %v2747 = vadd.f32 %v2485, %v2746
        %v2748 = vpop.f32.mrf.mxu0
        %v2749 = vadd.f32 %v2489, %v2748
        %v2750 = vpop.f32.mrf.mxu0
        %v2751 = vadd.f32 %v2485, %v2750
        %v2752 = vpop.f32.mrf.mxu0
        %v2753 = vadd.f32 %v2489, %v2752
        %2754 = vmatprep.mubr.bf16.mxu0 %v2431
        %2755 = vmatmul.mubr.bf16.gmra.mxu0 %v2430
        %v2756 = vpop.f32.mrf.mxu0
        %v2757 = vadd.f32 %v2485, %v2756
        %v2758 = vpop.f32.mrf.mxu0
        %v2759 = vadd.f32 %v2489, %v2758
        %v2760 = vpop.f32.mrf.mxu0
        %v2761 = vadd.f32 %v2485, %v2760
        %v2762 = vpop.f32.mrf.mxu0
        %v2763 = vadd.f32 %v2489, %v2762
        %2764 = vmatprep.mubr.bf16.mxu0 %v2433
        %2765 = vmatmul.mubr.bf16.gmra.mxu0 %v2432
        %v2766 = vpop.f32.mrf.mxu0
        %v2767 = vadd.f32 %v2485, %v2766
        %v2768 = vpop.f32.mrf.mxu0
        %v2769 = vadd.f32 %v2489, %v2768
        %v2770 = vpop.f32.mrf.mxu0
        %v2771 = vadd.f32 %v2485, %v2770
        %v2772 = vpop.f32.mrf.mxu0
        %v2773 = vadd.f32 %v2489, %v2772
        %2774 = vmatprep.mubr.bf16.mxu0 %v2435
        %2775 = vmatmul.mubr.bf16.gmra.mxu0 %v2434
        %v2776 = vpop.f32.mrf.mxu0
        %v2777 = vadd.f32 %v2485, %v2776
        %v2778 = vpop.f32.mrf.mxu0
        %v2779 = vadd.f32 %v2489, %v2778
        %v2780 = vpop.f32.mrf.mxu0
        %v2781 = vadd.f32 %v2485, %v2780
        %v2782 = vpop.f32.mrf.mxu0
        %v2783 = vadd.f32 %v2489, %v2782
        %2784 = vmatprep.mubr.bf16.mxu0 %v2437
        %2785 = vmatmul.mubr.bf16.gmra.mxu0 %v2436
        %v2786 = vpop.f32.mrf.mxu0
        %v2787 = vadd.f32 %v2485, %v2786
        %v2788 = vpop.f32.mrf.mxu0
        %v2789 = vadd.f32 %v2489, %v2788
        %v2790 = vpop.f32.mrf.mxu0
        %v2791 = vadd.f32 %v2485, %v2790
        %v2792 = vpop.f32.mrf.mxu0
        %v2793 = vadd.f32 %v2489, %v2792
        %2794 = vmatprep.mubr.bf16.mxu0 %v2439
        %2795 = vmatmul.mubr.bf16.gmra.mxu0 %v2438
        %v2796 = vpop.f32.mrf.mxu0
        %v2797 = vadd.f32 %v2485, %v2796
        %v2798 = vpop.f32.mrf.mxu0
        %v2799 = vadd.f32 %v2489, %v2798
        %v2800 = vpop.f32.mrf.mxu0
        %v2801 = vadd.f32 %v2485, %v2800
        %v2802 = vpop.f32.mrf.mxu0
        %v2803 = vadd.f32 %v2489, %v2802
        %2804 = vmatprep.mubr.bf16.mxu0 %v2441
        %2805 = vmatmul.mubr.bf16.gmra.mxu0 %v2440
        %v2806 = vpop.f32.mrf.mxu0
        %v2807 = vadd.f32 %v2485, %v2806
        %v2808 = vpop.f32.mrf.mxu0
        %v2809 = vadd.f32 %v2489, %v2808
        %v2810 = vpop.f32.mrf.mxu0
        %v2811 = vadd.f32 %v2485, %v2810
        %v2812 = vpop.f32.mrf.mxu0
        %v2813 = vadd.f32 %v2489, %v2812
        %2814 = vmatprep.mubr.bf16.mxu0 %v2443
        %2815 = vmatmul.mubr.bf16.gmra.mxu0 %v2442
        %v2816 = vpop.f32.mrf.mxu0
        %v2817 = vadd.f32 %v2485, %v2816
        %v2818 = vpop.f32.mrf.mxu0
        %v2819 = vadd.f32 %v2489, %v2818
        %v2820 = vpop.f32.mrf.mxu0
        %v2821 = vadd.f32 %v2485, %v2820
        %v2822 = vpop.f32.mrf.mxu0
        %v2823 = vadd.f32 %v2489, %v2822
        %2824 = vmatprep.mubr.bf16.mxu0 %v2445
        %2825 = vmatmul.mubr.bf16.gmra.mxu0 %v2444
        %v2826 = vpop.f32.mrf.mxu0
        %v2827 = vadd.f32 %v2485, %v2826
        %v2828 = vpop.f32.mrf.mxu0
        %v2829 = vadd.f32 %v2489, %v2828
        %v2830 = vpop.f32.mrf.mxu0
        %v2831 = vadd.f32 %v2485, %v2830
        %v2832 = vpop.f32.mrf.mxu0
        %v2833 = vadd.f32 %v2489, %v2832
        %2834 = vmatprep.mubr.bf16.mxu0 %v2447
        %2835 = vmatmul.mubr.bf16.gmra.mxu0 %v2446
        %v2836 = vpop.f32.mrf.mxu0
        %v2837 = vadd.f32 %v2485, %v2836
        %v2838 = vpop.f32.mrf.mxu0
        %v2839 = vadd.f32 %v2489, %v2838
        %v2840 = vpop.f32.mrf.mxu0
        %v2841 = vadd.f32 %v2485, %v2840
        %v2842 = vpop.f32.mrf.mxu0
        %v2843 = vadd.f32 %v2489, %v2842
        %2844 = vdwg.mxu0
        %v2845 = vsub.f32 0.0, %v2687
        %v2846 = vsub.f32 0.0, %v2689
        %v2847 = vsub.f32 0.0, %v2691
        %v2848 = vsub.f32 0.0, %v2693
        %v2849 = vsub.f32 0.0, %v2697
        %v2850 = vsub.f32 0.0, %v2699
        %v2851 = vsub.f32 0.0, %v2701
        %v2852 = vsub.f32 0.0, %v2703
        %v2853 = vsub.f32 0.0, %v2707
        %v2854 = vsub.f32 0.0, %v2709
        %v2855 = vsub.f32 0.0, %v2711
        %v2856 = vsub.f32 0.0, %v2713
        %v2857 = vsub.f32 0.0, %v2717
        %v2858 = vsub.f32 0.0, %v2719
        %v2859 = vsub.f32 0.0, %v2721
        %v2860 = vsub.f32 0.0, %v2723
        %v2861 = vsub.f32 0.0, %v2727
        %v2862 = vsub.f32 0.0, %v2729
        %v2863 = vsub.f32 0.0, %v2731
        %v2864 = vsub.f32 0.0, %v2733
        %v2865 = vsub.f32 0.0, %v2737
        %v2866 = vsub.f32 0.0, %v2739
        %v2867 = vsub.f32 0.0, %v2741
        %v2868 = vsub.f32 0.0, %v2743
        %v2869 = vsub.f32 0.0, %v2747
        %v2870 = vsub.f32 0.0, %v2749
        %v2871 = vsub.f32 0.0, %v2751
        %v2872 = vsub.f32 0.0, %v2753
        %v2873 = vsub.f32 0.0, %v2757
        %v2874 = vsub.f32 0.0, %v2759
        %v2875 = vsub.f32 0.0, %v2761
        %v2876 = vsub.f32 0.0, %v2763
        %v2877 = vsub.f32 0.0, %v2767
        %v2878 = vsub.f32 0.0, %v2769
        %v2879 = vsub.f32 0.0, %v2771
        %v2880 = vsub.f32 0.0, %v2773
        %v2881 = vsub.f32 0.0, %v2777
        %v2882 = vsub.f32 0.0, %v2779
        %v2883 = vsub.f32 0.0, %v2781
        %v2884 = vsub.f32 0.0, %v2783
        %v2885 = vsub.f32 0.0, %v2787
        %v2886 = vsub.f32 0.0, %v2789
        %v2887 = vsub.f32 0.0, %v2791
        %v2888 = vsub.f32 0.0, %v2793
        %v2889 = vsub.f32 0.0, %v2797
        %v2890 = vsub.f32 0.0, %v2799
        %v2891 = vsub.f32 0.0, %v2801
        %v2892 = vsub.f32 0.0, %v2803
        %v2893 = vsub.f32 0.0, %v2807
        %v2894 = vsub.f32 0.0, %v2809
        %v2895 = vsub.f32 0.0, %v2811
        %v2896 = vsub.f32 0.0, %v2813
        %v2897 = vsub.f32 0.0, %v2817
        %v2898 = vsub.f32 0.0, %v2819
        %v2899 = vsub.f32 0.0, %v2821
        %v2900 = vsub.f32 0.0, %v2823
        %v2901 = vsub.f32 0.0, %v2827
        %v2902 = vsub.f32 0.0, %v2829
        %v2903 = vsub.f32 0.0, %v2831
        %v2904 = vsub.f32 0.0, %v2833
        %v2905 = vsub.f32 0.0, %v2837
        %v2906 = vsub.f32 0.0, %v2839
        %v2907 = vsub.f32 0.0, %v2841
        %v2908 = vsub.f32 0.0, %v2843
        %v2909 = vmul.f32 %v2845, 1.442695
        %v2910 = vpow.pop %v2909
        %v2911 = vmul.f32 %v2846, 1.442695
        %v2912 = vpow.pop %v2911
        %v2913 = vmul.f32 %v2847, 1.442695
        %v2914 = vpow.pop %v2913
        %v2915 = vmul.f32 %v2848, 1.442695
        %v2916 = vpow.pop %v2915
        %v2917 = vmul.f32 %v2849, 1.442695
        %v2918 = vpow.pop %v2917
        %v2919 = vmul.f32 %v2850, 1.442695
        %v2920 = vpow.pop %v2919
        %v2921 = vmul.f32 %v2851, 1.442695
        %v2922 = vpow.pop %v2921
        %v2923 = vmul.f32 %v2852, 1.442695
        %v2924 = vpow.pop %v2923
        %v2925 = vmul.f32 %v2853, 1.442695
        %v2926 = vpow.pop %v2925
        %v2927 = vmul.f32 %v2854, 1.442695
        %v2928 = vpow.pop %v2927
        %v2929 = vmul.f32 %v2855, 1.442695
        %v2930 = vpow.pop %v2929
        %v2931 = vmul.f32 %v2856, 1.442695
        %v2932 = vpow.pop %v2931
        %v2933 = vmul.f32 %v2857, 1.442695
        %v2934 = vpow.pop %v2933
        %v2935 = vmul.f32 %v2858, 1.442695
        %v2936 = vpow.pop %v2935
        %v2937 = vmul.f32 %v2859, 1.442695
        %v2938 = vpow.pop %v2937
        %v2939 = vmul.f32 %v2860, 1.442695
        %v2940 = vpow.pop %v2939
        %v2941 = vmul.f32 %v2861, 1.442695
        %v2942 = vpow.pop %v2941
        %v2943 = vmul.f32 %v2862, 1.442695
        %v2944 = vpow.pop %v2943
        %v2945 = vmul.f32 %v2863, 1.442695
        %v2946 = vpow.pop %v2945
        %v2947 = vmul.f32 %v2864, 1.442695
        %v2948 = vpow.pop %v2947
        %v2949 = vmul.f32 %v2865, 1.442695
        %v2950 = vpow.pop %v2949
        %v2951 = vmul.f32 %v2866, 1.442695
        %v2952 = vpow.pop %v2951
        %v2953 = vmul.f32 %v2867, 1.442695
        %v2954 = vpow.pop %v2953
        %v2955 = vmul.f32 %v2868, 1.442695
        %v2956 = vpow.pop %v2955
        %v2957 = vmul.f32 %v2869, 1.442695
        %v2958 = vpow.pop %v2957
        %v2959 = vmul.f32 %v2870, 1.442695
        %v2960 = vpow.pop %v2959
        %v2961 = vmul.f32 %v2871, 1.442695
        %v2962 = vpow.pop %v2961
        %v2963 = vmul.f32 %v2872, 1.442695
        %v2964 = vpow.pop %v2963
        %v2965 = vmul.f32 %v2873, 1.442695
        %v2966 = vpow.pop %v2965
        %v2967 = vmul.f32 %v2874, 1.442695
        %v2968 = vpow.pop %v2967
        %v2969 = vmul.f32 %v2875, 1.442695
        %v2970 = vpow.pop %v2969
        %v2971 = vmul.f32 %v2876, 1.442695
        %v2972 = vpow.pop %v2971
        %v2973 = vmul.f32 %v2877, 1.442695
        %v2974 = vpow.pop %v2973
        %v2975 = vmul.f32 %v2878, 1.442695
        %v2976 = vpow.pop %v2975
        %v2977 = vmul.f32 %v2879, 1.442695
        %v2978 = vpow.pop %v2977
        %v2979 = vmul.f32 %v2880, 1.442695
        %v2980 = vpow.pop %v2979
        %v2981 = vmul.f32 %v2881, 1.442695
        %v2982 = vpow.pop %v2981
        %v2983 = vmul.f32 %v2882, 1.442695
        %v2984 = vpow.pop %v2983
        %v2985 = vmul.f32 %v2883, 1.442695
        %v2986 = vpow.pop %v2985
        %v2987 = vmul.f32 %v2884, 1.442695
        %v2988 = vpow.pop %v2987
        %v2989 = vmul.f32 %v2885, 1.442695
        %v2990 = vpow.pop %v2989
        %v2991 = vmul.f32 %v2886, 1.442695
        %v2992 = vpow.pop %v2991
        %v2993 = vmul.f32 %v2887, 1.442695
        %v2994 = vpow.pop %v2993
        %v2995 = vmul.f32 %v2888, 1.442695
        %v2996 = vpow.pop %v2995
        %v2997 = vmul.f32 %v2889, 1.442695
        %v2998 = vpow.pop %v2997
        %v2999 = vmul.f32 %v2890, 1.442695
        %v3000 = vpow.pop %v2999
        %v3001 = vmul.f32 %v2891, 1.442695
        %v3002 = vpow.pop %v3001
        %v3003 = vmul.f32 %v2892, 1.442695
        %v3004 = vpow.pop %v3003
        %v3005 = vmul.f32 %v2893, 1.442695
        %v3006 = vpow.pop %v3005
        %v3007 = vmul.f32 %v2894, 1.442695
        %v3008 = vpow.pop %v3007
        %v3009 = vmul.f32 %v2895, 1.442695
        %v3010 = vpow.pop %v3009
        %v3011 = vmul.f32 %v2896, 1.442695
        %v3012 = vpow.pop %v3011
        %v3013 = vmul.f32 %v2897, 1.442695
        %v3014 = vpow.pop %v3013
        %v3015 = vmul.f32 %v2898, 1.442695
        %v3016 = vpow.pop %v3015
        %v3017 = vmul.f32 %v2899, 1.442695
        %v3018 = vpow.pop %v3017
        %v3019 = vmul.f32 %v2900, 1.442695
        %v3020 = vpow.pop %v3019
        %v3021 = vmul.f32 %v2901, 1.442695
        %v3022 = vpow.pop %v3021
        %v3023 = vmul.f32 %v2902, 1.442695
        %v3024 = vpow.pop %v3023
        %v3025 = vmul.f32 %v2903, 1.442695
        %v3026 = vpow.pop %v3025
        %v3027 = vmul.f32 %v2904, 1.442695
        %v3028 = vpow.pop %v3027
        %v3029 = vmul.f32 %v2905, 1.442695
        %v3030 = vpow.pop %v3029
        %v3031 = vmul.f32 %v2906, 1.442695
        %v3032 = vpow.pop %v3031
        %v3033 = vmul.f32 %v2907, 1.442695
        %v3034 = vpow.pop %v3033
        %v3035 = vmul.f32 %v2908, 1.442695
        %v3036 = vpow.pop %v3035
        %v3037 = vadd.f32 %v2910, 1.0
        %v3038 = vadd.f32 %v2912, 1.0
        %v3039 = vadd.f32 %v2914, 1.0
        %v3040 = vadd.f32 %v2916, 1.0
        %v3041 = vadd.f32 %v2918, 1.0
        %v3042 = vadd.f32 %v2920, 1.0
        %v3043 = vadd.f32 %v2922, 1.0
        %v3044 = vadd.f32 %v2924, 1.0
        %v3045 = vadd.f32 %v2926, 1.0
        %v3046 = vadd.f32 %v2928, 1.0
        %v3047 = vadd.f32 %v2930, 1.0
        %v3048 = vadd.f32 %v2932, 1.0
        %v3049 = vadd.f32 %v2934, 1.0
        %v3050 = vadd.f32 %v2936, 1.0
        %v3051 = vadd.f32 %v2938, 1.0
        %v3052 = vadd.f32 %v2940, 1.0
        %v3053 = vadd.f32 %v2942, 1.0
        %v3054 = vadd.f32 %v2944, 1.0
        %v3055 = vadd.f32 %v2946, 1.0
        %v3056 = vadd.f32 %v2948, 1.0
        %v3057 = vadd.f32 %v2950, 1.0
        %v3058 = vadd.f32 %v2952, 1.0
        %v3059 = vadd.f32 %v2954, 1.0
        %v3060 = vadd.f32 %v2956, 1.0
        %v3061 = vadd.f32 %v2958, 1.0
        %v3062 = vadd.f32 %v2960, 1.0
        %v3063 = vadd.f32 %v2962, 1.0
        %v3064 = vadd.f32 %v2964, 1.0
        %v3065 = vadd.f32 %v2966, 1.0
        %v3066 = vadd.f32 %v2968, 1.0
        %v3067 = vadd.f32 %v2970, 1.0
        %v3068 = vadd.f32 %v2972, 1.0
        %v3069 = vadd.f32 %v2974, 1.0
        %v3070 = vadd.f32 %v2976, 1.0
        %v3071 = vadd.f32 %v2978, 1.0
        %v3072 = vadd.f32 %v2980, 1.0
        %v3073 = vadd.f32 %v2982, 1.0
        %v3074 = vadd.f32 %v2984, 1.0
        %v3075 = vadd.f32 %v2986, 1.0
        %v3076 = vadd.f32 %v2988, 1.0
        %v3077 = vadd.f32 %v2990, 1.0
        %v3078 = vadd.f32 %v2992, 1.0
        %v3079 = vadd.f32 %v2994, 1.0
        %v3080 = vadd.f32 %v2996, 1.0
        %v3081 = vadd.f32 %v2998, 1.0
        %v3082 = vadd.f32 %v3000, 1.0
        %v3083 = vadd.f32 %v3002, 1.0
        %v3084 = vadd.f32 %v3004, 1.0
        %v3085 = vadd.f32 %v3006, 1.0
        %v3086 = vadd.f32 %v3008, 1.0
        %v3087 = vadd.f32 %v3010, 1.0
        %v3088 = vadd.f32 %v3012, 1.0
        %v3089 = vadd.f32 %v3014, 1.0
        %v3090 = vadd.f32 %v3016, 1.0
        %v3091 = vadd.f32 %v3018, 1.0
        %v3092 = vadd.f32 %v3020, 1.0
        %v3093 = vadd.f32 %v3022, 1.0
        %v3094 = vadd.f32 %v3024, 1.0
        %v3095 = vadd.f32 %v3026, 1.0
        %v3096 = vadd.f32 %v3028, 1.0
        %v3097 = vadd.f32 %v3030, 1.0
        %v3098 = vadd.f32 %v3032, 1.0
        %v3099 = vadd.f32 %v3034, 1.0
        %v3100 = vadd.f32 %v3036, 1.0
        %v3101 = vrcp.pop %v3037
        %v3102 = vrcp.pop %v3038
        %v3103 = vrcp.pop %v3039
        %v3104 = vrcp.pop %v3040
        %v3105 = vrcp.pop %v3041
        %v3106 = vrcp.pop %v3042
        %v3107 = vrcp.pop %v3043
        %v3108 = vrcp.pop %v3044
        %v3109 = vrcp.pop %v3045
        %v3110 = vrcp.pop %v3046
        %v3111 = vrcp.pop %v3047
        %v3112 = vrcp.pop %v3048
        %v3113 = vrcp.pop %v3049
        %v3114 = vrcp.pop %v3050
        %v3115 = vrcp.pop %v3051
        %v3116 = vrcp.pop %v3052
        %v3117 = vrcp.pop %v3053
        %v3118 = vrcp.pop %v3054
        %v3119 = vrcp.pop %v3055
        %v3120 = vrcp.pop %v3056
        %v3121 = vrcp.pop %v3057
        %v3122 = vrcp.pop %v3058
        %v3123 = vrcp.pop %v3059
        %v3124 = vrcp.pop %v3060
        %v3125 = vrcp.pop %v3061
        %v3126 = vrcp.pop %v3062
        %v3127 = vrcp.pop %v3063
        %v3128 = vrcp.pop %v3064
        %v3129 = vrcp.pop %v3065
        %v3130 = vrcp.pop %v3066
        %v3131 = vrcp.pop %v3067
        %v3132 = vrcp.pop %v3068
        %v3133 = vrcp.pop %v3069
        %v3134 = vrcp.pop %v3070
        %v3135 = vrcp.pop %v3071
        %v3136 = vrcp.pop %v3072
        %v3137 = vrcp.pop %v3073
        %v3138 = vrcp.pop %v3074
        %v3139 = vrcp.pop %v3075
        %v3140 = vrcp.pop %v3076
        %v3141 = vrcp.pop %v3077
        %v3142 = vrcp.pop %v3078
        %v3143 = vrcp.pop %v3079
        %v3144 = vrcp.pop %v3080
        %v3145 = vrcp.pop %v3081
        %v3146 = vrcp.pop %v3082
        %v3147 = vrcp.pop %v3083
        %v3148 = vrcp.pop %v3084
        %v3149 = vrcp.pop %v3085
        %v3150 = vrcp.pop %v3086
        %v3151 = vrcp.pop %v3087
        %v3152 = vrcp.pop %v3088
        %v3153 = vrcp.pop %v3089
        %v3154 = vrcp.pop %v3090
        %v3155 = vrcp.pop %v3091
        %v3156 = vrcp.pop %v3092
        %v3157 = vrcp.pop %v3093
        %v3158 = vrcp.pop %v3094
        %v3159 = vrcp.pop %v3095
        %v3160 = vrcp.pop %v3096
        %v3161 = vrcp.pop %v3097
        %v3162 = vrcp.pop %v3098
        %v3163 = vrcp.pop %v3099
        %v3164 = vrcp.pop %v3100
        %v3165 = vmul.f32 %v2687, %v3101
        %v3166 = vmul.f32 %v2689, %v3102
        %v3167 = vmul.f32 %v2691, %v3103
        %v3168 = vmul.f32 %v2693, %v3104
        %v3169 = vmul.f32 %v2697, %v3105
        %v3170 = vmul.f32 %v2699, %v3106
        %v3171 = vmul.f32 %v2701, %v3107
        %v3172 = vmul.f32 %v2703, %v3108
        %v3173 = vmul.f32 %v2707, %v3109
        %v3174 = vmul.f32 %v2709, %v3110
        %v3175 = vmul.f32 %v2711, %v3111
        %v3176 = vmul.f32 %v2713, %v3112
        %v3177 = vmul.f32 %v2717, %v3113
        %v3178 = vmul.f32 %v2719, %v3114
        %v3179 = vmul.f32 %v2721, %v3115
        %v3180 = vmul.f32 %v2723, %v3116
        %v3181 = vmul.f32 %v2727, %v3117
        %v3182 = vmul.f32 %v2729, %v3118
        %v3183 = vmul.f32 %v2731, %v3119
        %v3184 = vmul.f32 %v2733, %v3120
        %v3185 = vmul.f32 %v2737, %v3121
        %v3186 = vmul.f32 %v2739, %v3122
        %v3187 = vmul.f32 %v2741, %v3123
        %v3188 = vmul.f32 %v2743, %v3124
        %v3189 = vmul.f32 %v2747, %v3125
        %v3190 = vmul.f32 %v2749, %v3126
        %v3191 = vmul.f32 %v2751, %v3127
        %v3192 = vmul.f32 %v2753, %v3128
        %v3193 = vmul.f32 %v2757, %v3129
        %v3194 = vmul.f32 %v2759, %v3130
        %v3195 = vmul.f32 %v2761, %v3131
        %v3196 = vmul.f32 %v2763, %v3132
        %v3197 = vmul.f32 %v2767, %v3133
        %v3198 = vmul.f32 %v2769, %v3134
        %v3199 = vmul.f32 %v2771, %v3135
        %v3200 = vmul.f32 %v2773, %v3136
        %v3201 = vmul.f32 %v2777, %v3137
        %v3202 = vmul.f32 %v2779, %v3138
        %v3203 = vmul.f32 %v2781, %v3139
        %v3204 = vmul.f32 %v2783, %v3140
        %v3205 = vmul.f32 %v2787, %v3141
        %v3206 = vmul.f32 %v2789, %v3142
        %v3207 = vmul.f32 %v2791, %v3143
        %v3208 = vmul.f32 %v2793, %v3144
        %v3209 = vmul.f32 %v2797, %v3145
        %v3210 = vmul.f32 %v2799, %v3146
        %v3211 = vmul.f32 %v2801, %v3147
        %v3212 = vmul.f32 %v2803, %v3148
        %v3213 = vmul.f32 %v2807, %v3149
        %v3214 = vmul.f32 %v2809, %v3150
        %v3215 = vmul.f32 %v2811, %v3151
        %v3216 = vmul.f32 %v2813, %v3152
        %v3217 = vmul.f32 %v2817, %v3153
        %v3218 = vmul.f32 %v2819, %v3154
        %v3219 = vmul.f32 %v2821, %v3155
        %v3220 = vmul.f32 %v2823, %v3156
        %v3221 = vmul.f32 %v2827, %v3157
        %v3222 = vmul.f32 %v2829, %v3158
        %v3223 = vmul.f32 %v2831, %v3159
        %v3224 = vmul.f32 %v2833, %v3160
        %v3225 = vmul.f32 %v2837, %v3161
        %v3226 = vmul.f32 %v2839, %v3162
        %v3227 = vmul.f32 %v2841, %v3163
        %v3228 = vmul.f32 %v2843, %v3164
        %v3229 = vpack.c.bf16 %v3167, %v3165
        %v3230 = vpack.c.bf16 %v3168, %v3166
        %v3231 = vpack.c.bf16 %v3171, %v3169
        %v3232 = vpack.c.bf16 %v3172, %v3170
        %v3233 = vpack.c.bf16 %v3175, %v3173
        %v3234 = vpack.c.bf16 %v3176, %v3174
        %v3235 = vpack.c.bf16 %v3179, %v3177
        %v3236 = vpack.c.bf16 %v3180, %v3178
        %v3237 = vpack.c.bf16 %v3183, %v3181
        %v3238 = vpack.c.bf16 %v3184, %v3182
        %v3239 = vpack.c.bf16 %v3187, %v3185
        %v3240 = vpack.c.bf16 %v3188, %v3186
        %v3241 = vpack.c.bf16 %v3191, %v3189
        %v3242 = vpack.c.bf16 %v3192, %v3190
        %v3243 = vpack.c.bf16 %v3195, %v3193
        %v3244 = vpack.c.bf16 %v3196, %v3194
        %v3245 = vpack.c.bf16 %v3199, %v3197
        %v3246 = vpack.c.bf16 %v3200, %v3198
        %v3247 = vpack.c.bf16 %v3203, %v3201
        %v3248 = vpack.c.bf16 %v3204, %v3202
        %v3249 = vpack.c.bf16 %v3207, %v3205
        %v3250 = vpack.c.bf16 %v3208, %v3206
        %v3251 = vpack.c.bf16 %v3211, %v3209
        %v3252 = vpack.c.bf16 %v3212, %v3210
        %v3253 = vpack.c.bf16 %v3215, %v3213
        %v3254 = vpack.c.bf16 %v3216, %v3214
        %v3255 = vpack.c.bf16 %v3219, %v3217
        %v3256 = vpack.c.bf16 %v3220, %v3218
        %v3257 = vpack.c.bf16 %v3223, %v3221
        %v3258 = vpack.c.bf16 %v3224, %v3222
        %v3259 = vpack.c.bf16 %v3227, %v3225
        %v3260 = vpack.c.bf16 %v3228, %v3226
        %v3261 = vld [vmem:[#allocation8] sm:$0xf]
        %v3262 = vld [vmem:[#allocation8 + $0x4] sm:$0xf]
        %v3263 = vld [vmem:[#allocation8 + $0x8] sm:$0xf]
        %v3264 = vld [vmem:[#allocation8 + $0xc] sm:$0xf]
        %v3265 = vld [vmem:[#allocation8 + $0x10] sm:$0xf]
        %v3266 = vld [vmem:[#allocation8 + $0x14] sm:$0xf]
        %v3267 = vld [vmem:[#allocation8 + $0x18] sm:$0xf]
        %v3268 = vld [vmem:[#allocation8 + $0x1c] sm:$0xf]
        %v3269 = vld [vmem:[#allocation8 + $0x20] sm:$0xf]
        %v3270 = vld [vmem:[#allocation8 + $0x24] sm:$0xf]
        %v3271 = vld [vmem:[#allocation8 + $0x28] sm:$0xf]
        %v3272 = vld [vmem:[#allocation8 + $0x2c] sm:$0xf]
        %v3273 = vld [vmem:[#allocation8 + $0x30] sm:$0xf]
        %v3274 = vld [vmem:[#allocation8 + $0x34] sm:$0xf]
        %v3275 = vld [vmem:[#allocation8 + $0x38] sm:$0xf]
        %v3276 = vld [vmem:[#allocation8 + $0x3c] sm:$0xf]
        %v3277 = vld [vmem:[#allocation8 + $0x40] sm:$0xf]
        %v3278 = vld [vmem:[#allocation8 + $0x44] sm:$0xf]
        %v3279 = vld [vmem:[#allocation8 + $0x48] sm:$0xf]
        %v3280 = vld [vmem:[#allocation8 + $0x4c] sm:$0xf]
        %v3281 = vld [vmem:[#allocation8 + $0x50] sm:$0xf]
        %v3282 = vld [vmem:[#allocation8 + $0x54] sm:$0xf]
        %v3283 = vld [vmem:[#allocation8 + $0x58] sm:$0xf]
        %v3284 = vld [vmem:[#allocation8 + $0x5c] sm:$0xf]
        %v3285 = vld [vmem:[#allocation8 + $0x60] sm:$0xf]
        %v3286 = vld [vmem:[#allocation8 + $0x64] sm:$0xf]
        %v3287 = vld [vmem:[#allocation8 + $0x68] sm:$0xf]
        %v3288 = vld [vmem:[#allocation8 + $0x6c] sm:$0xf]
        %v3289 = vld [vmem:[#allocation8 + $0x70] sm:$0xf]
        %v3290 = vld [vmem:[#allocation8 + $0x74] sm:$0xf]
        %v3291 = vld [vmem:[#allocation8 + $0x78] sm:$0xf]
        %v3292 = vld [vmem:[#allocation8 + $0x7c] sm:$0xf]
        %v3293 = vld [vmem:[%s10] sm:$0x1]
        %v3295 = vlaneseq
        %v3296 = vshrl.u32 %v3295, 7
        %v3297 = vsub.s32 0, %v3296
        %v3298 = vrot.slane %v3293, %v3297
        %v3332 = vunpack.c.l.b16 %v3261
        %v3333 = vunpack.c.l.b16 %v3262
        %v3334 = vunpack.c.l.b16 %v3263
        %v3335 = vunpack.c.l.b16 %v3264
        %v3336 = vunpack.c.l.b16 %v3265
        %v3337 = vunpack.c.l.b16 %v3266
        %v3338 = vunpack.c.l.b16 %v3267
        %v3339 = vunpack.c.l.b16 %v3268
        %v3340 = vunpack.c.l.b16 %v3269
        %v3341 = vunpack.c.l.b16 %v3270
        %v3342 = vunpack.c.l.b16 %v3271
        %v3343 = vunpack.c.l.b16 %v3272
        %v3344 = vunpack.c.l.b16 %v3273
        %v3345 = vunpack.c.l.b16 %v3274
        %v3346 = vunpack.c.l.b16 %v3275
        %v3347 = vunpack.c.l.b16 %v3276
        %v3348 = vunpack.c.l.b16 %v3277
        %v3349 = vunpack.c.l.b16 %v3278
        %v3350 = vunpack.c.l.b16 %v3279
        %v3351 = vunpack.c.l.b16 %v3280
        %v3352 = vunpack.c.l.b16 %v3281
        %v3353 = vunpack.c.l.b16 %v3282
        %v3354 = vunpack.c.l.b16 %v3283
        %v3355 = vunpack.c.l.b16 %v3284
        %v3356 = vunpack.c.l.b16 %v3285
        %v3357 = vunpack.c.l.b16 %v3286
        %v3358 = vunpack.c.l.b16 %v3287
        %v3359 = vunpack.c.l.b16 %v3288
        %v3360 = vunpack.c.l.b16 %v3289
        %v3361 = vunpack.c.l.b16 %v3290
        %v3362 = vunpack.c.l.b16 %v3291
        %v3363 = vunpack.c.l.b16 %v3292
        %v3364 = vpack.c.b16 %v3333, %v3332
        %v3365 = vpack.c.b16 %v3335, %v3334
        %v3366 = vpack.c.b16 %v3337, %v3336
        %v3367 = vpack.c.b16 %v3339, %v3338
        %v3368 = vpack.c.b16 %v3341, %v3340
        %v3369 = vpack.c.b16 %v3343, %v3342
        %v3370 = vpack.c.b16 %v3345, %v3344
        %v3371 = vpack.c.b16 %v3347, %v3346
        %v3372 = vpack.c.b16 %v3349, %v3348
        %v3373 = vpack.c.b16 %v3351, %v3350
        %v3374 = vpack.c.b16 %v3353, %v3352
        %v3375 = vpack.c.b16 %v3355, %v3354
        %v3376 = vpack.c.b16 %v3357, %v3356
        %v3377 = vpack.c.b16 %v3359, %v3358
        %v3378 = vpack.c.b16 %v3361, %v3360
        %v3379 = vpack.c.b16 %v3363, %v3362
        %3396 = vmatprep.subr.bf16.mxu0 0
        %3397 = vmatpush1.bf16.msra.mxu0 %v3371
        %3398 = vmatprep.subr.bf16.mxu0 0
        %3399 = vmatpush1.bf16.msra.mxu0 %v3370
        %3400 = vmatprep.subr.bf16.mxu0 0
        %3401 = vmatpush1.bf16.msra.mxu0 %v3369
        %3402 = vmatprep.subr.bf16.mxu0 0
        %3403 = vmatpush1.bf16.msra.mxu0 %v3368
        %3404 = vmatprep.subr.bf16.mxu0 0
        %3405 = vmatpush1.bf16.msra.mxu0 %v3367
        %3406 = vmatprep.subr.bf16.mxu0 0
        %3407 = vmatpush1.bf16.msra.mxu0 %v3366
        %3408 = vmatprep.subr.bf16.mxu0 0
        %3409 = vmatpush1.bf16.msra.mxu0 %v3365
        %3410 = vmatprep.subr.bf16.mxu0 0
        %3411 = vmatpush1.bf16.msra.mxu0 %v3364
        %3412 = vmatprep.subr.bf16.mxu0 0
        %3413 = vmatpush2.bf16.msra.mxu0 %v3379
        %3414 = vmatprep.subr.bf16.mxu0 0
        %3415 = vmatpush2.bf16.msra.mxu0 %v3378
        %3416 = vmatprep.subr.bf16.mxu0 0
        %3417 = vmatpush2.bf16.msra.mxu0 %v3377
        %3418 = vmatprep.subr.bf16.mxu0 0
        %3419 = vmatpush2.bf16.msra.mxu0 %v3376
        %3420 = vmatprep.subr.bf16.mxu0 0
        %3421 = vmatpush2.bf16.msra.mxu0 %v3375
        %3422 = vmatprep.subr.bf16.mxu0 0
        %3423 = vmatpush2.bf16.msra.mxu0 %v3374
        %3424 = vmatprep.subr.bf16.mxu0 0
        %3425 = vmatpush2.bf16.msra.mxu0 %v3373
        %3426 = vmatprep.subr.bf16.mxu0 0
        %3427 = vmatpush2.bf16.msra.mxu0 %v3372
        %3428 = vmatprep.mubr.bf16.mxu0 %v3230
        %3429 = vmatmul.mubr.bf16.gmra.mxu0 %v3229
        %v3430 = vpop.f32.mrf.mxu0
        %v3431 = vadd.f32 %v3298, %v3430
        %v3432 = vpop.f32.mrf.mxu0
        %v3433 = vpop.f32.mrf.mxu0
        %v3434 = vadd.f32 %v3298, %v3433
        %v3435 = vpop.f32.mrf.mxu0
        %3436 = vmatprep.mubr.bf16.mxu0 %v3232
        %3437 = vmatmul.mubr.bf16.gmra.mxu0 %v3231
        %v3438 = vpop.f32.mrf.mxu0
        %v3439 = vadd.f32 %v3298, %v3438
        %v3440 = vpop.f32.mrf.mxu0
        %v3441 = vpop.f32.mrf.mxu0
        %v3442 = vadd.f32 %v3298, %v3441
        %v3443 = vpop.f32.mrf.mxu0
        %3444 = vmatprep.mubr.bf16.mxu0 %v3234
        %3445 = vmatmul.mubr.bf16.gmra.mxu0 %v3233
        %v3446 = vpop.f32.mrf.mxu0
        %v3447 = vadd.f32 %v3298, %v3446
        %v3448 = vpop.f32.mrf.mxu0
        %v3449 = vpop.f32.mrf.mxu0
        %v3450 = vadd.f32 %v3298, %v3449
        %v3451 = vpop.f32.mrf.mxu0
        %3452 = vmatprep.mubr.bf16.mxu0 %v3236
        %3453 = vmatmul.mubr.bf16.gmra.mxu0 %v3235
        %v3454 = vpop.f32.mrf.mxu0
        %v3455 = vadd.f32 %v3298, %v3454
        %v3456 = vpop.f32.mrf.mxu0
        %v3457 = vpop.f32.mrf.mxu0
        %v3458 = vadd.f32 %v3298, %v3457
        %v3459 = vpop.f32.mrf.mxu0
        %3460 = vmatprep.mubr.bf16.mxu0 %v3238
        %3461 = vmatmul.mubr.bf16.gmra.mxu0 %v3237
        %v3462 = vpop.f32.mrf.mxu0
        %v3463 = vadd.f32 %v3298, %v3462
        %v3464 = vpop.f32.mrf.mxu0
        %v3465 = vpop.f32.mrf.mxu0
        %v3466 = vadd.f32 %v3298, %v3465
        %v3467 = vpop.f32.mrf.mxu0
        %3468 = vmatprep.mubr.bf16.mxu0 %v3240
        %3469 = vmatmul.mubr.bf16.gmra.mxu0 %v3239
        %v3470 = vpop.f32.mrf.mxu0
        %v3471 = vadd.f32 %v3298, %v3470
        %v3472 = vpop.f32.mrf.mxu0
        %v3473 = vpop.f32.mrf.mxu0
        %v3474 = vadd.f32 %v3298, %v3473
        %v3475 = vpop.f32.mrf.mxu0
        %3476 = vmatprep.mubr.bf16.mxu0 %v3242
        %3477 = vmatmul.mubr.bf16.gmra.mxu0 %v3241
        %v3478 = vpop.f32.mrf.mxu0
        %v3479 = vadd.f32 %v3298, %v3478
        %v3480 = vpop.f32.mrf.mxu0
        %v3481 = vpop.f32.mrf.mxu0
        %v3482 = vadd.f32 %v3298, %v3481
        %v3483 = vpop.f32.mrf.mxu0
        %3484 = vmatprep.mubr.bf16.mxu0 %v3244
        %3485 = vmatmul.mubr.bf16.gmra.mxu0 %v3243
        %v3486 = vpop.f32.mrf.mxu0
        %v3487 = vadd.f32 %v3298, %v3486
        %v3488 = vpop.f32.mrf.mxu0
        %v3489 = vpop.f32.mrf.mxu0
        %v3490 = vadd.f32 %v3298, %v3489
        %v3491 = vpop.f32.mrf.mxu0
        %3492 = vmatprep.mubr.bf16.mxu0 %v3246
        %3493 = vmatmul.mubr.bf16.gmra.mxu0 %v3245
        %v3494 = vpop.f32.mrf.mxu0
        %v3495 = vadd.f32 %v3298, %v3494
        %v3496 = vpop.f32.mrf.mxu0
        %v3497 = vpop.f32.mrf.mxu0
        %v3498 = vadd.f32 %v3298, %v3497
        %v3499 = vpop.f32.mrf.mxu0
        %3500 = vmatprep.mubr.bf16.mxu0 %v3248
        %3501 = vmatmul.mubr.bf16.gmra.mxu0 %v3247
        %v3502 = vpop.f32.mrf.mxu0
        %v3503 = vadd.f32 %v3298, %v3502
        %v3504 = vpop.f32.mrf.mxu0
        %v3505 = vpop.f32.mrf.mxu0
        %v3506 = vadd.f32 %v3298, %v3505
        %v3507 = vpop.f32.mrf.mxu0
        %3508 = vmatprep.mubr.bf16.mxu0 %v3250
        %3509 = vmatmul.mubr.bf16.gmra.mxu0 %v3249
        %v3510 = vpop.f32.mrf.mxu0
        %v3511 = vadd.f32 %v3298, %v3510
        %v3512 = vpop.f32.mrf.mxu0
        %v3513 = vpop.f32.mrf.mxu0
        %v3514 = vadd.f32 %v3298, %v3513
        %v3515 = vpop.f32.mrf.mxu0
        %3516 = vmatprep.mubr.bf16.mxu0 %v3252
        %3517 = vmatmul.mubr.bf16.gmra.mxu0 %v3251
        %v3518 = vpop.f32.mrf.mxu0
        %v3519 = vadd.f32 %v3298, %v3518
        %v3520 = vpop.f32.mrf.mxu0
        %v3521 = vpop.f32.mrf.mxu0
        %v3522 = vadd.f32 %v3298, %v3521
        %v3523 = vpop.f32.mrf.mxu0
        %3524 = vmatprep.mubr.bf16.mxu0 %v3254
        %3525 = vmatmul.mubr.bf16.gmra.mxu0 %v3253
        %v3526 = vpop.f32.mrf.mxu0
        %v3527 = vadd.f32 %v3298, %v3526
        %v3528 = vpop.f32.mrf.mxu0
        %v3529 = vpop.f32.mrf.mxu0
        %v3530 = vadd.f32 %v3298, %v3529
        %v3531 = vpop.f32.mrf.mxu0
        %3532 = vmatprep.mubr.bf16.mxu0 %v3256
        %3533 = vmatmul.mubr.bf16.gmra.mxu0 %v3255
        %v3534 = vpop.f32.mrf.mxu0
        %v3535 = vadd.f32 %v3298, %v3534
        %v3536 = vpop.f32.mrf.mxu0
        %v3537 = vpop.f32.mrf.mxu0
        %v3538 = vadd.f32 %v3298, %v3537
        %v3539 = vpop.f32.mrf.mxu0
        %3540 = vmatprep.mubr.bf16.mxu0 %v3258
        %3541 = vmatmul.mubr.bf16.gmra.mxu0 %v3257
        %v3542 = vpop.f32.mrf.mxu0
        %v3543 = vadd.f32 %v3298, %v3542
        %v3544 = vpop.f32.mrf.mxu0
        %v3545 = vpop.f32.mrf.mxu0
        %v3546 = vadd.f32 %v3298, %v3545
        %v3547 = vpop.f32.mrf.mxu0
        %3548 = vmatprep.mubr.bf16.mxu0 %v3260
        %3549 = vmatmul.mubr.bf16.gmra.mxu0 %v3259
        %v3550 = vpop.f32.mrf.mxu0
        %v3551 = vadd.f32 %v3298, %v3550
        %v3552 = vpop.f32.mrf.mxu0
        %v3553 = vpop.f32.mrf.mxu0
        %v3554 = vadd.f32 %v3298, %v3553
        %v3555 = vpop.f32.mrf.mxu0
        %3556 = vdwg.mxu0
        %v3557 = vsub.f32 0.0, %v3431
        %v3558 = vsub.f32 0.0, %v3434
        %v3559 = vsub.f32 0.0, %v3439
        %v3560 = vsub.f32 0.0, %v3442
        %v3561 = vsub.f32 0.0, %v3447
        %v3562 = vsub.f32 0.0, %v3450
        %v3563 = vsub.f32 0.0, %v3455
        %v3564 = vsub.f32 0.0, %v3458
        %v3565 = vsub.f32 0.0, %v3463
        %v3566 = vsub.f32 0.0, %v3466
        %v3567 = vsub.f32 0.0, %v3471
        %v3568 = vsub.f32 0.0, %v3474
        %v3569 = vsub.f32 0.0, %v3479
        %v3570 = vsub.f32 0.0, %v3482
        %v3571 = vsub.f32 0.0, %v3487
        %v3572 = vsub.f32 0.0, %v3490
        %v3573 = vsub.f32 0.0, %v3495
        %v3574 = vsub.f32 0.0, %v3498
        %v3575 = vsub.f32 0.0, %v3503
        %v3576 = vsub.f32 0.0, %v3506
        %v3577 = vsub.f32 0.0, %v3511
        %v3578 = vsub.f32 0.0, %v3514
        %v3579 = vsub.f32 0.0, %v3519
        %v3580 = vsub.f32 0.0, %v3522
        %v3581 = vsub.f32 0.0, %v3527
        %v3582 = vsub.f32 0.0, %v3530
        %v3583 = vsub.f32 0.0, %v3535
        %v3584 = vsub.f32 0.0, %v3538
        %v3585 = vsub.f32 0.0, %v3543
        %v3586 = vsub.f32 0.0, %v3546
        %v3587 = vsub.f32 0.0, %v3551
        %v3588 = vsub.f32 0.0, %v3554
        %v3589 = vmul.f32 %v3557, 1.442695
        %v3590 = vpow.pop %v3589
        %v3591 = vmul.f32 %v3558, 1.442695
        %v3592 = vpow.pop %v3591
        %v3593 = vmul.f32 %v3559, 1.442695
        %v3594 = vpow.pop %v3593
        %v3595 = vmul.f32 %v3560, 1.442695
        %v3596 = vpow.pop %v3595
        %v3597 = vmul.f32 %v3561, 1.442695
        %v3598 = vpow.pop %v3597
        %v3599 = vmul.f32 %v3562, 1.442695
        %v3600 = vpow.pop %v3599
        %v3601 = vmul.f32 %v3563, 1.442695
        %v3602 = vpow.pop %v3601
        %v3603 = vmul.f32 %v3564, 1.442695
        %v3604 = vpow.pop %v3603
        %v3605 = vmul.f32 %v3565, 1.442695
        %v3606 = vpow.pop %v3605
        %v3607 = vmul.f32 %v3566, 1.442695
        %v3608 = vpow.pop %v3607
        %v3609 = vmul.f32 %v3567, 1.442695
        %v3610 = vpow.pop %v3609
        %v3611 = vmul.f32 %v3568, 1.442695
        %v3612 = vpow.pop %v3611
        %v3613 = vmul.f32 %v3569, 1.442695
        %v3614 = vpow.pop %v3613
        %v3615 = vmul.f32 %v3570, 1.442695
        %v3616 = vpow.pop %v3615
        %v3617 = vmul.f32 %v3571, 1.442695
        %v3618 = vpow.pop %v3617
        %v3619 = vmul.f32 %v3572, 1.442695
        %v3620 = vpow.pop %v3619
        %v3621 = vmul.f32 %v3573, 1.442695
        %v3622 = vpow.pop %v3621
        %v3623 = vmul.f32 %v3574, 1.442695
        %v3624 = vpow.pop %v3623
        %v3625 = vmul.f32 %v3575, 1.442695
        %v3626 = vpow.pop %v3625
        %v3627 = vmul.f32 %v3576, 1.442695
        %v3628 = vpow.pop %v3627
        %v3629 = vmul.f32 %v3577, 1.442695
        %v3630 = vpow.pop %v3629
        %v3631 = vmul.f32 %v3578, 1.442695
        %v3632 = vpow.pop %v3631
        %v3633 = vmul.f32 %v3579, 1.442695
        %v3634 = vpow.pop %v3633
        %v3635 = vmul.f32 %v3580, 1.442695
        %v3636 = vpow.pop %v3635
        %v3637 = vmul.f32 %v3581, 1.442695
        %v3638 = vpow.pop %v3637
        %v3639 = vmul.f32 %v3582, 1.442695
        %v3640 = vpow.pop %v3639
        %v3641 = vmul.f32 %v3583, 1.442695
        %v3642 = vpow.pop %v3641
        %v3643 = vmul.f32 %v3584, 1.442695
        %v3644 = vpow.pop %v3643
        %v3645 = vmul.f32 %v3585, 1.442695
        %v3646 = vpow.pop %v3645
        %v3647 = vmul.f32 %v3586, 1.442695
        %v3648 = vpow.pop %v3647
        %v3649 = vmul.f32 %v3587, 1.442695
        %v3650 = vpow.pop %v3649
        %v3651 = vmul.f32 %v3588, 1.442695
        %v3652 = vpow.pop %v3651
        %v3653 = vadd.f32 %v3590, 1.0
        %v3654 = vadd.f32 %v3592, 1.0
        %v3655 = vadd.f32 %v3594, 1.0
        %v3656 = vadd.f32 %v3596, 1.0
        %v3657 = vadd.f32 %v3598, 1.0
        %v3658 = vadd.f32 %v3600, 1.0
        %v3659 = vadd.f32 %v3602, 1.0
        %v3660 = vadd.f32 %v3604, 1.0
        %v3661 = vadd.f32 %v3606, 1.0
        %v3662 = vadd.f32 %v3608, 1.0
        %v3663 = vadd.f32 %v3610, 1.0
        %v3664 = vadd.f32 %v3612, 1.0
        %v3665 = vadd.f32 %v3614, 1.0
        %v3666 = vadd.f32 %v3616, 1.0
        %v3667 = vadd.f32 %v3618, 1.0
        %v3668 = vadd.f32 %v3620, 1.0
        %v3669 = vadd.f32 %v3622, 1.0
        %v3670 = vadd.f32 %v3624, 1.0
        %v3671 = vadd.f32 %v3626, 1.0
        %v3672 = vadd.f32 %v3628, 1.0
        %v3673 = vadd.f32 %v3630, 1.0
        %v3674 = vadd.f32 %v3632, 1.0
        %v3675 = vadd.f32 %v3634, 1.0
        %v3676 = vadd.f32 %v3636, 1.0
        %v3677 = vadd.f32 %v3638, 1.0
        %v3678 = vadd.f32 %v3640, 1.0
        %v3679 = vadd.f32 %v3642, 1.0
        %v3680 = vadd.f32 %v3644, 1.0
        %v3681 = vadd.f32 %v3646, 1.0
        %v3682 = vadd.f32 %v3648, 1.0
        %v3683 = vadd.f32 %v3650, 1.0
        %v3684 = vadd.f32 %v3652, 1.0
        %v3685 = vrcp.pop %v3653
        %v3686 = vrcp.pop %v3654
        %v3687 = vrcp.pop %v3655
        %v3688 = vrcp.pop %v3656
        %v3689 = vrcp.pop %v3657
        %v3690 = vrcp.pop %v3658
        %v3691 = vrcp.pop %v3659
        %v3692 = vrcp.pop %v3660
        %v3693 = vrcp.pop %v3661
        %v3694 = vrcp.pop %v3662
        %v3695 = vrcp.pop %v3663
        %v3696 = vrcp.pop %v3664
        %v3697 = vrcp.pop %v3665
        %v3698 = vrcp.pop %v3666
        %v3699 = vrcp.pop %v3667
        %v3700 = vrcp.pop %v3668
        %v3701 = vrcp.pop %v3669
        %v3702 = vrcp.pop %v3670
        %v3703 = vrcp.pop %v3671
        %v3704 = vrcp.pop %v3672
        %v3705 = vrcp.pop %v3673
        %v3706 = vrcp.pop %v3674
        %v3707 = vrcp.pop %v3675
        %v3708 = vrcp.pop %v3676
        %v3709 = vrcp.pop %v3677
        %v3710 = vrcp.pop %v3678
        %v3711 = vrcp.pop %v3679
        %v3712 = vrcp.pop %v3680
        %v3713 = vrcp.pop %v3681
        %v3714 = vrcp.pop %v3682
        %v3715 = vrcp.pop %v3683
        %v3716 = vrcp.pop %v3684
        %v3717 = vmul.f32 %v3431, %v3685
        %v3718 = vmul.f32 %v3434, %v3686
        %v3719 = vmul.f32 %v3439, %v3687
        %v3720 = vmul.f32 %v3442, %v3688
        %v3721 = vmul.f32 %v3447, %v3689
        %v3722 = vmul.f32 %v3450, %v3690
        %v3723 = vmul.f32 %v3455, %v3691
        %v3724 = vmul.f32 %v3458, %v3692
        %v3725 = vmul.f32 %v3463, %v3693
        %v3726 = vmul.f32 %v3466, %v3694
        %v3727 = vmul.f32 %v3471, %v3695
        %v3728 = vmul.f32 %v3474, %v3696
        %v3729 = vmul.f32 %v3479, %v3697
        %v3730 = vmul.f32 %v3482, %v3698
        %v3731 = vmul.f32 %v3487, %v3699
        %v3732 = vmul.f32 %v3490, %v3700
        %v3733 = vmul.f32 %v3495, %v3701
        %v3734 = vmul.f32 %v3498, %v3702
        %v3735 = vmul.f32 %v3503, %v3703
        %v3736 = vmul.f32 %v3506, %v3704
        %v3737 = vmul.f32 %v3511, %v3705
        %v3738 = vmul.f32 %v3514, %v3706
        %v3739 = vmul.f32 %v3519, %v3707
        %v3740 = vmul.f32 %v3522, %v3708
        %v3741 = vmul.f32 %v3527, %v3709
        %v3742 = vmul.f32 %v3530, %v3710
        %v3743 = vmul.f32 %v3535, %v3711
        %v3744 = vmul.f32 %v3538, %v3712
        %v3745 = vmul.f32 %v3543, %v3713
        %v3746 = vmul.f32 %v3546, %v3714
        %v3747 = vmul.f32 %v3551, %v3715
        %v3748 = vmul.f32 %v3554, %v3716
        %v3749 = vpack.c.bf16 %v3718, %v3717
        %v3750 = vpack.c.bf16 %v3720, %v3719
        %v3751 = vpack.c.bf16 %v3722, %v3721
        %v3752 = vpack.c.bf16 %v3724, %v3723
        %v3753 = vpack.c.bf16 %v3726, %v3725
        %v3754 = vpack.c.bf16 %v3728, %v3727
        %v3755 = vpack.c.bf16 %v3730, %v3729
        %v3756 = vpack.c.bf16 %v3732, %v3731
        %v3757 = vpack.c.bf16 %v3734, %v3733
        %v3758 = vpack.c.bf16 %v3736, %v3735
        %v3759 = vpack.c.bf16 %v3738, %v3737
        %v3760 = vpack.c.bf16 %v3740, %v3739
        %v3761 = vpack.c.bf16 %v3742, %v3741
        %v3762 = vpack.c.bf16 %v3744, %v3743
        %v3763 = vpack.c.bf16 %v3746, %v3745
        %v3764 = vpack.c.bf16 %v3748, %v3747
        %v3765 = vld [vmem:[#allocation10] sm:$0xf]
        %v3766 = vld [vmem:[#allocation10 + $0x4] sm:$0xf]
        %v3767 = vld [vmem:[#allocation10 + $0x8] sm:$0xf]
        %v3768 = vld [vmem:[#allocation10 + $0xc] sm:$0xf]
        %v3769 = vld [vmem:[#allocation10 + $0x10] sm:$0xf]
        %v3770 = vld [vmem:[#allocation10 + $0x14] sm:$0xf]
        %v3771 = vld [vmem:[#allocation10 + $0x18] sm:$0xf]
        %v3772 = vld [vmem:[#allocation10 + $0x1c] sm:$0xf]
        %v3773 = vld [vmem:[#allocation10 + $0x20] sm:$0xf]
        %v3774 = vld [vmem:[#allocation10 + $0x24] sm:$0xf]
        %v3775 = vld [vmem:[#allocation10 + $0x28] sm:$0xf]
        %v3776 = vld [vmem:[#allocation10 + $0x2c] sm:$0xf]
        %v3777 = vld [vmem:[#allocation10 + $0x30] sm:$0xf]
        %v3778 = vld [vmem:[#allocation10 + $0x34] sm:$0xf]
        %v3779 = vld [vmem:[#allocation10 + $0x38] sm:$0xf]
        %v3780 = vld [vmem:[#allocation10 + $0x3c] sm:$0xf]
        %v3781 = vld [vmem:[%s12] sm:$0x1]
        %v3783 = vlaneseq
        %v3784 = vshrl.u32 %v3783, 7
        %v3785 = vsub.s32 0, %v3784
        %v3786 = vrot.slane %v3781, %v3785
        %v3804 = vunpack.c.l.b16 %v3765
        %v3805 = vunpack.c.l.b16 %v3766
        %v3806 = vunpack.c.l.b16 %v3767
        %v3807 = vunpack.c.l.b16 %v3768
        %v3808 = vunpack.c.l.b16 %v3769
        %v3809 = vunpack.c.l.b16 %v3770
        %v3810 = vunpack.c.l.b16 %v3771
        %v3811 = vunpack.c.l.b16 %v3772
        %v3812 = vunpack.c.l.b16 %v3773
        %v3813 = vunpack.c.l.b16 %v3774
        %v3814 = vunpack.c.l.b16 %v3775
        %v3815 = vunpack.c.l.b16 %v3776
        %v3816 = vunpack.c.l.b16 %v3777
        %v3817 = vunpack.c.l.b16 %v3778
        %v3818 = vunpack.c.l.b16 %v3779
        %v3819 = vunpack.c.l.b16 %v3780
        %v3820 = vpack.c.b16 %v3805, %v3804
        %v3821 = vpack.c.b16 %v3807, %v3806
        %v3822 = vpack.c.b16 %v3809, %v3808
        %v3823 = vpack.c.b16 %v3811, %v3810
        %v3824 = vpack.c.b16 %v3813, %v3812
        %v3825 = vpack.c.b16 %v3815, %v3814
        %v3826 = vpack.c.b16 %v3817, %v3816
        %v3827 = vpack.c.b16 %v3819, %v3818
        %3836 = vmatprep.subr.bf16.mxu0 0
        %3837 = vmatpush1.bf16.msra.mxu0 %v3827
        %3838 = vmatprep.subr.bf16.mxu0 0
        %3839 = vmatpush1.bf16.msra.mxu0 %v3826
        %3840 = vmatprep.subr.bf16.mxu0 0
        %3841 = vmatpush1.bf16.msra.mxu0 %v3825
        %3842 = vmatprep.subr.bf16.mxu0 0
        %3843 = vmatpush1.bf16.msra.mxu0 %v3824
        %3844 = vmatprep.subr.bf16.mxu0 0
        %3845 = vmatpush1.bf16.msra.mxu0 %v3823
        %3846 = vmatprep.subr.bf16.mxu0 0
        %3847 = vmatpush1.bf16.msra.mxu0 %v3822
        %3848 = vmatprep.subr.bf16.mxu0 0
        %3849 = vmatpush1.bf16.msra.mxu0 %v3821
        %3850 = vmatprep.subr.bf16.mxu0 0
        %3851 = vmatpush1.bf16.msra.mxu0 %v3820
        %3852 = vmatprep.subr.bf16.mxu0 0
        %3853 = vmatpush2.bf16.msra.mxu0 0
        %3854 = vmatprep.subr.bf16.mxu0 0
        %3855 = vmatpush2.bf16.msra.mxu0 0
        %3856 = vmatprep.subr.bf16.mxu0 0
        %3857 = vmatpush2.bf16.msra.mxu0 0
        %3858 = vmatprep.subr.bf16.mxu0 0
        %3859 = vmatpush2.bf16.msra.mxu0 0
        %3860 = vmatprep.subr.bf16.mxu0 0
        %3861 = vmatpush2.bf16.msra.mxu0 0
        %3862 = vmatprep.subr.bf16.mxu0 0
        %3863 = vmatpush2.bf16.msra.mxu0 0
        %3864 = vmatprep.subr.bf16.mxu0 0
        %3865 = vmatpush2.bf16.msra.mxu0 0
        %3866 = vmatprep.subr.bf16.mxu0 0
        %3867 = vmatpush2.bf16.msra.mxu0 0
        %3868 = vmatprep.mubr.bf16.mxu0 0
        %3869 = vmatmul.mubr.bf16.gmra.mxu0 %v3749
        %v3870 = vpop.f32.mrf.mxu0
        %v3871 = vadd.f32 %v3786, %v3870
        %v3872 = vpop.f32.mrf.mxu0
        %v3873 = vpop.f32.mrf.mxu0
        %v3874 = vadd.f32 %v3786, %v3873
        %v3875 = vpop.f32.mrf.mxu0
        %3876 = vmatprep.mubr.bf16.mxu0 0
        %3877 = vmatmul.mubr.bf16.gmra.mxu0 %v3750
        %v3878 = vpop.f32.mrf.mxu0
        %v3879 = vadd.f32 %v3786, %v3878
        %v3880 = vpop.f32.mrf.mxu0
        %v3881 = vpop.f32.mrf.mxu0
        %v3882 = vadd.f32 %v3786, %v3881
        %v3883 = vpop.f32.mrf.mxu0
        %3884 = vmatprep.mubr.bf16.mxu0 0
        %3885 = vmatmul.mubr.bf16.gmra.mxu0 %v3751
        %v3886 = vpop.f32.mrf.mxu0
        %v3887 = vadd.f32 %v3786, %v3886
        %v3888 = vpop.f32.mrf.mxu0
        %v3889 = vpop.f32.mrf.mxu0
        %v3890 = vadd.f32 %v3786, %v3889
        %v3891 = vpop.f32.mrf.mxu0
        %3892 = vmatprep.mubr.bf16.mxu0 0
        %3893 = vmatmul.mubr.bf16.gmra.mxu0 %v3752
        %v3894 = vpop.f32.mrf.mxu0
        %v3895 = vadd.f32 %v3786, %v3894
        %v3896 = vpop.f32.mrf.mxu0
        %v3897 = vpop.f32.mrf.mxu0
        %v3898 = vadd.f32 %v3786, %v3897
        %v3899 = vpop.f32.mrf.mxu0
        %3900 = vmatprep.mubr.bf16.mxu0 0
        %3901 = vmatmul.mubr.bf16.gmra.mxu0 %v3753
        %v3902 = vpop.f32.mrf.mxu0
        %v3903 = vadd.f32 %v3786, %v3902
        %v3904 = vpop.f32.mrf.mxu0
        %v3905 = vpop.f32.mrf.mxu0
        %v3906 = vadd.f32 %v3786, %v3905
        %v3907 = vpop.f32.mrf.mxu0
        %3908 = vmatprep.mubr.bf16.mxu0 0
        %3909 = vmatmul.mubr.bf16.gmra.mxu0 %v3754
        %v3910 = vpop.f32.mrf.mxu0
        %v3911 = vadd.f32 %v3786, %v3910
        %v3912 = vpop.f32.mrf.mxu0
        %v3913 = vpop.f32.mrf.mxu0
        %v3914 = vadd.f32 %v3786, %v3913
        %v3915 = vpop.f32.mrf.mxu0
        %3916 = vmatprep.mubr.bf16.mxu0 0
        %3917 = vmatmul.mubr.bf16.gmra.mxu0 %v3755
        %v3918 = vpop.f32.mrf.mxu0
        %v3919 = vadd.f32 %v3786, %v3918
        %v3920 = vpop.f32.mrf.mxu0
        %v3921 = vpop.f32.mrf.mxu0
        %v3922 = vadd.f32 %v3786, %v3921
        %v3923 = vpop.f32.mrf.mxu0
        %3924 = vmatprep.mubr.bf16.mxu0 0
        %3925 = vmatmul.mubr.bf16.gmra.mxu0 %v3756
        %v3926 = vpop.f32.mrf.mxu0
        %v3927 = vadd.f32 %v3786, %v3926
        %v3928 = vpop.f32.mrf.mxu0
        %v3929 = vpop.f32.mrf.mxu0
        %v3930 = vadd.f32 %v3786, %v3929
        %v3931 = vpop.f32.mrf.mxu0
        %3932 = vmatprep.mubr.bf16.mxu0 0
        %3933 = vmatmul.mubr.bf16.gmra.mxu0 %v3757
        %v3934 = vpop.f32.mrf.mxu0
        %v3935 = vadd.f32 %v3786, %v3934
        %v3936 = vpop.f32.mrf.mxu0
        %v3937 = vpop.f32.mrf.mxu0
        %v3938 = vadd.f32 %v3786, %v3937
        %v3939 = vpop.f32.mrf.mxu0
        %3940 = vmatprep.mubr.bf16.mxu0 0
        %3941 = vmatmul.mubr.bf16.gmra.mxu0 %v3758
        %v3942 = vpop.f32.mrf.mxu0
        %v3943 = vadd.f32 %v3786, %v3942
        %v3944 = vpop.f32.mrf.mxu0
        %v3945 = vpop.f32.mrf.mxu0
        %v3946 = vadd.f32 %v3786, %v3945
        %v3947 = vpop.f32.mrf.mxu0
        %3948 = vmatprep.mubr.bf16.mxu0 0
        %3949 = vmatmul.mubr.bf16.gmra.mxu0 %v3759
        %v3950 = vpop.f32.mrf.mxu0
        %v3951 = vadd.f32 %v3786, %v3950
        %v3952 = vpop.f32.mrf.mxu0
        %v3953 = vpop.f32.mrf.mxu0
        %v3954 = vadd.f32 %v3786, %v3953
        %v3955 = vpop.f32.mrf.mxu0
        %3956 = vmatprep.mubr.bf16.mxu0 0
        %3957 = vmatmul.mubr.bf16.gmra.mxu0 %v3760
        %v3958 = vpop.f32.mrf.mxu0
        %v3959 = vadd.f32 %v3786, %v3958
        %v3960 = vpop.f32.mrf.mxu0
        %v3961 = vpop.f32.mrf.mxu0
        %v3962 = vadd.f32 %v3786, %v3961
        %v3963 = vpop.f32.mrf.mxu0
        %3964 = vmatprep.mubr.bf16.mxu0 0
        %3965 = vmatmul.mubr.bf16.gmra.mxu0 %v3761
        %v3966 = vpop.f32.mrf.mxu0
        %v3967 = vadd.f32 %v3786, %v3966
        %v3968 = vpop.f32.mrf.mxu0
        %v3969 = vpop.f32.mrf.mxu0
        %v3970 = vadd.f32 %v3786, %v3969
        %v3971 = vpop.f32.mrf.mxu0
        %3972 = vmatprep.mubr.bf16.mxu0 0
        %3973 = vmatmul.mubr.bf16.gmra.mxu0 %v3762
        %v3974 = vpop.f32.mrf.mxu0
        %v3975 = vadd.f32 %v3786, %v3974
        %v3976 = vpop.f32.mrf.mxu0
        %v3977 = vpop.f32.mrf.mxu0
        %v3978 = vadd.f32 %v3786, %v3977
        %v3979 = vpop.f32.mrf.mxu0
        %3980 = vmatprep.mubr.bf16.mxu0 0
        %3981 = vmatmul.mubr.bf16.gmra.mxu0 %v3763
        %v3982 = vpop.f32.mrf.mxu0
        %v3983 = vadd.f32 %v3786, %v3982
        %v3984 = vpop.f32.mrf.mxu0
        %v3985 = vpop.f32.mrf.mxu0
        %v3986 = vadd.f32 %v3786, %v3985
        %v3987 = vpop.f32.mrf.mxu0
        %3988 = vmatprep.mubr.bf16.mxu0 0
        %3989 = vmatmul.mubr.bf16.gmra.mxu0 %v3764
        %v3990 = vpop.f32.mrf.mxu0
        %v3991 = vadd.f32 %v3786, %v3990
        %v3992 = vpop.f32.mrf.mxu0
        %v3993 = vpop.f32.mrf.mxu0
        %v3994 = vadd.f32 %v3786, %v3993
        %v3995 = vpop.f32.mrf.mxu0
        %3996 = vdwg.mxu0
        %3997 = vst [vmem:[%s523] sm:$0xff] %v3871
        %3998 = vst [vmem:[%s523 + $0x8] sm:$0xff] %v3874
        %3999 = vst [vmem:[%s523 + $0x10] sm:$0xff] %v3879
        %4000 = vst [vmem:[%s523 + $0x18] sm:$0xff] %v3882
        %4001 = vst [vmem:[%s523 + $0x20] sm:$0xff] %v3887
        %4002 = vst [vmem:[%s523 + $0x28] sm:$0xff] %v3890
        %4003 = vst [vmem:[%s523 + $0x30] sm:$0xff] %v3895
        %4004 = vst [vmem:[%s523 + $0x38] sm:$0xff] %v3898
        %4005 = vst [vmem:[%s523 + $0x40] sm:$0xff] %v3903
        %4006 = vst [vmem:[%s523 + $0x48] sm:$0xff] %v3906
        %4007 = vst [vmem:[%s523 + $0x50] sm:$0xff] %v3911
        %4008 = vst [vmem:[%s523 + $0x58] sm:$0xff] %v3914
        %4009 = vst [vmem:[%s523 + $0x60] sm:$0xff] %v3919
        %4010 = vst [vmem:[%s523 + $0x68] sm:$0xff] %v3922
        %4011 = vst [vmem:[%s523 + $0x70] sm:$0xff] %v3927
        %4012 = vst [vmem:[%s523 + $0x78] sm:$0xff] %v3930
        %4013 = vst [vmem:[%s523 + $0x80] sm:$0xff] %v3935
        %4014 = vst [vmem:[%s523 + $0x88] sm:$0xff] %v3938
        %4015 = vst [vmem:[%s523 + $0x90] sm:$0xff] %v3943
        %4016 = vst [vmem:[%s523 + $0x98] sm:$0xff] %v3946
        %4017 = vst [vmem:[%s523 + $0xa0] sm:$0xff] %v3951
        %4018 = vst [vmem:[%s523 + $0xa8] sm:$0xff] %v3954
        %4019 = vst [vmem:[%s523 + $0xb0] sm:$0xff] %v3959
        %4020 = vst [vmem:[%s523 + $0xb8] sm:$0xff] %v3962
        %4021 = vst [vmem:[%s523 + $0xc0] sm:$0xff] %v3967
        %4022 = vst [vmem:[%s523 + $0xc8] sm:$0xff] %v3970
        %4023 = vst [vmem:[%s523 + $0xd0] sm:$0xff] %v3975
        %4024 = vst [vmem:[%s523 + $0xd8] sm:$0xff] %v3978
        %4025 = vst [vmem:[%s523 + $0xe0] sm:$0xff] %v3983
        %4026 = vst [vmem:[%s523 + $0xe8] sm:$0xff] %v3986
        %4027 = vst [vmem:[%s523 + $0xf0] sm:$0xff] %v3991
        %4028 = vst [vmem:[%s523 + $0xf8] sm:$0xff] %v3994
        %s4029 = sand.u32 %s321, 1
        %s4030 = scalar_lea.sflag [#allocation4], %s4029
        %s4031 = sand.u32 %s321, 1
        %s4032 = smul.addr %s4031, 256
        %s4033 = scalar_lea.vmem [#allocation11], %s4032
        // Predicated region
        $region93: #{_forward_impl.1} parent=71 // pred_check
          %p4034 = pneg %p331
        $region94: #{_forward_impl.1} parent=71 // pred_check_branch
          %4036 = sbr.rel (%p4034) target = $region96
        $region95: #{_forward_impl.1} parent=71 // pred_region
          %s4037 = smul.u32 32, %s30
          %s4039 = ssub.s32 4096, 4096
          %4040 = vsyncadd %s4030, %s4039
          %s4041 = smul.addr %s4037, 128
          %s4042 = scalar_lea.hbm %s13, %s4041
          %s4043 = sshll.u32 %s4033, 4
          %s4044 = int_to_ptr.vmem [resolvable:$true] %s4043
          %4049 = dma.vmem_to_hbm [thread:$0]  %s4044, 4096, %s4042, %s4030, 128, 128, 8
        $region96: #{_forward_impl.1} parent=71 // pred_fallthru
          _
      $region72: #{_forward_impl.1} parent=5 // pred_fallthru
        _
      %p4050 = scmp.le.s32.totalorder 2, %s25
      // Predicated region
      $region97: #{_forward_impl.1} parent=5 // pred_check
        %p4051 = pneg %p4050
      $region98: #{_forward_impl.1} parent=5 // pred_check_branch
        %4053 = sbr.rel (%p4051) target = $region100
      $region99: #{_forward_impl.1} parent=5 // pred_region
        %s4054 = ssub.s32 %s25, 2
        // Predicated region
        $region101: #{_forward_impl.1} parent=99 // pred_check
          %p4055 = pneg %p337
        $region102: #{_forward_impl.1} parent=99 // pred_check_branch
          %4057 = sbr.rel (%p4055) target = $region104
        $region103: #{_forward_impl.1} parent=99 // pred_region
          %s4058 = sand.u32 %s322, 1
          %s4059 = scalar_lea.sflag [#allocation4], %s4058
          %s4060 = sand.u32 %s322, 1
          %s4061 = smul.addr %s4060, 256
          %s4062 = scalar_lea.vmem [#allocation11], %s4061
          %4063 = dma.done %s4059, 4096
        $region104: #{_forward_impl.1} parent=99 // pred_fallthru
          _
      $region100: #{_forward_impl.1} parent=5 // pred_fallthru
        _
    $region6: #{_forward_impl.1} parent=1 // loop_footer
      %s29 = sadd.s32 1, %s25
    $region7: #{_forward_impl.1} parent=1 // loop_footer_branch
      %24 = sbr.rel target = $region3
    $region8: #{_forward_impl.1} parent=1 // loop_exit
      _
    %4064 = vsyncpa [#allocation3], 1
    %s4065 = scalar_lea.sflag [#allocation3], 1
    %4066 = vsyncpa %s4065, 1
    %4067 = vsyncpa [#allocation6], 1
    %4068 = vsyncpa [#allocation9], 1
    %4069 = vsyncpa [#allocation4], 1
    %s4070 = scalar_lea.sflag [#allocation4], 1
    %4071 = vsyncpa %s4070, 1

</llo_original>
